<compile_context>
chip_gen: v5e
topology: v5e:2x2
jax: 0.10.0
libtpu: 0.0.40
codegen_flags: <defaults>
</compile_context>

<pallas_src>
import functools
import math

import jax
import jax.numpy as jnp
from jax.experimental import pallas as pl
from jax.experimental.pallas import tpu as pltpu


def _decoder_block_kernel(
    x_tile_ref, x_full_ref, enc_ref, tgt_mask_ref, src_mask_ref,
    wq_self_ref, wo_self_ref, wq_cross_ref, wo_cross_ref,
    w1_ref, b1_ref, w2_ref, b2_ref,
    ln1_a_ref, ln1_b_ref, ln2_a_ref, ln2_b_ref, ln3_a_ref, ln3_b_ref,
    o_ref, *, num_heads: int, d_k: int, eps: float, single_tile: bool):
  f32 = jnp.float32
  bf16 = jnp.bfloat16

  def mm(a, w):
    # bf16 operands, f32 accumulation: native full-rate MXU path.
    return jnp.dot(a.astype(bf16), w.astype(bf16), preferred_element_type=f32)

  def layer_norm(t, a_ref, b_ref):
    # torch-style:  alpha * (x - mean) / (std + eps) + bias, unbiased std.
    n = t.shape[-1]
    mean = jnp.mean(t, axis=-1, keepdims=True)
    diff = t - mean
    var = jnp.sum(diff * diff, axis=-1, keepdims=True) * (1.0 / float(n - 1))
    inv = pl.reciprocal(jnp.sqrt(var) + eps)          # exact recip (accuracy)
    return a_ref[...] * diff * inv + b_ref[...]       # (1,F) params broadcast

  def attention(q, kv, neg_mask, wo_ref):
    # q: (rows_q, D) f32, already projected with Wq.
    # kv: (rows_k, D) f32, already projected with Wq (spec quirk: K == V).
    scale = 1.0 / math.sqrt(d_k)
    q_b = q.astype(bf16)
    kv_b = kv.astype(bf16)
    heads = []
    # TODO(synk): for large num_heads switch to lax.fori_loop with pl.ds slices
    # to bound vreg live ranges / code size.
    for h in range(num_heads):
      sl = slice(h * d_k, (h + 1) * d_k)
      # q @ k^T without an explicit transpose ("NT" dot_general), f32 acc.
      scores = jax.lax.dot_general(
          q_b[:, sl], kv_b[:, sl], (((1,), (1,)), ((), ())),
          preferred_element_type=f32) * scale
      scores = jnp.where(neg_mask, 1e-9, scores)      # masked_fill_(mask==0, 1e-9)
      m = jnp.max(scores, axis=-1, keepdims=True)
      e = jnp.exp(scores - m)
      p = e * pl.reciprocal(jnp.sum(e, axis=-1, keepdims=True), approx=True)
      heads.append(jnp.dot(p.astype(bf16), kv_b[:, sl],
                           preferred_element_type=f32))
    concat = jnp.concatenate(heads, axis=-1)          # (rows_q, d_model)
    return mm(concat, wo_ref[...])                    # single K=d_model matmul

  x_tile = x_tile_ref[0].astype(f32)    # (TQ, D)    query rows of x
  x_full = x_full_ref[0].astype(f32)    # (S_tgt, D) whole sequence (self KV)
  enc = enc_ref[0].astype(f32)          # (S_src, D)
  # Hoist the mask comparison out of the per-head loops.
  tgt_neg = tgt_mask_ref[...] == 0.0    # (TQ, S_tgt)
  src_neg = src_mask_ref[...] == 0.0    # (TQ, S_src)

  # ---- Residual 1: self-attention (pre-norm); dropout == identity.
  # Q, K, V all use Wq on norm1(x)  ->  one projection of the full sequence.
  xn_full = layer_norm(x_full, ln1_a_ref, ln1_b_ref)
  kv_self = mm(xn_full, wq_self_ref[...])             # (S_tgt, D), K == V
  if single_tile:
    q_self = kv_self                                  # query rows == all rows
  else:
    xn_tile = layer_norm(x_tile, ln1_a_ref, ln1_b_ref)
    q_self = mm(xn_tile, wq_self_ref[...])            # (TQ, D)
  x1 = x_tile + attention(q_self, kv_self, tgt_neg, wo_self_ref)

  # ---- Residual 2: cross-attention vs raw encoder output (K == V).
  xn2 = layer_norm(x1, ln2_a_ref, ln2_b_ref)
  q_cross = mm(xn2, wq_cross_ref[...])                # (TQ, D)
  kv_cross = mm(enc, wq_cross_ref[...])               # (S_src, D)
  x2 = x1 + attention(q_cross, kv_cross, src_neg, wo_cross_ref)

  # ---- Residual 3: feed-forward  linear2(relu(linear1(x))).
  xn3 = layer_norm(x2, ln3_a_ref, ln3_b_ref)
  hidden = jnp.maximum(mm(xn3, w1_ref[...]) + b1_ref[...], 0.0)   # (TQ, d_ff)
  x3 = x2 + mm(hidden, w2_ref[...]) + b2_ref[...]

  o_ref[0] = x3.astype(o_ref.dtype)


def decoder_block(x, encoder_output, tgt_mask, src_mask, params, *,
                  num_heads: int, eps: float = 1e-6, q_tile: int | None = None):
  """Fused DecoderBlock forward. x: (B, S_tgt, D); encoder_output: (B, S_src, D)."""
  B, s_tgt, d_model = x.shape
  s_src = encoder_output.shape[1]
  d_ff = params["w1"].shape[1]
  assert d_model % num_heads == 0, "d_model must be a multiple of num_heads"
  d_k = d_model // num_heads

  if q_tile is None:
    q_tile = s_tgt if s_tgt <= 256 else 256
  tq = min(q_tile, s_tgt)
  assert s_tgt % tq == 0, "S_tgt must be a multiple of the query tile"
  assert tq == s_tgt or tq % 8 == 0, "query tile must be sublane-aligned"
  n_q_tiles = s_tgt // tq

  kernel = functools.partial(
      _decoder_block_kernel, num_heads=num_heads, d_k=d_k, eps=eps,
      single_tile=(n_q_tiles == 1))

  f32 = jnp.float32
  bf16 = jnp.bfloat16

  def as_row(p):  # 1-D param -> (1, F): feature axis on the lane axis
    return p.reshape(1, -1).astype(f32)

  inputs = (
      x, x, encoder_output,
      tgt_mask.astype(f32), src_mask.astype(f32),
      # Weights stay bf16 (MXU-native, half the VMEM/HBM bytes).
      params["wq_self"].astype(bf16), params["wo_self"].astype(bf16),
      params["wq_cross"].astype(bf16), params["wo_cross"].astype(bf16),
      params["w1"].astype(bf16), as_row(params["b1"]),
      params["w2"].astype(bf16), as_row(params["b2"]),
      as_row(params["ln1_alpha"]), as_row(params["ln1_bias"]),
      as_row(params["ln2_alpha"]), as_row(params["ln2_bias"]),
      as_row(params["ln3_alpha"]), as_row(params["ln3_bias"]),
  )

  # Generation-specific VMEM budget: ~96 MiB on v5e/v6e (128 MiB), ~48 MiB on
  # v7x (64 MiB).  Fall back to a conservative value if the query fails.
  try:
    vmem_cap = pltpu.get_tpu_info().vmem_capacity_bytes
  except Exception:
    vmem_cap = 64 * 1024 * 1024
  vmem_limit = min(int(vmem_cap) * 3 // 4, 100 * 1024 * 1024)
  vmem_limit = max(vmem_limit, 32 * 1024 * 1024)

  def _const_idx(ndim):
    return lambda b, q: (0,) * ndim

  def _build(single_buffer_consts: bool):
    def cs(shape):
      # Constant-index blocks: double-buffering them only doubles VMEM
      # residency, so request a single buffer where supported.
      if single_buffer_consts:
        return pl.BlockSpec(shape, _const_idx(len(shape)),
                            pipeline_mode=pl.Buffered(1))
      return pl.BlockSpec(shape, _const_idx(len(shape)))

    in_specs = [
        pl.BlockSpec((1, tq, d_model), lambda b, q: (b, q, 0)),      # x (q tile)
        pl.BlockSpec((1, s_tgt, d_model), lambda b, q: (b, 0, 0)),   # x (full, KV)
        pl.BlockSpec((1, s_src, d_model), lambda b, q: (b, 0, 0)),   # encoder out
        pl.BlockSpec((tq, s_tgt), lambda b, q: (q, 0)),              # tgt mask rows
        pl.BlockSpec((tq, s_src), lambda b, q: (q, 0)),              # src mask rows
        cs((d_model, d_model)), cs((d_model, d_model)),
        cs((d_model, d_model)), cs((d_model, d_model)),
        cs((d_model, d_ff)), cs((1, d_ff)),
        cs((d_ff, d_model)), cs((1, d_model)),
        cs((1, d_model)), cs((1, d_model)),
        cs((1, d_model)), cs((1, d_model)),
        cs((1, d_model)), cs((1, d_model)),
    ]
    return pl.pallas_call(
        kernel,
        out_shape=jax.ShapeDtypeStruct((B, s_tgt, d_model), x.dtype),
        grid_spec=pltpu.PrefetchScalarGridSpec(
            num_scalar_prefetch=0,
            grid=(B, n_q_tiles),
            in_specs=in_specs,
            out_specs=pl.BlockSpec((1, tq, d_model), lambda b, q: (b, q, 0)),
        ),
        compiler_params=pltpu.CompilerParams(
            dimension_semantics=("parallel", "parallel"),  # v7x: both TCs busy
            vmem_limit_bytes=vmem_limit,
        ),
    )

  try:
    return _build(True)(*inputs)
  except Exception:
    # pl.Buffered(1) not accepted by this jax version for pallas_call block
    # specs; fall back to default double-buffered constants (correct, just
    # more VMEM-resident weight copies).
    return _build(False)(*inputs)


def _decoder_block_reference(x, enc, tgt_mask, src_mask, params, *, num_heads, eps):
  """Pure-JAX f32 reference with identical (quirky) semantics."""
  d_model = x.shape[-1]
  d_k = d_model // num_heads

  def layer_norm(t, alpha, bias):
    mean = t.mean(-1, keepdims=True)
    var = jnp.sum((t - mean) ** 2, -1, keepdims=True) / (t.shape[-1] - 1)
    return alpha * (t - mean) / (jnp.sqrt(var) + eps) + bias

  def mha(xq, xkv, mask, wq, wo):
    b, sq, _ = xq.shape
    sk = xkv.shape[1]
    q = (xq @ wq).reshape(b, sq, num_heads, d_k).transpose(0, 2, 1, 3)
    k = (xkv @ wq).reshape(b, sk, num_heads, d_k).transpose(0, 2, 1, 3)
    v = (xkv @ wq).reshape(b, sk, num_heads, d_k).transpose(0, 2, 1, 3)
    scores = jnp.einsum("bhqd,bhkd->bhqk", q, k) / math.sqrt(d_k)
    scores = jnp.where(mask == 0, 1e-9, scores)
    p = jax.nn.softmax(scores, axis=-1)
    o = jnp.einsum("bhqk,bhkd->bhqd", p, v)
    o = o.transpose(0, 2, 1, 3).reshape(b, sq, d_model)
    return o @ wo

  xn = layer_norm(x, params["ln1_alpha"], params["ln1_bias"])
  x = x + mha(xn, xn, tgt_mask, params["wq_self"], params["wo_self"])
  xn = layer_norm(x, params["ln2_alpha"], params["ln2_bias"])
  x = x + mha(xn, enc, src_mask, params["wq_cross"], params["wo_cross"])
  xn = layer_norm(x, params["ln3_alpha"], params["ln3_bias"])
  x = x + (jnp.maximum(xn @ params["w1"] + params["b1"], 0.0) @ params["w2"]
           + params["b2"])
  return x


if __name__ == "__main__":
  B, S_TGT, S_SRC = 2, 16, 8
  D_MODEL, N_HEADS, D_FF = 32, 4, 64
  EPS = 1e-6
  f32 = jnp.float32

  key = jax.random.PRNGKey(0)
  ks = jax.random.split(key, 16)

  x = jax.random.normal(ks[0], (B, S_TGT, D_MODEL), dtype=f32)
  enc = jax.random.normal(ks[1], (B, S_SRC, D_MODEL), dtype=f32)

  def init_w(k, shape, fan_in):
    return jax.random.normal(k, shape, dtype=f32) / math.sqrt(fan_in)

  params = {
      "wq_self": init_w(ks[2], (D_MODEL, D_MODEL), D_MODEL),
      "wo_self": init_w(ks[3], (D_MODEL, D_MODEL), D_MODEL),
      "wq_cross": init_w(ks[4], (D_MODEL, D_MODEL), D_MODEL),
      "wo_cross": init_w(ks[5], (D_MODEL, D_MODEL), D_MODEL),
      "w1": init_w(ks[6], (D_MODEL, D_FF), D_MODEL),
      "b1": 0.1 * jax.random.normal(ks[7], (D_FF,), dtype=f32),
      "w2": init_w(ks[8], (D_FF, D_MODEL), D_FF),
      "b2": 0.1 * jax.random.normal(ks[9], (D_MODEL,), dtype=f32),
      # Module inits alpha=ones, bias=zeros; perturb slightly (deterministic)
      # so the affine part of every LayerNorm is actually exercised.
      "ln1_alpha": 1.0 + 0.1 * jax.random.normal(ks[10], (D_MODEL,), dtype=f32),
      "ln1_bias": 0.1 * jax.random.normal(ks[11], (D_MODEL,), dtype=f32),
      "ln2_alpha": 1.0 + 0.1 * jax.random.normal(ks[12], (D_MODEL,), dtype=f32),
      "ln2_bias": 0.1 * jax.random.normal(ks[13], (D_MODEL,), dtype=f32),
      "ln3_alpha": 1.0 + 0.1 * jax.random.normal(ks[14], (D_MODEL,), dtype=f32),
      "ln3_bias": 0.1 * jax.random.normal(ks[15], (D_MODEL,), dtype=f32),
  }

  tgt_mask = jnp.tril(jnp.ones((S_TGT, S_TGT), dtype=f32))   # causal decoder mask
  src_mask = jnp.ones((S_TGT, S_SRC), dtype=f32)             # no source masking

  # q_tile=8 -> 2 query tiles: exercises the multi-tile grid path.
  out = decoder_block(x, enc, tgt_mask, src_mask, params,
                      num_heads=N_HEADS, eps=EPS, q_tile=8)
  out = jax.block_until_ready(out)

  with jax.default_matmul_precision("highest"):
    ref = _decoder_block_reference(x, enc, tgt_mask, src_mask, params,
                                   num_heads=N_HEADS, eps=EPS)
  ref = jax.block_until_ready(ref)

  assert out.shape == (B, S_TGT, D_MODEL)
  # bf16 MXU operands with f32 accumulation vs the f32 reference:
  # tolerance chosen accordingly (values are O(1..5), errors observed ~1e-2).
  max_err = float(jnp.max(jnp.abs(out - ref)))
  assert max_err < 5e-2, f"max abs error too large: {max_err}"

  print("KERNEL_OK")
</pallas_src>

<mosaic_0001>
module attributes {stable_mosaic.version = 11 : i64} {
  func.func @_decoder_block_kernel(%arg0: i32, %arg1: i32, %arg2: memref<1x8x32xf32, #tpu.memory_space<vmem>>, %arg3: memref<1x16x32xf32, #tpu.memory_space<vmem>>, %arg4: memref<1x8x32xf32, #tpu.memory_space<vmem>>, %arg5: memref<8x16xf32, #tpu.memory_space<vmem>>, %arg6: memref<8x8xf32, #tpu.memory_space<vmem>>, %arg7: memref<32x32xbf16, #tpu.memory_space<vmem>>, %arg8: memref<32x32xbf16, #tpu.memory_space<vmem>>, %arg9: memref<32x32xbf16, #tpu.memory_space<vmem>>, %arg10: memref<32x32xbf16, #tpu.memory_space<vmem>>, %arg11: memref<32x64xbf16, #tpu.memory_space<vmem>>, %arg12: memref<1x64xf32, #tpu.memory_space<vmem>>, %arg13: memref<64x32xbf16, #tpu.memory_space<vmem>>, %arg14: memref<1x32xf32, #tpu.memory_space<vmem>>, %arg15: memref<1x32xf32, #tpu.memory_space<vmem>>, %arg16: memref<1x32xf32, #tpu.memory_space<vmem>>, %arg17: memref<1x32xf32, #tpu.memory_space<vmem>>, %arg18: memref<1x32xf32, #tpu.memory_space<vmem>>, %arg19: memref<1x32xf32, #tpu.memory_space<vmem>>, %arg20: memref<1x32xf32, #tpu.memory_space<vmem>>, %arg21: memref<1x8x32xf32, #tpu.memory_space<vmem>>) attributes {dimension_semantics = [#tpu.dimension_semantics<parallel>, #tpu.dimension_semantics<parallel>], iteration_bounds = array<i64: 2, 2>, scalar_prefetch = 0 : i64, scratch_operands = 0 : i64, tpu.core_type = #tpu.core_type<tc>, window_params = [{transform_indices = @transform_0, window_bounds = array<i64: 1, 8, 32>}, {transform_indices = @transform_1, window_bounds = array<i64: 1, 16, 32>}, {transform_indices = @transform_2, window_bounds = array<i64: 1, 8, 32>}, {transform_indices = @transform_3, window_bounds = array<i64: 8, 16>}, {transform_indices = @transform_4, window_bounds = array<i64: 8, 8>}, {pipeline_mode = #tpu.pipeline_mode<synchronous>, transform_indices = @transform_5, window_bounds = array<i64: 32, 32>}, {pipeline_mode = #tpu.pipeline_mode<synchronous>, transform_indices = @transform_6, window_bounds = array<i64: 32, 32>}, {pipeline_mode = #tpu.pipeline_mode<synchronous>, transform_indices = @transform_7, window_bounds = array<i64: 32, 32>}, {pipeline_mode = #tpu.pipeline_mode<synchronous>, transform_indices = @transform_8, window_bounds = array<i64: 32, 32>}, {pipeline_mode = #tpu.pipeline_mode<synchronous>, transform_indices = @transform_9, window_bounds = array<i64: 32, 64>}, {pipeline_mode = #tpu.pipeline_mode<synchronous>, transform_indices = @transform_10, window_bounds = array<i64: 1, 64>}, {pipeline_mode = #tpu.pipeline_mode<synchronous>, transform_indices = @transform_11, window_bounds = array<i64: 64, 32>}, {pipeline_mode = #tpu.pipeline_mode<synchronous>, transform_indices = @transform_12, window_bounds = array<i64: 1, 32>}, {pipeline_mode = #tpu.pipeline_mode<synchronous>, transform_indices = @transform_13, window_bounds = array<i64: 1, 32>}, {pipeline_mode = #tpu.pipeline_mode<synchronous>, transform_indices = @transform_14, window_bounds = array<i64: 1, 32>}, {pipeline_mode = #tpu.pipeline_mode<synchronous>, transform_indices = @transform_15, window_bounds = array<i64: 1, 32>}, {pipeline_mode = #tpu.pipeline_mode<synchronous>, transform_indices = @transform_16, window_bounds = array<i64: 1, 32>}, {pipeline_mode = #tpu.pipeline_mode<synchronous>, transform_indices = @transform_17, window_bounds = array<i64: 1, 32>}, {pipeline_mode = #tpu.pipeline_mode<synchronous>, transform_indices = @transform_18, window_bounds = array<i64: 1, 32>}, {transform_indices = @transform_19, window_bounds = array<i64: 1, 8, 32>}]} {
    %c0 = arith.constant 0 : index
    %c0_0 = arith.constant 0 : index
    %c0_1 = arith.constant 0 : index
    %0 = vector.load %arg2[%c0, %c0_0, %c0_1] : memref<1x8x32xf32, #tpu.memory_space<vmem>>, vector<1x8x32xf32>
    %1 = vector.shape_cast %0 : vector<1x8x32xf32> to vector<8x32xf32>
    %c0_2 = arith.constant 0 : index
    %c0_3 = arith.constant 0 : index
    %c0_4 = arith.constant 0 : index
    %2 = vector.load %arg3[%c0_2, %c0_3, %c0_4] : memref<1x16x32xf32, #tpu.memory_space<vmem>>, vector<1x16x32xf32>
    %3 = vector.shape_cast %2 : vector<1x16x32xf32> to vector<16x32xf32>
    %c0_5 = arith.constant 0 : index
    %c0_6 = arith.constant 0 : index
    %c0_7 = arith.constant 0 : index
    %4 = vector.load %arg4[%c0_5, %c0_6, %c0_7] : memref<1x8x32xf32, #tpu.memory_space<vmem>>, vector<1x8x32xf32>
    %5 = vector.shape_cast %4 : vector<1x8x32xf32> to vector<8x32xf32>
    %c0_8 = arith.constant 0 : index
    %c0_9 = arith.constant 0 : index
    %6 = vector.load %arg5[%c0_8, %c0_9] : memref<8x16xf32, #tpu.memory_space<vmem>>, vector<8x16xf32>
    %cst = arith.constant 0.000000e+00 : f32
    %7 = vector.broadcast %cst : f32 to vector<8x16xf32>
    %8 = arith.cmpf oeq, %6, %7 : vector<8x16xf32>
    %c0_10 = arith.constant 0 : index
    %c0_11 = arith.constant 0 : index
    %9 = vector.load %arg6[%c0_10, %c0_11] : memref<8x8xf32, #tpu.memory_space<vmem>>, vector<8x8xf32>
    %cst_12 = arith.constant 0.000000e+00 : f32
    %10 = vector.broadcast %cst_12 : f32 to vector<8x8xf32>
    %11 = arith.cmpf oeq, %9, %10 : vector<8x8xf32>
    %cst_13 = arith.constant dense<0.000000e+00> : vector<16xf32>
    %12 = vector.multi_reduction <add>, %3, %cst_13 [1] : vector<16x32xf32> to vector<16xf32>
    %13 = vector.shape_cast %12 : vector<16xf32> to vector<16x1xf32>
    %cst_14 = arith.constant 3.200000e+01 : f32
    %14 = vector.broadcast %cst_14 : f32 to vector<16x1xf32>
    %15 = arith.divf %13, %14 : vector<16x1xf32>
    %16 = vector.broadcast %15 : vector<16x1xf32> to vector<16x32xf32>
    %17 = arith.subf %3, %16 : vector<16x32xf32>
    %18 = arith.mulf %17, %17 : vector<16x32xf32>
    %cst_15 = arith.constant dense<0.000000e+00> : vector<16xf32>
    %19 = vector.multi_reduction <add>, %18, %cst_15 [1] : vector<16x32xf32> to vector<16xf32>
    %20 = vector.shape_cast %19 : vector<16xf32> to vector<16x1xf32>
    %cst_16 = arith.constant 0.0322580636 : f32
    %21 = vector.broadcast %cst_16 : f32 to vector<16x1xf32>
    %22 = arith.mulf %20, %21 : vector<16x1xf32>
    %23 = math.sqrt %22 : vector<16x1xf32>
    %cst_17 = arith.constant 9.99999997E-7 : f32
    %24 = vector.broadcast %cst_17 : f32 to vector<16x1xf32>
    %25 = arith.addf %23, %24 : vector<16x1xf32>
    %26 = tpu.reciprocal %25 : vector<16x1xf32> -> vector<16x1xf32>
    %c0_18 = arith.constant 0 : index
    %c0_19 = arith.constant 0 : index
    %27 = vector.load %arg15[%c0_18, %c0_19] : memref<1x32xf32, #tpu.memory_space<vmem>>, vector<1x32xf32>
    %28 = vector.broadcast %27 : vector<1x32xf32> to vector<16x32xf32>
    %29 = arith.mulf %28, %17 : vector<16x32xf32>
    %30 = vector.broadcast %26 : vector<16x1xf32> to vector<16x32xf32>
    %31 = arith.mulf %29, %30 : vector<16x32xf32>
    %c0_20 = arith.constant 0 : index
    %c0_21 = arith.constant 0 : index
    %32 = vector.load %arg16[%c0_20, %c0_21] : memref<1x32xf32, #tpu.memory_space<vmem>>, vector<1x32xf32>
    %33 = vector.broadcast %32 : vector<1x32xf32> to vector<16x32xf32>
    %34 = arith.addf %31, %33 : vector<16x32xf32>
    %c0_22 = arith.constant 0 : index
    %c0_23 = arith.constant 0 : index
    %35 = vector.load %arg7[%c0_22, %c0_23] : memref<32x32xbf16, #tpu.memory_space<vmem>>, vector<32x32xbf16>
    %36 = arith.truncf %34 : vector<16x32xf32> to vector<16x32xbf16>
    %cst_24 = arith.constant dense<0.000000e+00> : vector<16x32xf32>
    %37 = tpu.matmul %36, %35, %cst_24 {dimension_numbers = #tpu.dot_dimension_numbers<[1], [0], [0], [1], [0, 0, 1, 1], [], []>} : vector<16x32xbf16>, vector<32x32xbf16>, vector<16x32xf32> -> vector<16x32xf32>
    %cst_25 = arith.constant dense<0.000000e+00> : vector<8xf32>
    %38 = vector.multi_reduction <add>, %1, %cst_25 [1] : vector<8x32xf32> to vector<8xf32>
    %39 = vector.shape_cast %38 : vector<8xf32> to vector<8x1xf32>
    %cst_26 = arith.constant 3.200000e+01 : f32
    %40 = vector.broadcast %cst_26 : f32 to vector<8x1xf32>
    %41 = arith.divf %39, %40 : vector<8x1xf32>
    %42 = vector.broadcast %41 : vector<8x1xf32> to vector<8x32xf32>
    %43 = arith.subf %1, %42 : vector<8x32xf32>
    %44 = arith.mulf %43, %43 : vector<8x32xf32>
    %cst_27 = arith.constant dense<0.000000e+00> : vector<8xf32>
    %45 = vector.multi_reduction <add>, %44, %cst_27 [1] : vector<8x32xf32> to vector<8xf32>
    %46 = vector.shape_cast %45 : vector<8xf32> to vector<8x1xf32>
    %cst_28 = arith.constant 0.0322580636 : f32
    %47 = vector.broadcast %cst_28 : f32 to vector<8x1xf32>
    %48 = arith.mulf %46, %47 : vector<8x1xf32>
    %49 = math.sqrt %48 : vector<8x1xf32>
    %cst_29 = arith.constant 9.99999997E-7 : f32
    %50 = vector.broadcast %cst_29 : f32 to vector<8x1xf32>
    %51 = arith.addf %49, %50 : vector<8x1xf32>
    %52 = tpu.reciprocal %51 : vector<8x1xf32> -> vector<8x1xf32>
    %c0_30 = arith.constant 0 : index
    %c0_31 = arith.constant 0 : index
    %53 = vector.load %arg15[%c0_30, %c0_31] : memref<1x32xf32, #tpu.memory_space<vmem>>, vector<1x32xf32>
    %54 = vector.broadcast %53 : vector<1x32xf32> to vector<8x32xf32>
    %55 = arith.mulf %54, %43 : vector<8x32xf32>
    %56 = vector.broadcast %52 : vector<8x1xf32> to vector<8x32xf32>
    %57 = arith.mulf %55, %56 : vector<8x32xf32>
    %c0_32 = arith.constant 0 : index
    %c0_33 = arith.constant 0 : index
    %58 = vector.load %arg16[%c0_32, %c0_33] : memref<1x32xf32, #tpu.memory_space<vmem>>, vector<1x32xf32>
    %59 = vector.broadcast %58 : vector<1x32xf32> to vector<8x32xf32>
    %60 = arith.addf %57, %59 : vector<8x32xf32>
    %c0_34 = arith.constant 0 : index
    %c0_35 = arith.constant 0 : index
    %61 = vector.load %arg7[%c0_34, %c0_35] : memref<32x32xbf16, #tpu.memory_space<vmem>>, vector<32x32xbf16>
    %62 = arith.truncf %60 : vector<8x32xf32> to vector<8x32xbf16>
    %cst_36 = arith.constant dense<0.000000e+00> : vector<8x32xf32>
    %63 = tpu.matmul %62, %61, %cst_36 {dimension_numbers = #tpu.dot_dimension_numbers<[1], [0], [0], [1], [0, 0, 1, 1], [], []>} : vector<8x32xbf16>, vector<32x32xbf16>, vector<8x32xf32> -> vector<8x32xf32>
    %64 = arith.truncf %63 : vector<8x32xf32> to vector<8x32xbf16>
    %65 = arith.truncf %37 : vector<16x32xf32> to vector<16x32xbf16>
    %66 = vector.extract_strided_slice %64 {offsets = [0, 0], sizes = [8, 8], strides = [1, 1]} : vector<8x32xbf16> to vector<8x8xbf16>
    %67 = vector.extract_strided_slice %65 {offsets = [0, 0], sizes = [16, 8], strides = [1, 1]} : vector<16x32xbf16> to vector<16x8xbf16>
    %cst_37 = arith.constant dense<0.000000e+00> : vector<8x16xf32>
    %68 = tpu.matmul %66, %67, %cst_37 {dimension_numbers = #tpu.dot_dimension_numbers<[1], [1], [0], [0], [0, 0, 1, 0], [], []>} : vector<8x8xbf16>, vector<16x8xbf16>, vector<8x16xf32> -> vector<8x16xf32>
    %cst_38 = arith.constant 0.353553385 : f32
    %69 = vector.broadcast %cst_38 : f32 to vector<8x16xf32>
    %70 = arith.mulf %68, %69 : vector<8x16xf32>
    %cst_39 = arith.constant 9.99999971E-10 : f32
    %71 = vector.broadcast %cst_39 : f32 to vector<8x16xf32>
    %72 = arith.select %8, %71, %70 : vector<8x16xi1>, vector<8x16xf32>
    %cst_40 = arith.constant dense<0xFF800000> : vector<8xf32>
    %73 = vector.multi_reduction <maximumf>, %72, %cst_40 [1] : vector<8x16xf32> to vector<8xf32>
    %74 = vector.shape_cast %73 : vector<8xf32> to vector<8x1xf32>
    %75 = vector.broadcast %74 : vector<8x1xf32> to vector<8x16xf32>
    %76 = arith.subf %72, %75 : vector<8x16xf32>
    %77 = math.exp %76 : vector<8x16xf32>
    %cst_41 = arith.constant dense<0.000000e+00> : vector<8xf32>
    %78 = vector.multi_reduction <add>, %77, %cst_41 [1] : vector<8x16xf32> to vector<8xf32>
    %79 = vector.shape_cast %78 : vector<8xf32> to vector<8x1xf32>
    %80 = tpu.reciprocal %79 {approx = true} : vector<8x1xf32> -> vector<8x1xf32>
    %81 = vector.broadcast %80 : vector<8x1xf32> to vector<8x16xf32>
    %82 = arith.mulf %77, %81 : vector<8x16xf32>
    %83 = arith.truncf %82 : vector<8x16xf32> to vector<8x16xbf16>
    %84 = vector.extract_strided_slice %65 {offsets = [0, 0], sizes = [16, 8], strides = [1, 1]} : vector<16x32xbf16> to vector<16x8xbf16>
    %cst_42 = arith.constant dense<0.000000e+00> : vector<8x8xf32>
    %85 = tpu.matmul %83, %84, %cst_42 {dimension_numbers = #tpu.dot_dimension_numbers<[1], [0], [0], [1], [0, 0, 1, 1], [], []>} : vector<8x16xbf16>, vector<16x8xbf16>, vector<8x8xf32> -> vector<8x8xf32>
    %86 = vector.extract_strided_slice %64 {offsets = [0, 8], sizes = [8, 8], strides = [1, 1]} : vector<8x32xbf16> to vector<8x8xbf16>
    %87 = vector.extract_strided_slice %65 {offsets = [0, 8], sizes = [16, 8], strides = [1, 1]} : vector<16x32xbf16> to vector<16x8xbf16>
    %cst_43 = arith.constant dense<0.000000e+00> : vector<8x16xf32>
    %88 = tpu.matmul %86, %87, %cst_43 {dimension_numbers = #tpu.dot_dimension_numbers<[1], [1], [0], [0], [0, 0, 1, 0], [], []>} : vector<8x8xbf16>, vector<16x8xbf16>, vector<8x16xf32> -> vector<8x16xf32>
    %cst_44 = arith.constant 0.353553385 : f32
    %89 = vector.broadcast %cst_44 : f32 to vector<8x16xf32>
    %90 = arith.mulf %88, %89 : vector<8x16xf32>
    %cst_45 = arith.constant 9.99999971E-10 : f32
    %91 = vector.broadcast %cst_45 : f32 to vector<8x16xf32>
    %92 = arith.select %8, %91, %90 : vector<8x16xi1>, vector<8x16xf32>
    %cst_46 = arith.constant dense<0xFF800000> : vector<8xf32>
    %93 = vector.multi_reduction <maximumf>, %92, %cst_46 [1] : vector<8x16xf32> to vector<8xf32>
    %94 = vector.shape_cast %93 : vector<8xf32> to vector<8x1xf32>
    %95 = vector.broadcast %94 : vector<8x1xf32> to vector<8x16xf32>
    %96 = arith.subf %92, %95 : vector<8x16xf32>
    %97 = math.exp %96 : vector<8x16xf32>
    %cst_47 = arith.constant dense<0.000000e+00> : vector<8xf32>
    %98 = vector.multi_reduction <add>, %97, %cst_47 [1] : vector<8x16xf32> to vector<8xf32>
    %99 = vector.shape_cast %98 : vector<8xf32> to vector<8x1xf32>
    %100 = tpu.reciprocal %99 {approx = true} : vector<8x1xf32> -> vector<8x1xf32>
    %101 = vector.broadcast %100 : vector<8x1xf32> to vector<8x16xf32>
    %102 = arith.mulf %97, %101 : vector<8x16xf32>
    %103 = arith.truncf %102 : vector<8x16xf32> to vector<8x16xbf16>
    %104 = vector.extract_strided_slice %65 {offsets = [0, 8], sizes = [16, 8], strides = [1, 1]} : vector<16x32xbf16> to vector<16x8xbf16>
    %cst_48 = arith.constant dense<0.000000e+00> : vector<8x8xf32>
    %105 = tpu.matmul %103, %104, %cst_48 {dimension_numbers = #tpu.dot_dimension_numbers<[1], [0], [0], [1], [0, 0, 1, 1], [], []>} : vector<8x16xbf16>, vector<16x8xbf16>, vector<8x8xf32> -> vector<8x8xf32>
    %106 = vector.extract_strided_slice %64 {offsets = [0, 16], sizes = [8, 8], strides = [1, 1]} : vector<8x32xbf16> to vector<8x8xbf16>
    %107 = vector.extract_strided_slice %65 {offsets = [0, 16], sizes = [16, 8], strides = [1, 1]} : vector<16x32xbf16> to vector<16x8xbf16>
    %cst_49 = arith.constant dense<0.000000e+00> : vector<8x16xf32>
    %108 = tpu.matmul %106, %107, %cst_49 {dimension_numbers = #tpu.dot_dimension_numbers<[1], [1], [0], [0], [0, 0, 1, 0], [], []>} : vector<8x8xbf16>, vector<16x8xbf16>, vector<8x16xf32> -> vector<8x16xf32>
    %cst_50 = arith.constant 0.353553385 : f32
    %109 = vector.broadcast %cst_50 : f32 to vector<8x16xf32>
    %110 = arith.mulf %108, %109 : vector<8x16xf32>
    %cst_51 = arith.constant 9.99999971E-10 : f32
    %111 = vector.broadcast %cst_51 : f32 to vector<8x16xf32>
    %112 = arith.select %8, %111, %110 : vector<8x16xi1>, vector<8x16xf32>
    %cst_52 = arith.constant dense<0xFF800000> : vector<8xf32>
    %113 = vector.multi_reduction <maximumf>, %112, %cst_52 [1] : vector<8x16xf32> to vector<8xf32>
    %114 = vector.shape_cast %113 : vector<8xf32> to vector<8x1xf32>
    %115 = vector.broadcast %114 : vector<8x1xf32> to vector<8x16xf32>
    %116 = arith.subf %112, %115 : vector<8x16xf32>
    %117 = math.exp %116 : vector<8x16xf32>
    %cst_53 = arith.constant dense<0.000000e+00> : vector<8xf32>
    %118 = vector.multi_reduction <add>, %117, %cst_53 [1] : vector<8x16xf32> to vector<8xf32>
    %119 = vector.shape_cast %118 : vector<8xf32> to vector<8x1xf32>
    %120 = tpu.reciprocal %119 {approx = true} : vector<8x1xf32> -> vector<8x1xf32>
    %121 = vector.broadcast %120 : vector<8x1xf32> to vector<8x16xf32>
    %122 = arith.mulf %117, %121 : vector<8x16xf32>
    %123 = arith.truncf %122 : vector<8x16xf32> to vector<8x16xbf16>
    %124 = vector.extract_strided_slice %65 {offsets = [0, 16], sizes = [16, 8], strides = [1, 1]} : vector<16x32xbf16> to vector<16x8xbf16>
    %cst_54 = arith.constant dense<0.000000e+00> : vector<8x8xf32>
    %125 = tpu.matmul %123, %124, %cst_54 {dimension_numbers = #tpu.dot_dimension_numbers<[1], [0], [0], [1], [0, 0, 1, 1], [], []>} : vector<8x16xbf16>, vector<16x8xbf16>, vector<8x8xf32> -> vector<8x8xf32>
    %126 = vector.extract_strided_slice %64 {offsets = [0, 24], sizes = [8, 8], strides = [1, 1]} : vector<8x32xbf16> to vector<8x8xbf16>
    %127 = vector.extract_strided_slice %65 {offsets = [0, 24], sizes = [16, 8], strides = [1, 1]} : vector<16x32xbf16> to vector<16x8xbf16>
    %cst_55 = arith.constant dense<0.000000e+00> : vector<8x16xf32>
    %128 = tpu.matmul %126, %127, %cst_55 {dimension_numbers = #tpu.dot_dimension_numbers<[1], [1], [0], [0], [0, 0, 1, 0], [], []>} : vector<8x8xbf16>, vector<16x8xbf16>, vector<8x16xf32> -> vector<8x16xf32>
    %cst_56 = arith.constant 0.353553385 : f32
    %129 = vector.broadcast %cst_56 : f32 to vector<8x16xf32>
    %130 = arith.mulf %128, %129 : vector<8x16xf32>
    %cst_57 = arith.constant 9.99999971E-10 : f32
    %131 = vector.broadcast %cst_57 : f32 to vector<8x16xf32>
    %132 = arith.select %8, %131, %130 : vector<8x16xi1>, vector<8x16xf32>
    %cst_58 = arith.constant dense<0xFF800000> : vector<8xf32>
    %133 = vector.multi_reduction <maximumf>, %132, %cst_58 [1] : vector<8x16xf32> to vector<8xf32>
    %134 = vector.shape_cast %133 : vector<8xf32> to vector<8x1xf32>
    %135 = vector.broadcast %134 : vector<8x1xf32> to vector<8x16xf32>
    %136 = arith.subf %132, %135 : vector<8x16xf32>
    %137 = math.exp %136 : vector<8x16xf32>
    %cst_59 = arith.constant dense<0.000000e+00> : vector<8xf32>
    %138 = vector.multi_reduction <add>, %137, %cst_59 [1] : vector<8x16xf32> to vector<8xf32>
    %139 = vector.shape_cast %138 : vector<8xf32> to vector<8x1xf32>
    %140 = tpu.reciprocal %139 {approx = true} : vector<8x1xf32> -> vector<8x1xf32>
    %141 = vector.broadcast %140 : vector<8x1xf32> to vector<8x16xf32>
    %142 = arith.mulf %137, %141 : vector<8x16xf32>
    %143 = arith.truncf %142 : vector<8x16xf32> to vector<8x16xbf16>
    %144 = vector.extract_strided_slice %65 {offsets = [0, 24], sizes = [16, 8], strides = [1, 1]} : vector<16x32xbf16> to vector<16x8xbf16>
    %cst_60 = arith.constant dense<0.000000e+00> : vector<8x8xf32>
    %145 = tpu.matmul %143, %144, %cst_60 {dimension_numbers = #tpu.dot_dimension_numbers<[1], [0], [0], [1], [0, 0, 1, 1], [], []>} : vector<8x16xbf16>, vector<16x8xbf16>, vector<8x8xf32> -> vector<8x8xf32>
    %146 = tpu.concatenate %85, %105, %125, %145 in 1 : vector<8x8xf32>, vector<8x8xf32>, vector<8x8xf32>, vector<8x8xf32> -> vector<8x32xf32>
    %c0_61 = arith.constant 0 : index
    %c0_62 = arith.constant 0 : index
    %147 = vector.load %arg8[%c0_61, %c0_62] : memref<32x32xbf16, #tpu.memory_space<vmem>>, vector<32x32xbf16>
    %148 = arith.truncf %146 : vector<8x32xf32> to vector<8x32xbf16>
    %cst_63 = arith.constant dense<0.000000e+00> : vector<8x32xf32>
    %149 = tpu.matmul %148, %147, %cst_63 {dimension_numbers = #tpu.dot_dimension_numbers<[1], [0], [0], [1], [0, 0, 1, 1], [], []>} : vector<8x32xbf16>, vector<32x32xbf16>, vector<8x32xf32> -> vector<8x32xf32>
    %150 = arith.addf %1, %149 : vector<8x32xf32>
    %cst_64 = arith.constant dense<0.000000e+00> : vector<8xf32>
    %151 = vector.multi_reduction <add>, %150, %cst_64 [1] : vector<8x32xf32> to vector<8xf32>
    %152 = vector.shape_cast %151 : vector<8xf32> to vector<8x1xf32>
    %cst_65 = arith.constant 3.200000e+01 : f32
    %153 = vector.broadcast %cst_65 : f32 to vector<8x1xf32>
    %154 = arith.divf %152, %153 : vector<8x1xf32>
    %155 = vector.broadcast %154 : vector<8x1xf32> to vector<8x32xf32>
    %156 = arith.subf %150, %155 : vector<8x32xf32>
    %157 = arith.mulf %156, %156 : vector<8x32xf32>
    %cst_66 = arith.constant dense<0.000000e+00> : vector<8xf32>
    %158 = vector.multi_reduction <add>, %157, %cst_66 [1] : vector<8x32xf32> to vector<8xf32>
    %159 = vector.shape_cast %158 : vector<8xf32> to vector<8x1xf32>
    %cst_67 = arith.constant 0.0322580636 : f32
    %160 = vector.broadcast %cst_67 : f32 to vector<8x1xf32>
    %161 = arith.mulf %159, %160 : vector<8x1xf32>
    %162 = math.sqrt %161 : vector<8x1xf32>
    %cst_68 = arith.constant 9.99999997E-7 : f32
    %163 = vector.broadcast %cst_68 : f32 to vector<8x1xf32>
    %164 = arith.addf %162, %163 : vector<8x1xf32>
    %165 = tpu.reciprocal %164 : vector<8x1xf32> -> vector<8x1xf32>
    %c0_69 = arith.constant 0 : index
    %c0_70 = arith.constant 0 : index
    %166 = vector.load %arg17[%c0_69, %c0_70] : memref<1x32xf32, #tpu.memory_space<vmem>>, vector<1x32xf32>
    %167 = vector.broadcast %166 : vector<1x32xf32> to vector<8x32xf32>
    %168 = arith.mulf %167, %156 : vector<8x32xf32>
    %169 = vector.broadcast %165 : vector<8x1xf32> to vector<8x32xf32>
    %170 = arith.mulf %168, %169 : vector<8x32xf32>
    %c0_71 = arith.constant 0 : index
    %c0_72 = arith.constant 0 : index
    %171 = vector.load %arg18[%c0_71, %c0_72] : memref<1x32xf32, #tpu.memory_space<vmem>>, vector<1x32xf32>
    %172 = vector.broadcast %171 : vector<1x32xf32> to vector<8x32xf32>
    %173 = arith.addf %170, %172 : vector<8x32xf32>
    %c0_73 = arith.constant 0 : index
    %c0_74 = arith.constant 0 : index
    %174 = vector.load %arg9[%c0_73, %c0_74] : memref<32x32xbf16, #tpu.memory_space<vmem>>, vector<32x32xbf16>
    %175 = arith.truncf %173 : vector<8x32xf32> to vector<8x32xbf16>
    %cst_75 = arith.constant dense<0.000000e+00> : vector<8x32xf32>
    %176 = tpu.matmul %175, %174, %cst_75 {dimension_numbers = #tpu.dot_dimension_numbers<[1], [0], [0], [1], [0, 0, 1, 1], [], []>} : vector<8x32xbf16>, vector<32x32xbf16>, vector<8x32xf32> -> vector<8x32xf32>
    %c0_76 = arith.constant 0 : index
    %c0_77 = arith.constant 0 : index
    %177 = vector.load %arg9[%c0_76, %c0_77] : memref<32x32xbf16, #tpu.memory_space<vmem>>, vector<32x32xbf16>
    %178 = arith.truncf %5 : vector<8x32xf32> to vector<8x32xbf16>
    %cst_78 = arith.constant dense<0.000000e+00> : vector<8x32xf32>
    %179 = tpu.matmul %178, %177, %cst_78 {dimension_numbers = #tpu.dot_dimension_numbers<[1], [0], [0], [1], [0, 0, 1, 1], [], []>} : vector<8x32xbf16>, vector<32x32xbf16>, vector<8x32xf32> -> vector<8x32xf32>
    %180 = arith.truncf %176 : vector<8x32xf32> to vector<8x32xbf16>
    %181 = arith.truncf %179 : vector<8x32xf32> to vector<8x32xbf16>
    %182 = vector.extract_strided_slice %180 {offsets = [0, 0], sizes = [8, 8], strides = [1, 1]} : vector<8x32xbf16> to vector<8x8xbf16>
    %183 = vector.extract_strided_slice %181 {offsets = [0, 0], sizes = [8, 8], strides = [1, 1]} : vector<8x32xbf16> to vector<8x8xbf16>
    %cst_79 = arith.constant dense<0.000000e+00> : vector<8x8xf32>
    %184 = tpu.matmul %182, %183, %cst_79 {dimension_numbers = #tpu.dot_dimension_numbers<[1], [1], [0], [0], [0, 0, 1, 0], [], []>} : vector<8x8xbf16>, vector<8x8xbf16>, vector<8x8xf32> -> vector<8x8xf32>
    %cst_80 = arith.constant 0.353553385 : f32
    %185 = vector.broadcast %cst_80 : f32 to vector<8x8xf32>
    %186 = arith.mulf %184, %185 : vector<8x8xf32>
    %cst_81 = arith.constant 9.99999971E-10 : f32
    %187 = vector.broadcast %cst_81 : f32 to vector<8x8xf32>
    %188 = arith.select %11, %187, %186 : vector<8x8xi1>, vector<8x8xf32>
    %cst_82 = arith.constant dense<0xFF800000> : vector<8xf32>
    %189 = vector.multi_reduction <maximumf>, %188, %cst_82 [1] : vector<8x8xf32> to vector<8xf32>
    %190 = vector.shape_cast %189 : vector<8xf32> to vector<8x1xf32>
    %191 = vector.broadcast %190 : vector<8x1xf32> to vector<8x8xf32>
    %192 = arith.subf %188, %191 : vector<8x8xf32>
    %193 = math.exp %192 : vector<8x8xf32>
    %cst_83 = arith.constant dense<0.000000e+00> : vector<8xf32>
    %194 = vector.multi_reduction <add>, %193, %cst_83 [1] : vector<8x8xf32> to vector<8xf32>
    %195 = vector.shape_cast %194 : vector<8xf32> to vector<8x1xf32>
    %196 = tpu.reciprocal %195 {approx = true} : vector<8x1xf32> -> vector<8x1xf32>
    %197 = vector.broadcast %196 : vector<8x1xf32> to vector<8x8xf32>
    %198 = arith.mulf %193, %197 : vector<8x8xf32>
    %199 = arith.truncf %198 : vector<8x8xf32> to vector<8x8xbf16>
    %200 = vector.extract_strided_slice %181 {offsets = [0, 0], sizes = [8, 8], strides = [1, 1]} : vector<8x32xbf16> to vector<8x8xbf16>
    %cst_84 = arith.constant dense<0.000000e+00> : vector<8x8xf32>
    %201 = tpu.matmul %199, %200, %cst_84 {dimension_numbers = #tpu.dot_dimension_numbers<[1], [0], [0], [1], [0, 0, 1, 1], [], []>} : vector<8x8xbf16>, vector<8x8xbf16>, vector<8x8xf32> -> vector<8x8xf32>
    %202 = vector.extract_strided_slice %180 {offsets = [0, 8], sizes = [8, 8], strides = [1, 1]} : vector<8x32xbf16> to vector<8x8xbf16>
    %203 = vector.extract_strided_slice %181 {offsets = [0, 8], sizes = [8, 8], strides = [1, 1]} : vector<8x32xbf16> to vector<8x8xbf16>
    %cst_85 = arith.constant dense<0.000000e+00> : vector<8x8xf32>
    %204 = tpu.matmul %202, %203, %cst_85 {dimension_numbers = #tpu.dot_dimension_numbers<[1], [1], [0], [0], [0, 0, 1, 0], [], []>} : vector<8x8xbf16>, vector<8x8xbf16>, vector<8x8xf32> -> vector<8x8xf32>
    %cst_86 = arith.constant 0.353553385 : f32
    %205 = vector.broadcast %cst_86 : f32 to vector<8x8xf32>
    %206 = arith.mulf %204, %205 : vector<8x8xf32>
    %cst_87 = arith.constant 9.99999971E-10 : f32
    %207 = vector.broadcast %cst_87 : f32 to vector<8x8xf32>
    %208 = arith.select %11, %207, %206 : vector<8x8xi1>, vector<8x8xf32>
    %cst_88 = arith.constant dense<0xFF800000> : vector<8xf32>
    %209 = vector.multi_reduction <maximumf>, %208, %cst_88 [1] : vector<8x8xf32> to vector<8xf32>
    %210 = vector.shape_cast %209 : vector<8xf32> to vector<8x1xf32>
    %211 = vector.broadcast %210 : vector<8x1xf32> to vector<8x8xf32>
    %212 = arith.subf %208, %211 : vector<8x8xf32>
    %213 = math.exp %212 : vector<8x8xf32>
    %cst_89 = arith.constant dense<0.000000e+00> : vector<8xf32>
    %214 = vector.multi_reduction <add>, %213, %cst_89 [1] : vector<8x8xf32> to vector<8xf32>
    %215 = vector.shape_cast %214 : vector<8xf32> to vector<8x1xf32>
    %216 = tpu.reciprocal %215 {approx = true} : vector<8x1xf32> -> vector<8x1xf32>
    %217 = vector.broadcast %216 : vector<8x1xf32> to vector<8x8xf32>
    %218 = arith.mulf %213, %217 : vector<8x8xf32>
    %219 = arith.truncf %218 : vector<8x8xf32> to vector<8x8xbf16>
    %220 = vector.extract_strided_slice %181 {offsets = [0, 8], sizes = [8, 8], strides = [1, 1]} : vector<8x32xbf16> to vector<8x8xbf16>
    %cst_90 = arith.constant dense<0.000000e+00> : vector<8x8xf32>
    %221 = tpu.matmul %219, %220, %cst_90 {dimension_numbers = #tpu.dot_dimension_numbers<[1], [0], [0], [1], [0, 0, 1, 1], [], []>} : vector<8x8xbf16>, vector<8x8xbf16>, vector<8x8xf32> -> vector<8x8xf32>
    %222 = vector.extract_strided_slice %180 {offsets = [0, 16], sizes = [8, 8], strides = [1, 1]} : vector<8x32xbf16> to vector<8x8xbf16>
    %223 = vector.extract_strided_slice %181 {offsets = [0, 16], sizes = [8, 8], strides = [1, 1]} : vector<8x32xbf16> to vector<8x8xbf16>
    %cst_91 = arith.constant dense<0.000000e+00> : vector<8x8xf32>
    %224 = tpu.matmul %222, %223, %cst_91 {dimension_numbers = #tpu.dot_dimension_numbers<[1], [1], [0], [0], [0, 0, 1, 0], [], []>} : vector<8x8xbf16>, vector<8x8xbf16>, vector<8x8xf32> -> vector<8x8xf32>
    %cst_92 = arith.constant 0.353553385 : f32
    %225 = vector.broadcast %cst_92 : f32 to vector<8x8xf32>
    %226 = arith.mulf %224, %225 : vector<8x8xf32>
    %cst_93 = arith.constant 9.99999971E-10 : f32
    %227 = vector.broadcast %cst_93 : f32 to vector<8x8xf32>
    %228 = arith.select %11, %227, %226 : vector<8x8xi1>, vector<8x8xf32>
    %cst_94 = arith.constant dense<0xFF800000> : vector<8xf32>
    %229 = vector.multi_reduction <maximumf>, %228, %cst_94 [1] : vector<8x8xf32> to vector<8xf32>
    %230 = vector.shape_cast %229 : vector<8xf32> to vector<8x1xf32>
    %231 = vector.broadcast %230 : vector<8x1xf32> to vector<8x8xf32>
    %232 = arith.subf %228, %231 : vector<8x8xf32>
    %233 = math.exp %232 : vector<8x8xf32>
    %cst_95 = arith.constant dense<0.000000e+00> : vector<8xf32>
    %234 = vector.multi_reduction <add>, %233, %cst_95 [1] : vector<8x8xf32> to vector<8xf32>
    %235 = vector.shape_cast %234 : vector<8xf32> to vector<8x1xf32>
    %236 = tpu.reciprocal %235 {approx = true} : vector<8x1xf32> -> vector<8x1xf32>
    %237 = vector.broadcast %236 : vector<8x1xf32> to vector<8x8xf32>
    %238 = arith.mulf %233, %237 : vector<8x8xf32>
    %239 = arith.truncf %238 : vector<8x8xf32> to vector<8x8xbf16>
    %240 = vector.extract_strided_slice %181 {offsets = [0, 16], sizes = [8, 8], strides = [1, 1]} : vector<8x32xbf16> to vector<8x8xbf16>
    %cst_96 = arith.constant dense<0.000000e+00> : vector<8x8xf32>
    %241 = tpu.matmul %239, %240, %cst_96 {dimension_numbers = #tpu.dot_dimension_numbers<[1], [0], [0], [1], [0, 0, 1, 1], [], []>} : vector<8x8xbf16>, vector<8x8xbf16>, vector<8x8xf32> -> vector<8x8xf32>
    %242 = vector.extract_strided_slice %180 {offsets = [0, 24], sizes = [8, 8], strides = [1, 1]} : vector<8x32xbf16> to vector<8x8xbf16>
    %243 = vector.extract_strided_slice %181 {offsets = [0, 24], sizes = [8, 8], strides = [1, 1]} : vector<8x32xbf16> to vector<8x8xbf16>
    %cst_97 = arith.constant dense<0.000000e+00> : vector<8x8xf32>
    %244 = tpu.matmul %242, %243, %cst_97 {dimension_numbers = #tpu.dot_dimension_numbers<[1], [1], [0], [0], [0, 0, 1, 0], [], []>} : vector<8x8xbf16>, vector<8x8xbf16>, vector<8x8xf32> -> vector<8x8xf32>
    %cst_98 = arith.constant 0.353553385 : f32
    %245 = vector.broadcast %cst_98 : f32 to vector<8x8xf32>
    %246 = arith.mulf %244, %245 : vector<8x8xf32>
    %cst_99 = arith.constant 9.99999971E-10 : f32
    %247 = vector.broadcast %cst_99 : f32 to vector<8x8xf32>
    %248 = arith.select %11, %247, %246 : vector<8x8xi1>, vector<8x8xf32>
    %cst_100 = arith.constant dense<0xFF800000> : vector<8xf32>
    %249 = vector.multi_reduction <maximumf>, %248, %cst_100 [1] : vector<8x8xf32> to vector<8xf32>
    %250 = vector.shape_cast %249 : vector<8xf32> to vector<8x1xf32>
    %251 = vector.broadcast %250 : vector<8x1xf32> to vector<8x8xf32>
    %252 = arith.subf %248, %251 : vector<8x8xf32>
    %253 = math.exp %252 : vector<8x8xf32>
    %cst_101 = arith.constant dense<0.000000e+00> : vector<8xf32>
    %254 = vector.multi_reduction <add>, %253, %cst_101 [1] : vector<8x8xf32> to vector<8xf32>
    %255 = vector.shape_cast %254 : vector<8xf32> to vector<8x1xf32>
    %256 = tpu.reciprocal %255 {approx = true} : vector<8x1xf32> -> vector<8x1xf32>
    %257 = vector.broadcast %256 : vector<8x1xf32> to vector<8x8xf32>
    %258 = arith.mulf %253, %257 : vector<8x8xf32>
    %259 = arith.truncf %258 : vector<8x8xf32> to vector<8x8xbf16>
    %260 = vector.extract_strided_slice %181 {offsets = [0, 24], sizes = [8, 8], strides = [1, 1]} : vector<8x32xbf16> to vector<8x8xbf16>
    %cst_102 = arith.constant dense<0.000000e+00> : vector<8x8xf32>
    %261 = tpu.matmul %259, %260, %cst_102 {dimension_numbers = #tpu.dot_dimension_numbers<[1], [0], [0], [1], [0, 0, 1, 1], [], []>} : vector<8x8xbf16>, vector<8x8xbf16>, vector<8x8xf32> -> vector<8x8xf32>
    %262 = tpu.concatenate %201, %221, %241, %261 in 1 : vector<8x8xf32>, vector<8x8xf32>, vector<8x8xf32>, vector<8x8xf32> -> vector<8x32xf32>
    %c0_103 = arith.constant 0 : index
    %c0_104 = arith.constant 0 : index
    %263 = vector.load %arg10[%c0_103, %c0_104] : memref<32x32xbf16, #tpu.memory_space<vmem>>, vector<32x32xbf16>
    %264 = arith.truncf %262 : vector<8x32xf32> to vector<8x32xbf16>
    %cst_105 = arith.constant dense<0.000000e+00> : vector<8x32xf32>
    %265 = tpu.matmul %264, %263, %cst_105 {dimension_numbers = #tpu.dot_dimension_numbers<[1], [0], [0], [1], [0, 0, 1, 1], [], []>} : vector<8x32xbf16>, vector<32x32xbf16>, vector<8x32xf32> -> vector<8x32xf32>
    %266 = arith.addf %150, %265 : vector<8x32xf32>
    %cst_106 = arith.constant dense<0.000000e+00> : vector<8xf32>
    %267 = vector.multi_reduction <add>, %266, %cst_106 [1] : vector<8x32xf32> to vector<8xf32>
    %268 = vector.shape_cast %267 : vector<8xf32> to vector<8x1xf32>
    %cst_107 = arith.constant 3.200000e+01 : f32
    %269 = vector.broadcast %cst_107 : f32 to vector<8x1xf32>
    %270 = arith.divf %268, %269 : vector<8x1xf32>
    %271 = vector.broadcast %270 : vector<8x1xf32> to vector<8x32xf32>
    %272 = arith.subf %266, %271 : vector<8x32xf32>
    %273 = arith.mulf %272, %272 : vector<8x32xf32>
    %cst_108 = arith.constant dense<0.000000e+00> : vector<8xf32>
    %274 = vector.multi_reduction <add>, %273, %cst_108 [1] : vector<8x32xf32> to vector<8xf32>
    %275 = vector.shape_cast %274 : vector<8xf32> to vector<8x1xf32>
    %cst_109 = arith.constant 0.0322580636 : f32
    %276 = vector.broadcast %cst_109 : f32 to vector<8x1xf32>
    %277 = arith.mulf %275, %276 : vector<8x1xf32>
    %278 = math.sqrt %277 : vector<8x1xf32>
    %cst_110 = arith.constant 9.99999997E-7 : f32
    %279 = vector.broadcast %cst_110 : f32 to vector<8x1xf32>
    %280 = arith.addf %278, %279 : vector<8x1xf32>
    %281 = tpu.reciprocal %280 : vector<8x1xf32> -> vector<8x1xf32>
    %c0_111 = arith.constant 0 : index
    %c0_112 = arith.constant 0 : index
    %282 = vector.load %arg19[%c0_111, %c0_112] : memref<1x32xf32, #tpu.memory_space<vmem>>, vector<1x32xf32>
    %283 = vector.broadcast %282 : vector<1x32xf32> to vector<8x32xf32>
    %284 = arith.mulf %283, %272 : vector<8x32xf32>
    %285 = vector.broadcast %281 : vector<8x1xf32> to vector<8x32xf32>
    %286 = arith.mulf %284, %285 : vector<8x32xf32>
    %c0_113 = arith.constant 0 : index
    %c0_114 = arith.constant 0 : index
    %287 = vector.load %arg20[%c0_113, %c0_114] : memref<1x32xf32, #tpu.memory_space<vmem>>, vector<1x32xf32>
    %288 = vector.broadcast %287 : vector<1x32xf32> to vector<8x32xf32>
    %289 = arith.addf %286, %288 : vector<8x32xf32>
    %c0_115 = arith.constant 0 : index
    %c0_116 = arith.constant 0 : index
    %290 = vector.load %arg11[%c0_115, %c0_116] : memref<32x64xbf16, #tpu.memory_space<vmem>>, vector<32x64xbf16>
    %291 = arith.truncf %289 : vector<8x32xf32> to vector<8x32xbf16>
    %cst_117 = arith.constant dense<0.000000e+00> : vector<8x64xf32>
    %292 = tpu.matmul %291, %290, %cst_117 {dimension_numbers = #tpu.dot_dimension_numbers<[1], [0], [0], [1], [0, 0, 1, 1], [], []>} : vector<8x32xbf16>, vector<32x64xbf16>, vector<8x64xf32> -> vector<8x64xf32>
    %c0_118 = arith.constant 0 : index
    %c0_119 = arith.constant 0 : index
    %293 = vector.load %arg12[%c0_118, %c0_119] : memref<1x64xf32, #tpu.memory_space<vmem>>, vector<1x64xf32>
    %294 = vector.broadcast %293 : vector<1x64xf32> to vector<8x64xf32>
    %295 = arith.addf %292, %294 : vector<8x64xf32>
    %cst_120 = arith.constant 0.000000e+00 : f32
    %296 = vector.broadcast %cst_120 : f32 to vector<8x64xf32>
    %297 = arith.maximumf %295, %296 : vector<8x64xf32>
    %c0_121 = arith.constant 0 : index
    %c0_122 = arith.constant 0 : index
    %298 = vector.load %arg13[%c0_121, %c0_122] : memref<64x32xbf16, #tpu.memory_space<vmem>>, vector<64x32xbf16>
    %299 = arith.truncf %297 : vector<8x64xf32> to vector<8x64xbf16>
    %cst_123 = arith.constant dense<0.000000e+00> : vector<8x32xf32>
    %300 = tpu.matmul %299, %298, %cst_123 {dimension_numbers = #tpu.dot_dimension_numbers<[1], [0], [0], [1], [0, 0, 1, 1], [], []>} : vector<8x64xbf16>, vector<64x32xbf16>, vector<8x32xf32> -> vector<8x32xf32>
    %301 = arith.addf %266, %300 : vector<8x32xf32>
    %c0_124 = arith.constant 0 : index
    %c0_125 = arith.constant 0 : index
    %302 = vector.load %arg14[%c0_124, %c0_125] : memref<1x32xf32, #tpu.memory_space<vmem>>, vector<1x32xf32>
    %303 = vector.broadcast %302 : vector<1x32xf32> to vector<8x32xf32>
    %304 = arith.addf %301, %303 : vector<8x32xf32>
    %c0_126 = arith.constant 0 : index
    %c0_127 = arith.constant 0 : index
    %c0_128 = arith.constant 0 : index
    %305 = vector.load %arg21[%c0_126, %c0_127, %c0_128] : memref<1x8x32xf32, #tpu.memory_space<vmem>>, vector<1x8x32xf32>
    %306 = vector.shape_cast %305 : vector<1x8x32xf32> to vector<8x32xf32>
    %307 = vector.shape_cast %304 : vector<8x32xf32> to vector<1x8x32xf32>
    tpu.vector_store %arg21[%c0_126, %c0_127, %c0_128], %307 {strides = array<i32>} : memref<1x8x32xf32, #tpu.memory_space<vmem>>, vector<1x8x32xf32>,
    return
  }
  func.func @transform_0(%arg0: i32, %arg1: i32) -> (i32, i32, i32) {
    %c0_i32 = arith.constant 0 : i32
    %c0_i32_0 = arith.constant 0 : i32
    return %arg0, %arg1, %c0_i32 : i32, i32, i32
  }
  func.func @transform_1(%arg0: i32, %arg1: i32) -> (i32, i32, i32) {
    %c0_i32 = arith.constant 0 : i32
    %c0_i32_0 = arith.constant 0 : i32
    %c0_i32_1 = arith.constant 0 : i32
    return %arg0, %c0_i32, %c0_i32_0 : i32, i32, i32
  }
  func.func @transform_2(%arg0: i32, %arg1: i32) -> (i32, i32, i32) {
    %c0_i32 = arith.constant 0 : i32
    %c0_i32_0 = arith.constant 0 : i32
    %c0_i32_1 = arith.constant 0 : i32
    return %arg0, %c0_i32, %c0_i32_0 : i32, i32, i32
  }
  func.func @transform_3(%arg0: i32, %arg1: i32) -> (i32, i32) {
    %c0_i32 = arith.constant 0 : i32
    %c0_i32_0 = arith.constant 0 : i32
    return %arg1, %c0_i32 : i32, i32
  }
  func.func @transform_4(%arg0: i32, %arg1: i32) -> (i32, i32) {
    %c0_i32 = arith.constant 0 : i32
    %c0_i32_0 = arith.constant 0 : i32
    return %arg1, %c0_i32 : i32, i32
  }
  func.func @transform_5(%arg0: i32, %arg1: i32) -> (i32, i32) {
    %c0_i32 = arith.constant 0 : i32
    %c0_i32_0 = arith.constant 0 : i32
    %c0_i32_1 = arith.constant 0 : i32
    return %c0_i32, %c0_i32_0 : i32, i32
  }
  func.func @transform_6(%arg0: i32, %arg1: i32) -> (i32, i32) {
    %c0_i32 = arith.constant 0 : i32
    %c0_i32_0 = arith.constant 0 : i32
    %c0_i32_1 = arith.constant 0 : i32
    return %c0_i32, %c0_i32_0 : i32, i32
  }
  func.func @transform_7(%arg0: i32, %arg1: i32) -> (i32, i32) {
    %c0_i32 = arith.constant 0 : i32
    %c0_i32_0 = arith.constant 0 : i32
    %c0_i32_1 = arith.constant 0 : i32
    return %c0_i32, %c0_i32_0 : i32, i32
  }
  func.func @transform_8(%arg0: i32, %arg1: i32) -> (i32, i32) {
    %c0_i32 = arith.constant 0 : i32
    %c0_i32_0 = arith.constant 0 : i32
    %c0_i32_1 = arith.constant 0 : i32
    return %c0_i32, %c0_i32_0 : i32, i32
  }
  func.func @transform_9(%arg0: i32, %arg1: i32) -> (i32, i32) {
    %c0_i32 = arith.constant 0 : i32
    %c0_i32_0 = arith.constant 0 : i32
    %c0_i32_1 = arith.constant 0 : i32
    return %c0_i32, %c0_i32_0 : i32, i32
  }
  func.func @transform_10(%arg0: i32, %arg1: i32) -> (i32, i32) {
    %c0_i32 = arith.constant 0 : i32
    %c0_i32_0 = arith.constant 0 : i32
    %c0_i32_1 = arith.constant 0 : i32
    return %c0_i32, %c0_i32_0 : i32, i32
  }
  func.func @transform_11(%arg0: i32, %arg1: i32) -> (i32, i32) {
    %c0_i32 = arith.constant 0 : i32
    %c0_i32_0 = arith.constant 0 : i32
    %c0_i32_1 = arith.constant 0 : i32
    return %c0_i32, %c0_i32_0 : i32, i32
  }
  func.func @transform_12(%arg0: i32, %arg1: i32) -> (i32, i32) {
    %c0_i32 = arith.constant 0 : i32
    %c0_i32_0 = arith.constant 0 : i32
    %c0_i32_1 = arith.constant 0 : i32
    return %c0_i32, %c0_i32_0 : i32, i32
  }
  func.func @transform_13(%arg0: i32, %arg1: i32) -> (i32, i32) {
    %c0_i32 = arith.constant 0 : i32
    %c0_i32_0 = arith.constant 0 : i32
    %c0_i32_1 = arith.constant 0 : i32
    return %c0_i32, %c0_i32_0 : i32, i32
  }
  func.func @transform_14(%arg0: i32, %arg1: i32) -> (i32, i32) {
    %c0_i32 = arith.constant 0 : i32
    %c0_i32_0 = arith.constant 0 : i32
    %c0_i32_1 = arith.constant 0 : i32
    return %c0_i32, %c0_i32_0 : i32, i32
  }
  func.func @transform_15(%arg0: i32, %arg1: i32) -> (i32, i32) {
    %c0_i32 = arith.constant 0 : i32
    %c0_i32_0 = arith.constant 0 : i32
    %c0_i32_1 = arith.constant 0 : i32
    return %c0_i32, %c0_i32_0 : i32, i32
  }
  func.func @transform_16(%arg0: i32, %arg1: i32) -> (i32, i32) {
    %c0_i32 = arith.constant 0 : i32
    %c0_i32_0 = arith.constant 0 : i32
    %c0_i32_1 = arith.constant 0 : i32
    return %c0_i32, %c0_i32_0 : i32, i32
  }
  func.func @transform_17(%arg0: i32, %arg1: i32) -> (i32, i32) {
    %c0_i32 = arith.constant 0 : i32
    %c0_i32_0 = arith.constant 0 : i32
    %c0_i32_1 = arith.constant 0 : i32
    return %c0_i32, %c0_i32_0 : i32, i32
  }
  func.func @transform_18(%arg0: i32, %arg1: i32) -> (i32, i32) {
    %c0_i32 = arith.constant 0 : i32
    %c0_i32_0 = arith.constant 0 : i32
    %c0_i32_1 = arith.constant 0 : i32
    return %c0_i32, %c0_i32_0 : i32, i32
  }
  func.func @transform_19(%arg0: i32, %arg1: i32) -> (i32, i32, i32) {
    %c0_i32 = arith.constant 0 : i32
    %c0_i32_0 = arith.constant 0 : i32
    return %arg0, %arg1, %c0_i32 : i32, i32, i32
  }
}

module attributes {stable_mosaic.version = 11 : i64} {
  func.func @_decoder_block_kernel(%arg0: i32, %arg1: i32, %arg2: memref<1x8x32xf32, #tpu.memory_space<vmem>>, %arg3: memref<1x16x32xf32, #tpu.memory_space<vmem>>, %arg4: memref<1x8x32xf32, #tpu.memory_space<vmem>>, %arg5: memref<8x16xf32, #tpu.memory_space<vmem>>, %arg6: memref<8x8xf32, #tpu.memory_space<vmem>>, %arg7: memref<32x32xbf16, #tpu.memory_space<vmem>>, %arg8: memref<32x32xbf16, #tpu.memory_space<vmem>>, %arg9: memref<32x32xbf16, #tpu.memory_space<vmem>>, %arg10: memref<32x32xbf16, #tpu.memory_space<vmem>>, %arg11: memref<32x64xbf16, #tpu.memory_space<vmem>>, %arg12: memref<1x64xf32, #tpu.memory_space<vmem>>, %arg13: memref<64x32xbf16, #tpu.memory_space<vmem>>, %arg14: memref<1x32xf32, #tpu.memory_space<vmem>>, %arg15: memref<1x32xf32, #tpu.memory_space<vmem>>, %arg16: memref<1x32xf32, #tpu.memory_space<vmem>>, %arg17: memref<1x32xf32, #tpu.memory_space<vmem>>, %arg18: memref<1x32xf32, #tpu.memory_space<vmem>>, %arg19: memref<1x32xf32, #tpu.memory_space<vmem>>, %arg20: memref<1x32xf32, #tpu.memory_space<vmem>>, %arg21: memref<1x8x32xf32, #tpu.memory_space<vmem>>) attributes {dimension_semantics = [#tpu.dimension_semantics<parallel>, #tpu.dimension_semantics<parallel>], iteration_bounds = array<i64: 2, 2>, scalar_prefetch = 0 : i64, scratch_operands = 0 : i64, tpu.core_type = #tpu.core_type<tc>, window_params = [{transform_indices = @transform_0, window_bounds = array<i64: 1, 8, 32>}, {transform_indices = @transform_1, window_bounds = array<i64: 1, 16, 32>}, {transform_indices = @transform_2, window_bounds = array<i64: 1, 8, 32>}, {transform_indices = @transform_3, window_bounds = array<i64: 8, 16>}, {transform_indices = @transform_4, window_bounds = array<i64: 8, 8>}, {pipeline_mode = #tpu.pipeline_mode<synchronous>, transform_indices = @transform_5, window_bounds = array<i64: 32, 32>}, {pipeline_mode = #tpu.pipeline_mode<synchronous>, transform_indices = @transform_6, window_bounds = array<i64: 32, 32>}, {pipeline_mode = #tpu.pipeline_mode<synchronous>, transform_indices = @transform_7, window_bounds = array<i64: 32, 32>}, {pipeline_mode = #tpu.pipeline_mode<synchronous>, transform_indices = @transform_8, window_bounds = array<i64: 32, 32>}, {pipeline_mode = #tpu.pipeline_mode<synchronous>, transform_indices = @transform_9, window_bounds = array<i64: 32, 64>}, {pipeline_mode = #tpu.pipeline_mode<synchronous>, transform_indices = @transform_10, window_bounds = array<i64: 1, 64>}, {pipeline_mode = #tpu.pipeline_mode<synchronous>, transform_indices = @transform_11, window_bounds = array<i64: 64, 32>}, {pipeline_mode = #tpu.pipeline_mode<synchronous>, transform_indices = @transform_12, window_bounds = array<i64: 1, 32>}, {pipeline_mode = #tpu.pipeline_mode<synchronous>, transform_indices = @transform_13, window_bounds = array<i64: 1, 32>}, {pipeline_mode = #tpu.pipeline_mode<synchronous>, transform_indices = @transform_14, window_bounds = array<i64: 1, 32>}, {pipeline_mode = #tpu.pipeline_mode<synchronous>, transform_indices = @transform_15, window_bounds = array<i64: 1, 32>}, {pipeline_mode = #tpu.pipeline_mode<synchronous>, transform_indices = @transform_16, window_bounds = array<i64: 1, 32>}, {pipeline_mode = #tpu.pipeline_mode<synchronous>, transform_indices = @transform_17, window_bounds = array<i64: 1, 32>}, {pipeline_mode = #tpu.pipeline_mode<synchronous>, transform_indices = @transform_18, window_bounds = array<i64: 1, 32>}, {transform_indices = @transform_19, window_bounds = array<i64: 1, 8, 32>}]} {
    %c0 = arith.constant 0 : index
    %c0_0 = arith.constant 0 : index
    %c0_1 = arith.constant 0 : index
    %0 = vector.load %arg2[%c0, %c0_0, %c0_1] : memref<1x8x32xf32, #tpu.memory_space<vmem>>, vector<1x8x32xf32>
    %1 = vector.shape_cast %0 : vector<1x8x32xf32> to vector<8x32xf32>
    %c0_2 = arith.constant 0 : index
    %c0_3 = arith.constant 0 : index
    %c0_4 = arith.constant 0 : index
    %2 = vector.load %arg3[%c0_2, %c0_3, %c0_4] : memref<1x16x32xf32, #tpu.memory_space<vmem>>, vector<1x16x32xf32>
    %3 = vector.shape_cast %2 : vector<1x16x32xf32> to vector<16x32xf32>
    %c0_5 = arith.constant 0 : index
    %c0_6 = arith.constant 0 : index
    %c0_7 = arith.constant 0 : index
    %4 = vector.load %arg4[%c0_5, %c0_6, %c0_7] : memref<1x8x32xf32, #tpu.memory_space<vmem>>, vector<1x8x32xf32>
    %5 = vector.shape_cast %4 : vector<1x8x32xf32> to vector<8x32xf32>
    %c0_8 = arith.constant 0 : index
    %c0_9 = arith.constant 0 : index
    %6 = vector.load %arg5[%c0_8, %c0_9] : memref<8x16xf32, #tpu.memory_space<vmem>>, vector<8x16xf32>
    %cst = arith.constant 0.000000e+00 : f32
    %7 = vector.broadcast %cst : f32 to vector<8x16xf32>
    %8 = arith.cmpf oeq, %6, %7 : vector<8x16xf32>
    %c0_10 = arith.constant 0 : index
    %c0_11 = arith.constant 0 : index
    %9 = vector.load %arg6[%c0_10, %c0_11] : memref<8x8xf32, #tpu.memory_space<vmem>>, vector<8x8xf32>
    %cst_12 = arith.constant 0.000000e+00 : f32
    %10 = vector.broadcast %cst_12 : f32 to vector<8x8xf32>
    %11 = arith.cmpf oeq, %9, %10 : vector<8x8xf32>
    %cst_13 = arith.constant dense<0.000000e+00> : vector<16xf32>
    %12 = vector.multi_reduction <add>, %3, %cst_13 [1] : vector<16x32xf32> to vector<16xf32>
    %13 = vector.shape_cast %12 : vector<16xf32> to vector<16x1xf32>
    %cst_14 = arith.constant 3.200000e+01 : f32
    %14 = vector.broadcast %cst_14 : f32 to vector<16x1xf32>
    %15 = arith.divf %13, %14 : vector<16x1xf32>
    %16 = vector.broadcast %15 : vector<16x1xf32> to vector<16x32xf32>
    %17 = arith.subf %3, %16 : vector<16x32xf32>
    %18 = arith.mulf %17, %17 : vector<16x32xf32>
    %cst_15 = arith.constant dense<0.000000e+00> : vector<16xf32>
    %19 = vector.multi_reduction <add>, %18, %cst_15 [1] : vector<16x32xf32> to vector<16xf32>
    %20 = vector.shape_cast %19 : vector<16xf32> to vector<16x1xf32>
    %cst_16 = arith.constant 0.0322580636 : f32
    %21 = vector.broadcast %cst_16 : f32 to vector<16x1xf32>
    %22 = arith.mulf %20, %21 : vector<16x1xf32>
    %23 = math.sqrt %22 : vector<16x1xf32>
    %cst_17 = arith.constant 9.99999997E-7 : f32
    %24 = vector.broadcast %cst_17 : f32 to vector<16x1xf32>
    %25 = arith.addf %23, %24 : vector<16x1xf32>
    %26 = tpu.reciprocal %25 : vector<16x1xf32> -> vector<16x1xf32>
    %c0_18 = arith.constant 0 : index
    %c0_19 = arith.constant 0 : index
    %27 = vector.load %arg15[%c0_18, %c0_19] : memref<1x32xf32, #tpu.memory_space<vmem>>, vector<1x32xf32>
    %28 = vector.broadcast %27 : vector<1x32xf32> to vector<16x32xf32>
    %29 = arith.mulf %28, %17 : vector<16x32xf32>
    %30 = vector.broadcast %26 : vector<16x1xf32> to vector<16x32xf32>
    %31 = arith.mulf %29, %30 : vector<16x32xf32>
    %c0_20 = arith.constant 0 : index
    %c0_21 = arith.constant 0 : index
    %32 = vector.load %arg16[%c0_20, %c0_21] : memref<1x32xf32, #tpu.memory_space<vmem>>, vector<1x32xf32>
    %33 = vector.broadcast %32 : vector<1x32xf32> to vector<16x32xf32>
    %34 = arith.addf %31, %33 : vector<16x32xf32>
    %c0_22 = arith.constant 0 : index
    %c0_23 = arith.constant 0 : index
    %35 = vector.load %arg7[%c0_22, %c0_23] : memref<32x32xbf16, #tpu.memory_space<vmem>>, vector<32x32xbf16>
    %36 = arith.truncf %34 : vector<16x32xf32> to vector<16x32xbf16>
    %cst_24 = arith.constant dense<0.000000e+00> : vector<16x32xf32>
    %37 = tpu.matmul %36, %35, %cst_24 {dimension_numbers = #tpu.dot_dimension_numbers<[1], [0], [0], [1], [0, 0, 1, 1], [], []>} : vector<16x32xbf16>, vector<32x32xbf16>, vector<16x32xf32> -> vector<16x32xf32>
    %cst_25 = arith.constant dense<0.000000e+00> : vector<8xf32>
    %38 = vector.multi_reduction <add>, %1, %cst_25 [1] : vector<8x32xf32> to vector<8xf32>
    %39 = vector.shape_cast %38 : vector<8xf32> to vector<8x1xf32>
    %cst_26 = arith.constant 3.200000e+01 : f32
    %40 = vector.broadcast %cst_26 : f32 to vector<8x1xf32>
    %41 = arith.divf %39, %40 : vector<8x1xf32>
    %42 = vector.broadcast %41 : vector<8x1xf32> to vector<8x32xf32>
    %43 = arith.subf %1, %42 : vector<8x32xf32>
    %44 = arith.mulf %43, %43 : vector<8x32xf32>
    %cst_27 = arith.constant dense<0.000000e+00> : vector<8xf32>
    %45 = vector.multi_reduction <add>, %44, %cst_27 [1] : vector<8x32xf32> to vector<8xf32>
    %46 = vector.shape_cast %45 : vector<8xf32> to vector<8x1xf32>
    %cst_28 = arith.constant 0.0322580636 : f32
    %47 = vector.broadcast %cst_28 : f32 to vector<8x1xf32>
    %48 = arith.mulf %46, %47 : vector<8x1xf32>
    %49 = math.sqrt %48 : vector<8x1xf32>
    %cst_29 = arith.constant 9.99999997E-7 : f32
    %50 = vector.broadcast %cst_29 : f32 to vector<8x1xf32>
    %51 = arith.addf %49, %50 : vector<8x1xf32>
    %52 = tpu.reciprocal %51 : vector<8x1xf32> -> vector<8x1xf32>
    %c0_30 = arith.constant 0 : index
    %c0_31 = arith.constant 0 : index
    %53 = vector.load %arg15[%c0_30, %c0_31] : memref<1x32xf32, #tpu.memory_space<vmem>>, vector<1x32xf32>
    %54 = vector.broadcast %53 : vector<1x32xf32> to vector<8x32xf32>
    %55 = arith.mulf %54, %43 : vector<8x32xf32>
    %56 = vector.broadcast %52 : vector<8x1xf32> to vector<8x32xf32>
    %57 = arith.mulf %55, %56 : vector<8x32xf32>
    %c0_32 = arith.constant 0 : index
    %c0_33 = arith.constant 0 : index
    %58 = vector.load %arg16[%c0_32, %c0_33] : memref<1x32xf32, #tpu.memory_space<vmem>>, vector<1x32xf32>
    %59 = vector.broadcast %58 : vector<1x32xf32> to vector<8x32xf32>
    %60 = arith.addf %57, %59 : vector<8x32xf32>
    %c0_34 = arith.constant 0 : index
    %c0_35 = arith.constant 0 : index
    %61 = vector.load %arg7[%c0_34, %c0_35] : memref<32x32xbf16, #tpu.memory_space<vmem>>, vector<32x32xbf16>
    %62 = arith.truncf %60 : vector<8x32xf32> to vector<8x32xbf16>
    %cst_36 = arith.constant dense<0.000000e+00> : vector<8x32xf32>
    %63 = tpu.matmul %62, %61, %cst_36 {dimension_numbers = #tpu.dot_dimension_numbers<[1], [0], [0], [1], [0, 0, 1, 1], [], []>} : vector<8x32xbf16>, vector<32x32xbf16>, vector<8x32xf32> -> vector<8x32xf32>
    %64 = arith.truncf %63 : vector<8x32xf32> to vector<8x32xbf16>
    %65 = arith.truncf %37 : vector<16x32xf32> to vector<16x32xbf16>
    %66 = vector.extract_strided_slice %64 {offsets = [0, 0], sizes = [8, 8], strides = [1, 1]} : vector<8x32xbf16> to vector<8x8xbf16>
    %67 = vector.extract_strided_slice %65 {offsets = [0, 0], sizes = [16, 8], strides = [1, 1]} : vector<16x32xbf16> to vector<16x8xbf16>
    %cst_37 = arith.constant dense<0.000000e+00> : vector<8x16xf32>
    %68 = tpu.matmul %66, %67, %cst_37 {dimension_numbers = #tpu.dot_dimension_numbers<[1], [1], [0], [0], [0, 0, 1, 0], [], []>} : vector<8x8xbf16>, vector<16x8xbf16>, vector<8x16xf32> -> vector<8x16xf32>
    %cst_38 = arith.constant 0.353553385 : f32
    %69 = vector.broadcast %cst_38 : f32 to vector<8x16xf32>
    %70 = arith.mulf %68, %69 : vector<8x16xf32>
    %cst_39 = arith.constant 9.99999971E-10 : f32
    %71 = vector.broadcast %cst_39 : f32 to vector<8x16xf32>
    %72 = arith.select %8, %71, %70 : vector<8x16xi1>, vector<8x16xf32>
    %cst_40 = arith.constant dense<0xFF800000> : vector<8xf32>
    %73 = vector.multi_reduction <maximumf>, %72, %cst_40 [1] : vector<8x16xf32> to vector<8xf32>
    %74 = vector.shape_cast %73 : vector<8xf32> to vector<8x1xf32>
    %75 = vector.broadcast %74 : vector<8x1xf32> to vector<8x16xf32>
    %76 = arith.subf %72, %75 : vector<8x16xf32>
    %77 = math.exp %76 : vector<8x16xf32>
    %cst_41 = arith.constant dense<0.000000e+00> : vector<8xf32>
    %78 = vector.multi_reduction <add>, %77, %cst_41 [1] : vector<8x16xf32> to vector<8xf32>
    %79 = vector.shape_cast %78 : vector<8xf32> to vector<8x1xf32>
    %80 = tpu.reciprocal %79 {approx = true} : vector<8x1xf32> -> vector<8x1xf32>
    %81 = vector.broadcast %80 : vector<8x1xf32> to vector<8x16xf32>
    %82 = arith.mulf %77, %81 : vector<8x16xf32>
    %83 = arith.truncf %82 : vector<8x16xf32> to vector<8x16xbf16>
    %84 = vector.extract_strided_slice %65 {offsets = [0, 0], sizes = [16, 8], strides = [1, 1]} : vector<16x32xbf16> to vector<16x8xbf16>
    %cst_42 = arith.constant dense<0.000000e+00> : vector<8x8xf32>
    %85 = tpu.matmul %83, %84, %cst_42 {dimension_numbers = #tpu.dot_dimension_numbers<[1], [0], [0], [1], [0, 0, 1, 1], [], []>} : vector<8x16xbf16>, vector<16x8xbf16>, vector<8x8xf32> -> vector<8x8xf32>
    %86 = vector.extract_strided_slice %64 {offsets = [0, 8], sizes = [8, 8], strides = [1, 1]} : vector<8x32xbf16> to vector<8x8xbf16>
    %87 = vector.extract_strided_slice %65 {offsets = [0, 8], sizes = [16, 8], strides = [1, 1]} : vector<16x32xbf16> to vector<16x8xbf16>
    %cst_43 = arith.constant dense<0.000000e+00> : vector<8x16xf32>
    %88 = tpu.matmul %86, %87, %cst_43 {dimension_numbers = #tpu.dot_dimension_numbers<[1], [1], [0], [0], [0, 0, 1, 0], [], []>} : vector<8x8xbf16>, vector<16x8xbf16>, vector<8x16xf32> -> vector<8x16xf32>
    %cst_44 = arith.constant 0.353553385 : f32
    %89 = vector.broadcast %cst_44 : f32 to vector<8x16xf32>
    %90 = arith.mulf %88, %89 : vector<8x16xf32>
    %cst_45 = arith.constant 9.99999971E-10 : f32
    %91 = vector.broadcast %cst_45 : f32 to vector<8x16xf32>
    %92 = arith.select %8, %91, %90 : vector<8x16xi1>, vector<8x16xf32>
    %cst_46 = arith.constant dense<0xFF800000> : vector<8xf32>
    %93 = vector.multi_reduction <maximumf>, %92, %cst_46 [1] : vector<8x16xf32> to vector<8xf32>
    %94 = vector.shape_cast %93 : vector<8xf32> to vector<8x1xf32>
    %95 = vector.broadcast %94 : vector<8x1xf32> to vector<8x16xf32>
    %96 = arith.subf %92, %95 : vector<8x16xf32>
    %97 = math.exp %96 : vector<8x16xf32>
    %cst_47 = arith.constant dense<0.000000e+00> : vector<8xf32>
    %98 = vector.multi_reduction <add>, %97, %cst_47 [1] : vector<8x16xf32> to vector<8xf32>
    %99 = vector.shape_cast %98 : vector<8xf32> to vector<8x1xf32>
    %100 = tpu.reciprocal %99 {approx = true} : vector<8x1xf32> -> vector<8x1xf32>
    %101 = vector.broadcast %100 : vector<8x1xf32> to vector<8x16xf32>
    %102 = arith.mulf %97, %101 : vector<8x16xf32>
    %103 = arith.truncf %102 : vector<8x16xf32> to vector<8x16xbf16>
    %104 = vector.extract_strided_slice %65 {offsets = [0, 8], sizes = [16, 8], strides = [1, 1]} : vector<16x32xbf16> to vector<16x8xbf16>
    %cst_48 = arith.constant dense<0.000000e+00> : vector<8x8xf32>
    %105 = tpu.matmul %103, %104, %cst_48 {dimension_numbers = #tpu.dot_dimension_numbers<[1], [0], [0], [1], [0, 0, 1, 1], [], []>} : vector<8x16xbf16>, vector<16x8xbf16>, vector<8x8xf32> -> vector<8x8xf32>
    %106 = vector.extract_strided_slice %64 {offsets = [0, 16], sizes = [8, 8], strides = [1, 1]} : vector<8x32xbf16> to vector<8x8xbf16>
    %107 = vector.extract_strided_slice %65 {offsets = [0, 16], sizes = [16, 8], strides = [1, 1]} : vector<16x32xbf16> to vector<16x8xbf16>
    %cst_49 = arith.constant dense<0.000000e+00> : vector<8x16xf32>
    %108 = tpu.matmul %106, %107, %cst_49 {dimension_numbers = #tpu.dot_dimension_numbers<[1], [1], [0], [0], [0, 0, 1, 0], [], []>} : vector<8x8xbf16>, vector<16x8xbf16>, vector<8x16xf32> -> vector<8x16xf32>
    %cst_50 = arith.constant 0.353553385 : f32
    %109 = vector.broadcast %cst_50 : f32 to vector<8x16xf32>
    %110 = arith.mulf %108, %109 : vector<8x16xf32>
    %cst_51 = arith.constant 9.99999971E-10 : f32
    %111 = vector.broadcast %cst_51 : f32 to vector<8x16xf32>
    %112 = arith.select %8, %111, %110 : vector<8x16xi1>, vector<8x16xf32>
    %cst_52 = arith.constant dense<0xFF800000> : vector<8xf32>
    %113 = vector.multi_reduction <maximumf>, %112, %cst_52 [1] : vector<8x16xf32> to vector<8xf32>
    %114 = vector.shape_cast %113 : vector<8xf32> to vector<8x1xf32>
    %115 = vector.broadcast %114 : vector<8x1xf32> to vector<8x16xf32>
    %116 = arith.subf %112, %115 : vector<8x16xf32>
    %117 = math.exp %116 : vector<8x16xf32>
    %cst_53 = arith.constant dense<0.000000e+00> : vector<8xf32>
    %118 = vector.multi_reduction <add>, %117, %cst_53 [1] : vector<8x16xf32> to vector<8xf32>
    %119 = vector.shape_cast %118 : vector<8xf32> to vector<8x1xf32>
    %120 = tpu.reciprocal %119 {approx = true} : vector<8x1xf32> -> vector<8x1xf32>
    %121 = vector.broadcast %120 : vector<8x1xf32> to vector<8x16xf32>
    %122 = arith.mulf %117, %121 : vector<8x16xf32>
    %123 = arith.truncf %122 : vector<8x16xf32> to vector<8x16xbf16>
    %124 = vector.extract_strided_slice %65 {offsets = [0, 16], sizes = [16, 8], strides = [1, 1]} : vector<16x32xbf16> to vector<16x8xbf16>
    %cst_54 = arith.constant dense<0.000000e+00> : vector<8x8xf32>
    %125 = tpu.matmul %123, %124, %cst_54 {dimension_numbers = #tpu.dot_dimension_numbers<[1], [0], [0], [1], [0, 0, 1, 1], [], []>} : vector<8x16xbf16>, vector<16x8xbf16>, vector<8x8xf32> -> vector<8x8xf32>
    %126 = vector.extract_strided_slice %64 {offsets = [0, 24], sizes = [8, 8], strides = [1, 1]} : vector<8x32xbf16> to vector<8x8xbf16>
    %127 = vector.extract_strided_slice %65 {offsets = [0, 24], sizes = [16, 8], strides = [1, 1]} : vector<16x32xbf16> to vector<16x8xbf16>
    %cst_55 = arith.constant dense<0.000000e+00> : vector<8x16xf32>
    %128 = tpu.matmul %126, %127, %cst_55 {dimension_numbers = #tpu.dot_dimension_numbers<[1], [1], [0], [0], [0, 0, 1, 0], [], []>} : vector<8x8xbf16>, vector<16x8xbf16>, vector<8x16xf32> -> vector<8x16xf32>
    %cst_56 = arith.constant 0.353553385 : f32
    %129 = vector.broadcast %cst_56 : f32 to vector<8x16xf32>
    %130 = arith.mulf %128, %129 : vector<8x16xf32>
    %cst_57 = arith.constant 9.99999971E-10 : f32
    %131 = vector.broadcast %cst_57 : f32 to vector<8x16xf32>
    %132 = arith.select %8, %131, %130 : vector<8x16xi1>, vector<8x16xf32>
    %cst_58 = arith.constant dense<0xFF800000> : vector<8xf32>
    %133 = vector.multi_reduction <maximumf>, %132, %cst_58 [1] : vector<8x16xf32> to vector<8xf32>
    %134 = vector.shape_cast %133 : vector<8xf32> to vector<8x1xf32>
    %135 = vector.broadcast %134 : vector<8x1xf32> to vector<8x16xf32>
    %136 = arith.subf %132, %135 : vector<8x16xf32>
    %137 = math.exp %136 : vector<8x16xf32>
    %cst_59 = arith.constant dense<0.000000e+00> : vector<8xf32>
    %138 = vector.multi_reduction <add>, %137, %cst_59 [1] : vector<8x16xf32> to vector<8xf32>
    %139 = vector.shape_cast %138 : vector<8xf32> to vector<8x1xf32>
    %140 = tpu.reciprocal %139 {approx = true} : vector<8x1xf32> -> vector<8x1xf32>
    %141 = vector.broadcast %140 : vector<8x1xf32> to vector<8x16xf32>
    %142 = arith.mulf %137, %141 : vector<8x16xf32>
    %143 = arith.truncf %142 : vector<8x16xf32> to vector<8x16xbf16>
    %144 = vector.extract_strided_slice %65 {offsets = [0, 24], sizes = [16, 8], strides = [1, 1]} : vector<16x32xbf16> to vector<16x8xbf16>
    %cst_60 = arith.constant dense<0.000000e+00> : vector<8x8xf32>
    %145 = tpu.matmul %143, %144, %cst_60 {dimension_numbers = #tpu.dot_dimension_numbers<[1], [0], [0], [1], [0, 0, 1, 1], [], []>} : vector<8x16xbf16>, vector<16x8xbf16>, vector<8x8xf32> -> vector<8x8xf32>
    %146 = tpu.concatenate %85, %105, %125, %145 in 1 : vector<8x8xf32>, vector<8x8xf32>, vector<8x8xf32>, vector<8x8xf32> -> vector<8x32xf32>
    %c0_61 = arith.constant 0 : index
    %c0_62 = arith.constant 0 : index
    %147 = vector.load %arg8[%c0_61, %c0_62] : memref<32x32xbf16, #tpu.memory_space<vmem>>, vector<32x32xbf16>
    %148 = arith.truncf %146 : vector<8x32xf32> to vector<8x32xbf16>
    %cst_63 = arith.constant dense<0.000000e+00> : vector<8x32xf32>
    %149 = tpu.matmul %148, %147, %cst_63 {dimension_numbers = #tpu.dot_dimension_numbers<[1], [0], [0], [1], [0, 0, 1, 1], [], []>} : vector<8x32xbf16>, vector<32x32xbf16>, vector<8x32xf32> -> vector<8x32xf32>
    %150 = arith.addf %1, %149 : vector<8x32xf32>
    %cst_64 = arith.constant dense<0.000000e+00> : vector<8xf32>
    %151 = vector.multi_reduction <add>, %150, %cst_64 [1] : vector<8x32xf32> to vector<8xf32>
    %152 = vector.shape_cast %151 : vector<8xf32> to vector<8x1xf32>
    %cst_65 = arith.constant 3.200000e+01 : f32
    %153 = vector.broadcast %cst_65 : f32 to vector<8x1xf32>
    %154 = arith.divf %152, %153 : vector<8x1xf32>
    %155 = vector.broadcast %154 : vector<8x1xf32> to vector<8x32xf32>
    %156 = arith.subf %150, %155 : vector<8x32xf32>
    %157 = arith.mulf %156, %156 : vector<8x32xf32>
    %cst_66 = arith.constant dense<0.000000e+00> : vector<8xf32>
    %158 = vector.multi_reduction <add>, %157, %cst_66 [1] : vector<8x32xf32> to vector<8xf32>
    %159 = vector.shape_cast %158 : vector<8xf32> to vector<8x1xf32>
    %cst_67 = arith.constant 0.0322580636 : f32
    %160 = vector.broadcast %cst_67 : f32 to vector<8x1xf32>
    %161 = arith.mulf %159, %160 : vector<8x1xf32>
    %162 = math.sqrt %161 : vector<8x1xf32>
    %cst_68 = arith.constant 9.99999997E-7 : f32
    %163 = vector.broadcast %cst_68 : f32 to vector<8x1xf32>
    %164 = arith.addf %162, %163 : vector<8x1xf32>
    %165 = tpu.reciprocal %164 : vector<8x1xf32> -> vector<8x1xf32>
    %c0_69 = arith.constant 0 : index
    %c0_70 = arith.constant 0 : index
    %166 = vector.load %arg17[%c0_69, %c0_70] : memref<1x32xf32, #tpu.memory_space<vmem>>, vector<1x32xf32>
    %167 = vector.broadcast %166 : vector<1x32xf32> to vector<8x32xf32>
    %168 = arith.mulf %167, %156 : vector<8x32xf32>
    %169 = vector.broadcast %165 : vector<8x1xf32> to vector<8x32xf32>
    %170 = arith.mulf %168, %169 : vector<8x32xf32>
    %c0_71 = arith.constant 0 : index
    %c0_72 = arith.constant 0 : index
    %171 = vector.load %arg18[%c0_71, %c0_72] : memref<1x32xf32, #tpu.memory_space<vmem>>, vector<1x32xf32>
    %172 = vector.broadcast %171 : vector<1x32xf32> to vector<8x32xf32>
    %173 = arith.addf %170, %172 : vector<8x32xf32>
    %c0_73 = arith.constant 0 : index
    %c0_74 = arith.constant 0 : index
    %174 = vector.load %arg9[%c0_73, %c0_74] : memref<32x32xbf16, #tpu.memory_space<vmem>>, vector<32x32xbf16>
    %175 = arith.truncf %173 : vector<8x32xf32> to vector<8x32xbf16>
    %cst_75 = arith.constant dense<0.000000e+00> : vector<8x32xf32>
    %176 = tpu.matmul %175, %174, %cst_75 {dimension_numbers = #tpu.dot_dimension_numbers<[1], [0], [0], [1], [0, 0, 1, 1], [], []>} : vector<8x32xbf16>, vector<32x32xbf16>, vector<8x32xf32> -> vector<8x32xf32>
    %c0_76 = arith.constant 0 : index
    %c0_77 = arith.constant 0 : index
    %177 = vector.load %arg9[%c0_76, %c0_77] : memref<32x32xbf16, #tpu.memory_space<vmem>>, vector<32x32xbf16>
    %178 = arith.truncf %5 : vector<8x32xf32> to vector<8x32xbf16>
    %cst_78 = arith.constant dense<0.000000e+00> : vector<8x32xf32>
    %179 = tpu.matmul %178, %177, %cst_78 {dimension_numbers = #tpu.dot_dimension_numbers<[1], [0], [0], [1], [0, 0, 1, 1], [], []>} : vector<8x32xbf16>, vector<32x32xbf16>, vector<8x32xf32> -> vector<8x32xf32>
    %180 = arith.truncf %176 : vector<8x32xf32> to vector<8x32xbf16>
    %181 = arith.truncf %179 : vector<8x32xf32> to vector<8x32xbf16>
    %182 = vector.extract_strided_slice %180 {offsets = [0, 0], sizes = [8, 8], strides = [1, 1]} : vector<8x32xbf16> to vector<8x8xbf16>
    %183 = vector.extract_strided_slice %181 {offsets = [0, 0], sizes = [8, 8], strides = [1, 1]} : vector<8x32xbf16> to vector<8x8xbf16>
    %cst_79 = arith.constant dense<0.000000e+00> : vector<8x8xf32>
    %184 = tpu.matmul %182, %183, %cst_79 {dimension_numbers = #tpu.dot_dimension_numbers<[1], [1], [0], [0], [0, 0, 1, 0], [], []>} : vector<8x8xbf16>, vector<8x8xbf16>, vector<8x8xf32> -> vector<8x8xf32>
    %cst_80 = arith.constant 0.353553385 : f32
    %185 = vector.broadcast %cst_80 : f32 to vector<8x8xf32>
    %186 = arith.mulf %184, %185 : vector<8x8xf32>
    %cst_81 = arith.constant 9.99999971E-10 : f32
    %187 = vector.broadcast %cst_81 : f32 to vector<8x8xf32>
    %188 = arith.select %11, %187, %186 : vector<8x8xi1>, vector<8x8xf32>
    %cst_82 = arith.constant dense<0xFF800000> : vector<8xf32>
    %189 = vector.multi_reduction <maximumf>, %188, %cst_82 [1] : vector<8x8xf32> to vector<8xf32>
    %190 = vector.shape_cast %189 : vector<8xf32> to vector<8x1xf32>
    %191 = vector.broadcast %190 : vector<8x1xf32> to vector<8x8xf32>
    %192 = arith.subf %188, %191 : vector<8x8xf32>
    %193 = math.exp %192 : vector<8x8xf32>
    %cst_83 = arith.constant dense<0.000000e+00> : vector<8xf32>
    %194 = vector.multi_reduction <add>, %193, %cst_83 [1] : vector<8x8xf32> to vector<8xf32>
    %195 = vector.shape_cast %194 : vector<8xf32> to vector<8x1xf32>
    %196 = tpu.reciprocal %195 {approx = true} : vector<8x1xf32> -> vector<8x1xf32>
    %197 = vector.broadcast %196 : vector<8x1xf32> to vector<8x8xf32>
    %198 = arith.mulf %193, %197 : vector<8x8xf32>
    %199 = arith.truncf %198 : vector<8x8xf32> to vector<8x8xbf16>
    %200 = vector.extract_strided_slice %181 {offsets = [0, 0], sizes = [8, 8], strides = [1, 1]} : vector<8x32xbf16> to vector<8x8xbf16>
    %cst_84 = arith.constant dense<0.000000e+00> : vector<8x8xf32>
    %201 = tpu.matmul %199, %200, %cst_84 {dimension_numbers = #tpu.dot_dimension_numbers<[1], [0], [0], [1], [0, 0, 1, 1], [], []>} : vector<8x8xbf16>, vector<8x8xbf16>, vector<8x8xf32> -> vector<8x8xf32>
    %202 = vector.extract_strided_slice %180 {offsets = [0, 8], sizes = [8, 8], strides = [1, 1]} : vector<8x32xbf16> to vector<8x8xbf16>
    %203 = vector.extract_strided_slice %181 {offsets = [0, 8], sizes = [8, 8], strides = [1, 1]} : vector<8x32xbf16> to vector<8x8xbf16>
    %cst_85 = arith.constant dense<0.000000e+00> : vector<8x8xf32>
    %204 = tpu.matmul %202, %203, %cst_85 {dimension_numbers = #tpu.dot_dimension_numbers<[1], [1], [0], [0], [0, 0, 1, 0], [], []>} : vector<8x8xbf16>, vector<8x8xbf16>, vector<8x8xf32> -> vector<8x8xf32>
    %cst_86 = arith.constant 0.353553385 : f32
    %205 = vector.broadcast %cst_86 : f32 to vector<8x8xf32>
    %206 = arith.mulf %204, %205 : vector<8x8xf32>
    %cst_87 = arith.constant 9.99999971E-10 : f32
    %207 = vector.broadcast %cst_87 : f32 to vector<8x8xf32>
    %208 = arith.select %11, %207, %206 : vector<8x8xi1>, vector<8x8xf32>
    %cst_88 = arith.constant dense<0xFF800000> : vector<8xf32>
    %209 = vector.multi_reduction <maximumf>, %208, %cst_88 [1] : vector<8x8xf32> to vector<8xf32>
    %210 = vector.shape_cast %209 : vector<8xf32> to vector<8x1xf32>
    %211 = vector.broadcast %210 : vector<8x1xf32> to vector<8x8xf32>
    %212 = arith.subf %208, %211 : vector<8x8xf32>
    %213 = math.exp %212 : vector<8x8xf32>
    %cst_89 = arith.constant dense<0.000000e+00> : vector<8xf32>
    %214 = vector.multi_reduction <add>, %213, %cst_89 [1] : vector<8x8xf32> to vector<8xf32>
    %215 = vector.shape_cast %214 : vector<8xf32> to vector<8x1xf32>
    %216 = tpu.reciprocal %215 {approx = true} : vector<8x1xf32> -> vector<8x1xf32>
    %217 = vector.broadcast %216 : vector<8x1xf32> to vector<8x8xf32>
    %218 = arith.mulf %213, %217 : vector<8x8xf32>
    %219 = arith.truncf %218 : vector<8x8xf32> to vector<8x8xbf16>
    %220 = vector.extract_strided_slice %181 {offsets = [0, 8], sizes = [8, 8], strides = [1, 1]} : vector<8x32xbf16> to vector<8x8xbf16>
    %cst_90 = arith.constant dense<0.000000e+00> : vector<8x8xf32>
    %221 = tpu.matmul %219, %220, %cst_90 {dimension_numbers = #tpu.dot_dimension_numbers<[1], [0], [0], [1], [0, 0, 1, 1], [], []>} : vector<8x8xbf16>, vector<8x8xbf16>, vector<8x8xf32> -> vector<8x8xf32>
    %222 = vector.extract_strided_slice %180 {offsets = [0, 16], sizes = [8, 8], strides = [1, 1]} : vector<8x32xbf16> to vector<8x8xbf16>
    %223 = vector.extract_strided_slice %181 {offsets = [0, 16], sizes = [8, 8], strides = [1, 1]} : vector<8x32xbf16> to vector<8x8xbf16>
    %cst_91 = arith.constant dense<0.000000e+00> : vector<8x8xf32>
    %224 = tpu.matmul %222, %223, %cst_91 {dimension_numbers = #tpu.dot_dimension_numbers<[1], [1], [0], [0], [0, 0, 1, 0], [], []>} : vector<8x8xbf16>, vector<8x8xbf16>, vector<8x8xf32> -> vector<8x8xf32>
    %cst_92 = arith.constant 0.353553385 : f32
    %225 = vector.broadcast %cst_92 : f32 to vector<8x8xf32>
    %226 = arith.mulf %224, %225 : vector<8x8xf32>
    %cst_93 = arith.constant 9.99999971E-10 : f32
    %227 = vector.broadcast %cst_93 : f32 to vector<8x8xf32>
    %228 = arith.select %11, %227, %226 : vector<8x8xi1>, vector<8x8xf32>
    %cst_94 = arith.constant dense<0xFF800000> : vector<8xf32>
    %229 = vector.multi_reduction <maximumf>, %228, %cst_94 [1] : vector<8x8xf32> to vector<8xf32>
    %230 = vector.shape_cast %229 : vector<8xf32> to vector<8x1xf32>
    %231 = vector.broadcast %230 : vector<8x1xf32> to vector<8x8xf32>
    %232 = arith.subf %228, %231 : vector<8x8xf32>
    %233 = math.exp %232 : vector<8x8xf32>
    %cst_95 = arith.constant dense<0.000000e+00> : vector<8xf32>
    %234 = vector.multi_reduction <add>, %233, %cst_95 [1] : vector<8x8xf32> to vector<8xf32>
    %235 = vector.shape_cast %234 : vector<8xf32> to vector<8x1xf32>
    %236 = tpu.reciprocal %235 {approx = true} : vector<8x1xf32> -> vector<8x1xf32>
    %237 = vector.broadcast %236 : vector<8x1xf32> to vector<8x8xf32>
    %238 = arith.mulf %233, %237 : vector<8x8xf32>
    %239 = arith.truncf %238 : vector<8x8xf32> to vector<8x8xbf16>
    %240 = vector.extract_strided_slice %181 {offsets = [0, 16], sizes = [8, 8], strides = [1, 1]} : vector<8x32xbf16> to vector<8x8xbf16>
    %cst_96 = arith.constant dense<0.000000e+00> : vector<8x8xf32>
    %241 = tpu.matmul %239, %240, %cst_96 {dimension_numbers = #tpu.dot_dimension_numbers<[1], [0], [0], [1], [0, 0, 1, 1], [], []>} : vector<8x8xbf16>, vector<8x8xbf16>, vector<8x8xf32> -> vector<8x8xf32>
    %242 = vector.extract_strided_slice %180 {offsets = [0, 24], sizes = [8, 8], strides = [1, 1]} : vector<8x32xbf16> to vector<8x8xbf16>
    %243 = vector.extract_strided_slice %181 {offsets = [0, 24], sizes = [8, 8], strides = [1, 1]} : vector<8x32xbf16> to vector<8x8xbf16>
    %cst_97 = arith.constant dense<0.000000e+00> : vector<8x8xf32>
    %244 = tpu.matmul %242, %243, %cst_97 {dimension_numbers = #tpu.dot_dimension_numbers<[1], [1], [0], [0], [0, 0, 1, 0], [], []>} : vector<8x8xbf16>, vector<8x8xbf16>, vector<8x8xf32> -> vector<8x8xf32>
    %cst_98 = arith.constant 0.353553385 : f32
    %245 = vector.broadcast %cst_98 : f32 to vector<8x8xf32>
    %246 = arith.mulf %244, %245 : vector<8x8xf32>
    %cst_99 = arith.constant 9.99999971E-10 : f32
    %247 = vector.broadcast %cst_99 : f32 to vector<8x8xf32>
    %248 = arith.select %11, %247, %246 : vector<8x8xi1>, vector<8x8xf32>
    %cst_100 = arith.constant dense<0xFF800000> : vector<8xf32>
    %249 = vector.multi_reduction <maximumf>, %248, %cst_100 [1] : vector<8x8xf32> to vector<8xf32>
    %250 = vector.shape_cast %249 : vector<8xf32> to vector<8x1xf32>
    %251 = vector.broadcast %250 : vector<8x1xf32> to vector<8x8xf32>
    %252 = arith.subf %248, %251 : vector<8x8xf32>
    %253 = math.exp %252 : vector<8x8xf32>
    %cst_101 = arith.constant dense<0.000000e+00> : vector<8xf32>
    %254 = vector.multi_reduction <add>, %253, %cst_101 [1] : vector<8x8xf32> to vector<8xf32>
    %255 = vector.shape_cast %254 : vector<8xf32> to vector<8x1xf32>
    %256 = tpu.reciprocal %255 {approx = true} : vector<8x1xf32> -> vector<8x1xf32>
    %257 = vector.broadcast %256 : vector<8x1xf32> to vector<8x8xf32>
    %258 = arith.mulf %253, %257 : vector<8x8xf32>
    %259 = arith.truncf %258 : vector<8x8xf32> to vector<8x8xbf16>
    %260 = vector.extract_strided_slice %181 {offsets = [0, 24], sizes = [8, 8], strides = [1, 1]} : vector<8x32xbf16> to vector<8x8xbf16>
    %cst_102 = arith.constant dense<0.000000e+00> : vector<8x8xf32>
    %261 = tpu.matmul %259, %260, %cst_102 {dimension_numbers = #tpu.dot_dimension_numbers<[1], [0], [0], [1], [0, 0, 1, 1], [], []>} : vector<8x8xbf16>, vector<8x8xbf16>, vector<8x8xf32> -> vector<8x8xf32>
    %262 = tpu.concatenate %201, %221, %241, %261 in 1 : vector<8x8xf32>, vector<8x8xf32>, vector<8x8xf32>, vector<8x8xf32> -> vector<8x32xf32>
    %c0_103 = arith.constant 0 : index
    %c0_104 = arith.constant 0 : index
    %263 = vector.load %arg10[%c0_103, %c0_104] : memref<32x32xbf16, #tpu.memory_space<vmem>>, vector<32x32xbf16>
    %264 = arith.truncf %262 : vector<8x32xf32> to vector<8x32xbf16>
    %cst_105 = arith.constant dense<0.000000e+00> : vector<8x32xf32>
    %265 = tpu.matmul %264, %263, %cst_105 {dimension_numbers = #tpu.dot_dimension_numbers<[1], [0], [0], [1], [0, 0, 1, 1], [], []>} : vector<8x32xbf16>, vector<32x32xbf16>, vector<8x32xf32> -> vector<8x32xf32>
    %266 = arith.addf %150, %265 : vector<8x32xf32>
    %cst_106 = arith.constant dense<0.000000e+00> : vector<8xf32>
    %267 = vector.multi_reduction <add>, %266, %cst_106 [1] : vector<8x32xf32> to vector<8xf32>
    %268 = vector.shape_cast %267 : vector<8xf32> to vector<8x1xf32>
    %cst_107 = arith.constant 3.200000e+01 : f32
    %269 = vector.broadcast %cst_107 : f32 to vector<8x1xf32>
    %270 = arith.divf %268, %269 : vector<8x1xf32>
    %271 = vector.broadcast %270 : vector<8x1xf32> to vector<8x32xf32>
    %272 = arith.subf %266, %271 : vector<8x32xf32>
    %273 = arith.mulf %272, %272 : vector<8x32xf32>
    %cst_108 = arith.constant dense<0.000000e+00> : vector<8xf32>
    %274 = vector.multi_reduction <add>, %273, %cst_108 [1] : vector<8x32xf32> to vector<8xf32>
    %275 = vector.shape_cast %274 : vector<8xf32> to vector<8x1xf32>
    %cst_109 = arith.constant 0.0322580636 : f32
    %276 = vector.broadcast %cst_109 : f32 to vector<8x1xf32>
    %277 = arith.mulf %275, %276 : vector<8x1xf32>
    %278 = math.sqrt %277 : vector<8x1xf32>
    %cst_110 = arith.constant 9.99999997E-7 : f32
    %279 = vector.broadcast %cst_110 : f32 to vector<8x1xf32>
    %280 = arith.addf %278, %279 : vector<8x1xf32>
    %281 = tpu.reciprocal %280 : vector<8x1xf32> -> vector<8x1xf32>
    %c0_111 = arith.constant 0 : index
    %c0_112 = arith.constant 0 : index
    %282 = vector.load %arg19[%c0_111, %c0_112] : memref<1x32xf32, #tpu.memory_space<vmem>>, vector<1x32xf32>
    %283 = vector.broadcast %282 : vector<1x32xf32> to vector<8x32xf32>
    %284 = arith.mulf %283, %272 : vector<8x32xf32>
    %285 = vector.broadcast %281 : vector<8x1xf32> to vector<8x32xf32>
    %286 = arith.mulf %284, %285 : vector<8x32xf32>
    %c0_113 = arith.constant 0 : index
    %c0_114 = arith.constant 0 : index
    %287 = vector.load %arg20[%c0_113, %c0_114] : memref<1x32xf32, #tpu.memory_space<vmem>>, vector<1x32xf32>
    %288 = vector.broadcast %287 : vector<1x32xf32> to vector<8x32xf32>
    %289 = arith.addf %286, %288 : vector<8x32xf32>
    %c0_115 = arith.constant 0 : index
    %c0_116 = arith.constant 0 : index
    %290 = vector.load %arg11[%c0_115, %c0_116] : memref<32x64xbf16, #tpu.memory_space<vmem>>, vector<32x64xbf16>
    %291 = arith.truncf %289 : vector<8x32xf32> to vector<8x32xbf16>
    %cst_117 = arith.constant dense<0.000000e+00> : vector<8x64xf32>
    %292 = tpu.matmul %291, %290, %cst_117 {dimension_numbers = #tpu.dot_dimension_numbers<[1], [0], [0], [1], [0, 0, 1, 1], [], []>} : vector<8x32xbf16>, vector<32x64xbf16>, vector<8x64xf32> -> vector<8x64xf32>
    %c0_118 = arith.constant 0 : index
    %c0_119 = arith.constant 0 : index
    %293 = vector.load %arg12[%c0_118, %c0_119] : memref<1x64xf32, #tpu.memory_space<vmem>>, vector<1x64xf32>
    %294 = vector.broadcast %293 : vector<1x64xf32> to vector<8x64xf32>
    %295 = arith.addf %292, %294 : vector<8x64xf32>
    %cst_120 = arith.constant 0.000000e+00 : f32
    %296 = vector.broadcast %cst_120 : f32 to vector<8x64xf32>
    %297 = arith.maximumf %295, %296 : vector<8x64xf32>
    %c0_121 = arith.constant 0 : index
    %c0_122 = arith.constant 0 : index
    %298 = vector.load %arg13[%c0_121, %c0_122] : memref<64x32xbf16, #tpu.memory_space<vmem>>, vector<64x32xbf16>
    %299 = arith.truncf %297 : vector<8x64xf32> to vector<8x64xbf16>
    %cst_123 = arith.constant dense<0.000000e+00> : vector<8x32xf32>
    %300 = tpu.matmul %299, %298, %cst_123 {dimension_numbers = #tpu.dot_dimension_numbers<[1], [0], [0], [1], [0, 0, 1, 1], [], []>} : vector<8x64xbf16>, vector<64x32xbf16>, vector<8x32xf32> -> vector<8x32xf32>
    %301 = arith.addf %266, %300 : vector<8x32xf32>
    %c0_124 = arith.constant 0 : index
    %c0_125 = arith.constant 0 : index
    %302 = vector.load %arg14[%c0_124, %c0_125] : memref<1x32xf32, #tpu.memory_space<vmem>>, vector<1x32xf32>
    %303 = vector.broadcast %302 : vector<1x32xf32> to vector<8x32xf32>
    %304 = arith.addf %301, %303 : vector<8x32xf32>
    %c0_126 = arith.constant 0 : index
    %c0_127 = arith.constant 0 : index
    %c0_128 = arith.constant 0 : index
    %305 = vector.load %arg21[%c0_126, %c0_127, %c0_128] : memref<1x8x32xf32, #tpu.memory_space<vmem>>, vector<1x8x32xf32>
    %306 = vector.shape_cast %305 : vector<1x8x32xf32> to vector<8x32xf32>
    %307 = vector.shape_cast %304 : vector<8x32xf32> to vector<1x8x32xf32>
    tpu.vector_store %arg21[%c0_126, %c0_127, %c0_128], %307 {strides = array<i32>} : memref<1x8x32xf32, #tpu.memory_space<vmem>>, vector<1x8x32xf32>,
    return
  }
  func.func @transform_0(%arg0: i32, %arg1: i32) -> (i32, i32, i32) {
    %c0_i32 = arith.constant 0 : i32
    %c0_i32_0 = arith.constant 0 : i32
    return %arg0, %arg1, %c0_i32 : i32, i32, i32
  }
  func.func @transform_1(%arg0: i32, %arg1: i32) -> (i32, i32, i32) {
    %c0_i32 = arith.constant 0 : i32
    %c0_i32_0 = arith.constant 0 : i32
    %c0_i32_1 = arith.constant 0 : i32
    return %arg0, %c0_i32, %c0_i32_0 : i32, i32, i32
  }
  func.func @transform_2(%arg0: i32, %arg1: i32) -> (i32, i32, i32) {
    %c0_i32 = arith.constant 0 : i32
    %c0_i32_0 = arith.constant 0 : i32
    %c0_i32_1 = arith.constant 0 : i32
    return %arg0, %c0_i32, %c0_i32_0 : i32, i32, i32
  }
  func.func @transform_3(%arg0: i32, %arg1: i32) -> (i32, i32) {
    %c0_i32 = arith.constant 0 : i32
    %c0_i32_0 = arith.constant 0 : i32
    return %arg1, %c0_i32 : i32, i32
  }
  func.func @transform_4(%arg0: i32, %arg1: i32) -> (i32, i32) {
    %c0_i32 = arith.constant 0 : i32
    %c0_i32_0 = arith.constant 0 : i32
    return %arg1, %c0_i32 : i32, i32
  }
  func.func @transform_5(%arg0: i32, %arg1: i32) -> (i32, i32) {
    %c0_i32 = arith.constant 0 : i32
    %c0_i32_0 = arith.constant 0 : i32
    %c0_i32_1 = arith.constant 0 : i32
    return %c0_i32, %c0_i32_0 : i32, i32
  }
  func.func @transform_6(%arg0: i32, %arg1: i32) -> (i32, i32) {
    %c0_i32 = arith.constant 0 : i32
    %c0_i32_0 = arith.constant 0 : i32
    %c0_i32_1 = arith.constant 0 : i32
    return %c0_i32, %c0_i32_0 : i32, i32
  }
  func.func @transform_7(%arg0: i32, %arg1: i32) -> (i32, i32) {
    %c0_i32 = arith.constant 0 : i32
    %c0_i32_0 = arith.constant 0 : i32
    %c0_i32_1 = arith.constant 0 : i32
    return %c0_i32, %c0_i32_0 : i32, i32
  }
  func.func @transform_8(%arg0: i32, %arg1: i32) -> (i32, i32) {
    %c0_i32 = arith.constant 0 : i32
    %c0_i32_0 = arith.constant 0 : i32
    %c0_i32_1 = arith.constant 0 : i32
    return %c0_i32, %c0_i32_0 : i32, i32
  }
  func.func @transform_9(%arg0: i32, %arg1: i32) -> (i32, i32) {
    %c0_i32 = arith.constant 0 : i32
    %c0_i32_0 = arith.constant 0 : i32
    %c0_i32_1 = arith.constant 0 : i32
    return %c0_i32, %c0_i32_0 : i32, i32
  }
  func.func @transform_10(%arg0: i32, %arg1: i32) -> (i32, i32) {
    %c0_i32 = arith.constant 0 : i32
    %c0_i32_0 = arith.constant 0 : i32
    %c0_i32_1 = arith.constant 0 : i32
    return %c0_i32, %c0_i32_0 : i32, i32
  }
  func.func @transform_11(%arg0: i32, %arg1: i32) -> (i32, i32) {
    %c0_i32 = arith.constant 0 : i32
    %c0_i32_0 = arith.constant 0 : i32
    %c0_i32_1 = arith.constant 0 : i32
    return %c0_i32, %c0_i32_0 : i32, i32
  }
  func.func @transform_12(%arg0: i32, %arg1: i32) -> (i32, i32) {
    %c0_i32 = arith.constant 0 : i32
    %c0_i32_0 = arith.constant 0 : i32
    %c0_i32_1 = arith.constant 0 : i32
    return %c0_i32, %c0_i32_0 : i32, i32
  }
  func.func @transform_13(%arg0: i32, %arg1: i32) -> (i32, i32) {
    %c0_i32 = arith.constant 0 : i32
    %c0_i32_0 = arith.constant 0 : i32
    %c0_i32_1 = arith.constant 0 : i32
    return %c0_i32, %c0_i32_0 : i32, i32
  }
  func.func @transform_14(%arg0: i32, %arg1: i32) -> (i32, i32) {
    %c0_i32 = arith.constant 0 : i32
    %c0_i32_0 = arith.constant 0 : i32
    %c0_i32_1 = arith.constant 0 : i32
    return %c0_i32, %c0_i32_0 : i32, i32
  }
  func.func @transform_15(%arg0: i32, %arg1: i32) -> (i32, i32) {
    %c0_i32 = arith.constant 0 : i32
    %c0_i32_0 = arith.constant 0 : i32
    %c0_i32_1 = arith.constant 0 : i32
    return %c0_i32, %c0_i32_0 : i32, i32
  }
  func.func @transform_16(%arg0: i32, %arg1: i32) -> (i32, i32) {
    %c0_i32 = arith.constant 0 : i32
    %c0_i32_0 = arith.constant 0 : i32
    %c0_i32_1 = arith.constant 0 : i32
    return %c0_i32, %c0_i32_0 : i32, i32
  }
  func.func @transform_17(%arg0: i32, %arg1: i32) -> (i32, i32) {
    %c0_i32 = arith.constant 0 : i32
    %c0_i32_0 = arith.constant 0 : i32
    %c0_i32_1 = arith.constant 0 : i32
    return %c0_i32, %c0_i32_0 : i32, i32
  }
  func.func @transform_18(%arg0: i32, %arg1: i32) -> (i32, i32) {
    %c0_i32 = arith.constant 0 : i32
    %c0_i32_0 = arith.constant 0 : i32
    %c0_i32_1 = arith.constant 0 : i32
    return %c0_i32, %c0_i32_0 : i32, i32
  }
  func.func @transform_19(%arg0: i32, %arg1: i32) -> (i32, i32, i32) {
    %c0_i32 = arith.constant 0 : i32
    %c0_i32_0 = arith.constant 0 : i32
    return %arg0, %arg1, %c0_i32 : i32, i32, i32
  }
}

</mosaic_0001>

<llo_original>
// kernel: tpu_custom_call.1
$region0: #{tpu_custom_call.1}
  #allocation0 [shape = 'u32[]', space=smem, size = 0x4, offset = 0x4, fixed_abs, tag = 'smem constant byte address 0x4 - core index']
  #allocation1 [shape = 'u32[72,128]{1,0:T(1,128)}', space=vmem, size = 0x9000, scoped, tag = 'internal scratch']
  %s0 = inlined_call_operand.vmem [shape: f32[2,16,32], index: 0, kind: input, shape index: {}]
  %s1 = inlined_call_operand.hbm [shape: f32[2,16,32], index: 1, kind: input, shape index: {}]
  %s2 = inlined_call_operand.vmem [shape: f32[2,8,32], index: 2, kind: input, shape index: {}]
  %s3 = inlined_call_operand.hbm [shape: f32[16,16], index: 3, kind: input, shape index: {}]
  %s4 = inlined_call_operand.vmem [shape: f32[16,8], index: 4, kind: input, shape index: {}]
  %s5 = inlined_call_operand.hbm [shape: bf16[32,32], index: 5, kind: input, shape index: {}]
  %s6 = inlined_call_operand.hbm [shape: bf16[32,32], index: 6, kind: input, shape index: {}]
  %s7 = inlined_call_operand.hbm [shape: bf16[32,32], index: 7, kind: input, shape index: {}]
  %s8 = inlined_call_operand.hbm [shape: bf16[32,32], index: 8, kind: input, shape index: {}]
  %s9 = inlined_call_operand.vmem [shape: bf16[32,64], index: 9, kind: input, shape index: {}]
  %s10 = inlined_call_operand.vmem [shape: f32[1,64], index: 10, kind: input, shape index: {}]
  %s11 = inlined_call_operand.vmem [shape: bf16[64,32], index: 11, kind: input, shape index: {}]
  %s12 = inlined_call_operand.vmem [shape: f32[1,32], index: 12, kind: input, shape index: {}]
  %s13 = inlined_call_operand.vmem [shape: f32[1,32], index: 13, kind: input, shape index: {}]
  %s14 = inlined_call_operand.vmem [shape: f32[1,32], index: 14, kind: input, shape index: {}]
  %s15 = inlined_call_operand.vmem [shape: f32[1,32], index: 15, kind: input, shape index: {}]
  %s16 = inlined_call_operand.vmem [shape: f32[1,32], index: 16, kind: input, shape index: {}]
  %s17 = inlined_call_operand.vmem [shape: f32[1,32], index: 17, kind: input, shape index: {}]
  %s18 = inlined_call_operand.vmem [shape: f32[1,32], index: 18, kind: input, shape index: {}]
  %s19 = inlined_call_operand.hbm [shape: f32[2,16,32], index: 19, kind: output, shape index: {}]
  %s20 = sld [smem:[#allocation0]]
  $region133: #{tpu_custom_call.1} parent=0
    _
  %s22 = ssub.s32 1, %s20
  %s23 = scalar_select 0, %s22, %s20
  $region1: #{tpu_custom_call.1} parent=0
    #allocation2 [shape = 'u8[16384]{0}', space=vmem, size = 0x4000, scoped, tag = 'input window, operand 1']
    #allocation3 [shape = 's32[2]{0}', space=sflag, size = 0x8, scoped, tag = 'scoped memory for tpu_custom_call.1']
    #allocation4 [shape = 's32[2]{0}', space=sflag, size = 0x8, scoped, tag = 'scoped memory for tpu_custom_call.1']
    #allocation5 [shape = 'u8[8192]{0}', space=vmem, size = 0x2000, scoped, tag = 'input window, operand 3']
    #allocation6 [shape = 's32[2]{0}', space=sflag, size = 0x8, scoped, tag = 'scoped memory for tpu_custom_call.1']
    #allocation7 [shape = 'u8[8192]{0}', space=vmem, size = 0x2000, scoped, tag = 'input window, operand 5, single buffered']
    #allocation8 [shape = 'u8[8192]{0}', space=vmem, size = 0x2000, scoped, tag = 'input window, operand 6, single buffered']
    #allocation9 [shape = 's32[1]{0}', space=sflag, size = 0x4, scoped, tag = 'scoped memory for tpu_custom_call.1']
    #allocation10 [shape = 'u8[8192]{0}', space=vmem, size = 0x2000, scoped, tag = 'input window, operand 7, single buffered']
    #allocation11 [shape = 'u8[8192]{0}', space=vmem, size = 0x2000, scoped, tag = 'input window, operand 8, single buffered']
    #allocation12 [shape = 's32[1]{0}', space=sflag, size = 0x4, scoped, tag = 'scoped memory for tpu_custom_call.1']
    #allocation13 [shape = 'u8[8192]{0}', space=vmem, size = 0x2000, scoped, tag = 'output window, operand 0']
    %24 = vsyncpa [#allocation3], 0
    %s25 = scalar_lea.sflag [#allocation3], 1
    %26 = vsyncpa %s25, 0
    %27 = vsyncpa [#allocation6], 0
    %s28 = scalar_lea.sflag [#allocation6], 1
    %29 = vsyncpa %s28, 0
    %30 = vsyncpa [#allocation9], 0
    %31 = vsyncpa [#allocation12], 0
    %32 = vsyncpa [#allocation4], 0
    %s33 = scalar_lea.sflag [#allocation4], 1
    %34 = vsyncpa %s33, 0
    loop: start=0, step=1, limit=6
    $region2: #{tpu_custom_call.1} parent=1 // loop_pre_header
      _
    $region3: #{tpu_custom_call.1} parent=1 // loop_header
      %s36 = sphi 0, %s40
      %p37 = scmp.ge.s32.totalorder %s36, 6
      %s43 = sphi 0, %s55
      %s44 = sphi 0, %s51
      %s45 = sphi 0, %s43
      %s46 = sphi 0, %s44
      %s47 = sphi 0, %s45
      %s48 = sphi 0, %s46
      %s60 = sphi 0, %s62
      %s63 = sphi 0, %s60
      %s64 = sphi 0, %s63
      %s80 = sphi 0, %s64
      %s86 = sphi 0, %s88
      %s89 = sphi 0, %s86
      %s90 = sphi 0, %s89
      %s106 = sphi 0, %s90
      %s112 = sphi 0, %s114
      %s115 = sphi 0, %s112
      %s116 = sphi 0, %s115
      %s132 = sphi 0, %s116
      %s138 = sphi 0, %s140
      %s141 = sphi 0, %s138
      %s142 = sphi 0, %s141
      %s158 = sphi 0, %s142
      %s164 = sphi 0, %s166
      %s167 = sphi 0, %s164
      %s168 = sphi 0, %s167
      %s184 = sphi 0, %s168
      %s188 = sphi 0, %s188
      %s190 = sphi 0, %s188
      %s191 = sphi 0, %s190
      %s205 = sphi 0, %s191
      %s209 = sphi 0, %s209
      %s211 = sphi 0, %s209
      %s212 = sphi 0, %s211
      %s226 = sphi 0, %s212
      %s230 = sphi 0, %s230
      %s232 = sphi 0, %s230
      %s233 = sphi 0, %s232
      %s247 = sphi 0, %s233
      %s251 = sphi 0, %s251
      %s253 = sphi 0, %s251
      %s254 = sphi 0, %s253
      %s268 = sphi 0, %s254
      %s272 = sphi 0, %s272
      %s274 = sphi 0, %s272
      %s275 = sphi 0, %s274
      %s289 = sphi 0, %s275
      %s293 = sphi 0, %s293
      %s295 = sphi 0, %s293
      %s296 = sphi 0, %s295
      %s310 = sphi 0, %s296
      %s314 = sphi 0, %s314
      %s316 = sphi 0, %s314
      %s317 = sphi 0, %s316
      %s331 = sphi 0, %s317
      %s335 = sphi 0, %s335
      %s337 = sphi 0, %s335
      %s338 = sphi 0, %s337
      %s352 = sphi 0, %s338
      %s356 = sphi 0, %s356
      %s358 = sphi 0, %s356
      %s359 = sphi 0, %s358
      %s373 = sphi 0, %s359
      %s377 = sphi 0, %s377
      %s379 = sphi 0, %s377
      %s380 = sphi 0, %s379
      %s394 = sphi 0, %s380
      %s398 = sphi 0, %s398
      %s400 = sphi 0, %s398
      %s401 = sphi 0, %s400
      %s415 = sphi 0, %s401
      %s419 = sphi 0, %s419
      %s421 = sphi 0, %s419
      %s422 = sphi 0, %s421
      %s436 = sphi 0, %s422
      %s440 = sphi 0, %s440
      %s442 = sphi 0, %s440
      %s443 = sphi 0, %s442
      %s457 = sphi 0, %s443
      %s461 = sphi 0, %s461
      %s463 = sphi 0, %s461
      %s464 = sphi 0, %s463
      %s478 = sphi 0, %s464
      %s486 = sphi 0, %s488
      %s489 = sphi 0, %s486
      %s490 = sphi 0, %s489
      %s506 = sphi 0, %s490
    $region4: #{tpu_custom_call.1} parent=1 // loop_header_branch
      %39 = sbr.rel (%p37) target = $region8
    $region5: #{tpu_custom_call.1} parent=1 // loop_body
      %s41 = ssub.s32 %s36, 1
      %s42 = ssub.s32 %s36, 2
      %s49 = sadd.s32 1, %s44
      %p50 = scmp.ge.s32.totalorder %s49, 2
      %s51 = scalar_select %p50, 0, %s49
      %s52 = sadd.s32 1, %s43
      %s53 = scalar_select %p50, %s52, %s43
      %p54 = scmp.ge.s32.totalorder %s53, 2
      %s55 = scalar_select %p54, 0, %s53
      %s56 = ssub.s32 %s43, %s55
      %s57 = ssub.s32 %s44, %s51
      %s58 = sor.u32 %s56, %s57
      %p59 = scmp.eq.s32.totalorder %s58, 0
      %s61 = sadd.s32 %s60, 1
      %s62 = scalar_select %p59, %s60, %s61
      %p65 = pneg %p59
      %p66 = scmp.eq.s32.totalorder %s36, 3
      %p67 = por %p65, %p66
      %p68 = scmp.ne.s32.totalorder %s60, %s63
      %p69 = scmp.eq.s32.totalorder %s36, 0
      %p70 = por %p68, %p69
      %p71 = scmp.ne.s32.totalorder %s60, %s63
      %p72 = scmp.eq.s32.totalorder %s41, 3
      %p73 = por %p71, %p72
      %p74 = scmp.ne.s32.totalorder %s63, %s64
      %p75 = scmp.eq.s32.totalorder %s41, 0
      %p76 = por %p74, %p75
      %p77 = scmp.ne.s32.totalorder %s63, %s64
      %p78 = scmp.eq.s32.totalorder %s42, 3
      %p79 = por %p77, %p78
      %p81 = scmp.ne.s32.totalorder %s64, %s80
      %p82 = scmp.eq.s32.totalorder %s42, 0
      %p83 = por %p81, %p82
      %s84 = ssub.s32 %s43, %s55
      %p85 = scmp.eq.s32.totalorder %s84, 0
      %s87 = sadd.s32 %s86, 1
      %s88 = scalar_select %p85, %s86, %s87
      %p91 = pneg %p85
      %p92 = scmp.eq.s32.totalorder %s36, 3
      %p93 = por %p91, %p92
      %p94 = scmp.ne.s32.totalorder %s86, %s89
      %p95 = scmp.eq.s32.totalorder %s36, 0
      %p96 = por %p94, %p95
      %p97 = scmp.ne.s32.totalorder %s86, %s89
      %p98 = scmp.eq.s32.totalorder %s41, 3
      %p99 = por %p97, %p98
      %p100 = scmp.ne.s32.totalorder %s89, %s90
      %p101 = scmp.eq.s32.totalorder %s41, 0
      %p102 = por %p100, %p101
      %p103 = scmp.ne.s32.totalorder %s89, %s90
      %p104 = scmp.eq.s32.totalorder %s42, 3
      %p105 = por %p103, %p104
      %p107 = scmp.ne.s32.totalorder %s90, %s106
      %p108 = scmp.eq.s32.totalorder %s42, 0
      %p109 = por %p107, %p108
      %s110 = ssub.s32 %s43, %s55
      %p111 = scmp.eq.s32.totalorder %s110, 0
      %s113 = sadd.s32 %s112, 1
      %s114 = scalar_select %p111, %s112, %s113
      %p117 = pneg %p111
      %p118 = scmp.eq.s32.totalorder %s36, 3
      %p119 = por %p117, %p118
      %p120 = scmp.ne.s32.totalorder %s112, %s115
      %p121 = scmp.eq.s32.totalorder %s36, 0
      %p122 = por %p120, %p121
      %p123 = scmp.ne.s32.totalorder %s112, %s115
      %p124 = scmp.eq.s32.totalorder %s41, 3
      %p125 = por %p123, %p124
      %p126 = scmp.ne.s32.totalorder %s115, %s116
      %p127 = scmp.eq.s32.totalorder %s41, 0
      %p128 = por %p126, %p127
      %p129 = scmp.ne.s32.totalorder %s115, %s116
      %p130 = scmp.eq.s32.totalorder %s42, 3
      %p131 = por %p129, %p130
      %p133 = scmp.ne.s32.totalorder %s116, %s132
      %p134 = scmp.eq.s32.totalorder %s42, 0
      %p135 = por %p133, %p134
      %s136 = ssub.s32 %s44, %s51
      %p137 = scmp.eq.s32.totalorder %s136, 0
      %s139 = sadd.s32 %s138, 1
      %s140 = scalar_select %p137, %s138, %s139
      %p143 = pneg %p137
      %p144 = scmp.eq.s32.totalorder %s36, 3
      %p145 = por %p143, %p144
      %p146 = scmp.ne.s32.totalorder %s138, %s141
      %p147 = scmp.eq.s32.totalorder %s36, 0
      %p148 = por %p146, %p147
      %p149 = scmp.ne.s32.totalorder %s138, %s141
      %p150 = scmp.eq.s32.totalorder %s41, 3
      %p151 = por %p149, %p150
      %p152 = scmp.ne.s32.totalorder %s141, %s142
      %p153 = scmp.eq.s32.totalorder %s41, 0
      %p154 = por %p152, %p153
      %p155 = scmp.ne.s32.totalorder %s141, %s142
      %p156 = scmp.eq.s32.totalorder %s42, 3
      %p157 = por %p155, %p156
      %p159 = scmp.ne.s32.totalorder %s142, %s158
      %p160 = scmp.eq.s32.totalorder %s42, 0
      %p161 = por %p159, %p160
      %s162 = ssub.s32 %s44, %s51
      %p163 = scmp.eq.s32.totalorder %s162, 0
      %s165 = sadd.s32 %s164, 1
      %s166 = scalar_select %p163, %s164, %s165
      %p169 = pneg %p163
      %p170 = scmp.eq.s32.totalorder %s36, 3
      %p171 = por %p169, %p170
      %p172 = scmp.ne.s32.totalorder %s164, %s167
      %p173 = scmp.eq.s32.totalorder %s36, 0
      %p174 = por %p172, %p173
      %p175 = scmp.ne.s32.totalorder %s164, %s167
      %p176 = scmp.eq.s32.totalorder %s41, 3
      %p177 = por %p175, %p176
      %p178 = scmp.ne.s32.totalorder %s167, %s168
      %p179 = scmp.eq.s32.totalorder %s41, 0
      %p180 = por %p178, %p179
      %p181 = scmp.ne.s32.totalorder %s167, %s168
      %p182 = scmp.eq.s32.totalorder %s42, 3
      %p183 = por %p181, %p182
      %p185 = scmp.ne.s32.totalorder %s168, %s184
      %p186 = scmp.eq.s32.totalorder %s42, 0
      %p187 = por %p185, %p186
      %s189 = sadd.s32 %s188, 1
      %p192 = scmp.eq.s32.totalorder %s36, 3
      %p193 = scmp.ne.s32.totalorder %s188, %s190
      %p194 = scmp.eq.s32.totalorder %s36, 0
      %p195 = por %p193, %p194
      %p196 = scmp.ne.s32.totalorder %s188, %s190
      %p197 = scmp.eq.s32.totalorder %s41, 3
      %p198 = por %p196, %p197
      %p199 = scmp.ne.s32.totalorder %s190, %s191
      %p200 = scmp.eq.s32.totalorder %s41, 0
      %p201 = por %p199, %p200
      %p202 = scmp.ne.s32.totalorder %s190, %s191
      %p203 = scmp.eq.s32.totalorder %s42, 3
      %p204 = por %p202, %p203
      %p206 = scmp.ne.s32.totalorder %s191, %s205
      %p207 = scmp.eq.s32.totalorder %s42, 0
      %p208 = por %p206, %p207
      %s210 = sadd.s32 %s209, 1
      %p213 = scmp.eq.s32.totalorder %s36, 3
      %p214 = scmp.ne.s32.totalorder %s209, %s211
      %p215 = scmp.eq.s32.totalorder %s36, 0
      %p216 = por %p214, %p215
      %p217 = scmp.ne.s32.totalorder %s209, %s211
      %p218 = scmp.eq.s32.totalorder %s41, 3
      %p219 = por %p217, %p218
      %p220 = scmp.ne.s32.totalorder %s211, %s212
      %p221 = scmp.eq.s32.totalorder %s41, 0
      %p222 = por %p220, %p221
      %p223 = scmp.ne.s32.totalorder %s211, %s212
      %p224 = scmp.eq.s32.totalorder %s42, 3
      %p225 = por %p223, %p224
      %p227 = scmp.ne.s32.totalorder %s212, %s226
      %p228 = scmp.eq.s32.totalorder %s42, 0
      %p229 = por %p227, %p228
      %s231 = sadd.s32 %s230, 1
      %p234 = scmp.eq.s32.totalorder %s36, 3
      %p235 = scmp.ne.s32.totalorder %s230, %s232
      %p236 = scmp.eq.s32.totalorder %s36, 0
      %p237 = por %p235, %p236
      %p238 = scmp.ne.s32.totalorder %s230, %s232
      %p239 = scmp.eq.s32.totalorder %s41, 3
      %p240 = por %p238, %p239
      %p241 = scmp.ne.s32.totalorder %s232, %s233
      %p242 = scmp.eq.s32.totalorder %s41, 0
      %p243 = por %p241, %p242
      %p244 = scmp.ne.s32.totalorder %s232, %s233
      %p245 = scmp.eq.s32.totalorder %s42, 3
      %p246 = por %p244, %p245
      %p248 = scmp.ne.s32.totalorder %s233, %s247
      %p249 = scmp.eq.s32.totalorder %s42, 0
      %p250 = por %p248, %p249
      %s252 = sadd.s32 %s251, 1
      %p255 = scmp.eq.s32.totalorder %s36, 3
      %p256 = scmp.ne.s32.totalorder %s251, %s253
      %p257 = scmp.eq.s32.totalorder %s36, 0
      %p258 = por %p256, %p257
      %p259 = scmp.ne.s32.totalorder %s251, %s253
      %p260 = scmp.eq.s32.totalorder %s41, 3
      %p261 = por %p259, %p260
      %p262 = scmp.ne.s32.totalorder %s253, %s254
      %p263 = scmp.eq.s32.totalorder %s41, 0
      %p264 = por %p262, %p263
      %p265 = scmp.ne.s32.totalorder %s253, %s254
      %p266 = scmp.eq.s32.totalorder %s42, 3
      %p267 = por %p265, %p266
      %p269 = scmp.ne.s32.totalorder %s254, %s268
      %p270 = scmp.eq.s32.totalorder %s42, 0
      %p271 = por %p269, %p270
      %s273 = sadd.s32 %s272, 1
      %p276 = scmp.eq.s32.totalorder %s36, 3
      %p277 = scmp.ne.s32.totalorder %s272, %s274
      %p278 = scmp.eq.s32.totalorder %s36, 0
      %p279 = por %p277, %p278
      %p280 = scmp.ne.s32.totalorder %s272, %s274
      %p281 = scmp.eq.s32.totalorder %s41, 3
      %p282 = por %p280, %p281
      %p283 = scmp.ne.s32.totalorder %s274, %s275
      %p284 = scmp.eq.s32.totalorder %s41, 0
      %p285 = por %p283, %p284
      %p286 = scmp.ne.s32.totalorder %s274, %s275
      %p287 = scmp.eq.s32.totalorder %s42, 3
      %p288 = por %p286, %p287
      %p290 = scmp.ne.s32.totalorder %s275, %s289
      %p291 = scmp.eq.s32.totalorder %s42, 0
      %p292 = por %p290, %p291
      %s294 = sadd.s32 %s293, 1
      %p297 = scmp.eq.s32.totalorder %s36, 3
      %p298 = scmp.ne.s32.totalorder %s293, %s295
      %p299 = scmp.eq.s32.totalorder %s36, 0
      %p300 = por %p298, %p299
      %p301 = scmp.ne.s32.totalorder %s293, %s295
      %p302 = scmp.eq.s32.totalorder %s41, 3
      %p303 = por %p301, %p302
      %p304 = scmp.ne.s32.totalorder %s295, %s296
      %p305 = scmp.eq.s32.totalorder %s41, 0
      %p306 = por %p304, %p305
      %p307 = scmp.ne.s32.totalorder %s295, %s296
      %p308 = scmp.eq.s32.totalorder %s42, 3
      %p309 = por %p307, %p308
      %p311 = scmp.ne.s32.totalorder %s296, %s310
      %p312 = scmp.eq.s32.totalorder %s42, 0
      %p313 = por %p311, %p312
      %s315 = sadd.s32 %s314, 1
      %p318 = scmp.eq.s32.totalorder %s36, 3
      %p319 = scmp.ne.s32.totalorder %s314, %s316
      %p320 = scmp.eq.s32.totalorder %s36, 0
      %p321 = por %p319, %p320
      %p322 = scmp.ne.s32.totalorder %s314, %s316
      %p323 = scmp.eq.s32.totalorder %s41, 3
      %p324 = por %p322, %p323
      %p325 = scmp.ne.s32.totalorder %s316, %s317
      %p326 = scmp.eq.s32.totalorder %s41, 0
      %p327 = por %p325, %p326
      %p328 = scmp.ne.s32.totalorder %s316, %s317
      %p329 = scmp.eq.s32.totalorder %s42, 3
      %p330 = por %p328, %p329
      %p332 = scmp.ne.s32.totalorder %s317, %s331
      %p333 = scmp.eq.s32.totalorder %s42, 0
      %p334 = por %p332, %p333
      %s336 = sadd.s32 %s335, 1
      %p339 = scmp.eq.s32.totalorder %s36, 3
      %p340 = scmp.ne.s32.totalorder %s335, %s337
      %p341 = scmp.eq.s32.totalorder %s36, 0
      %p342 = por %p340, %p341
      %p343 = scmp.ne.s32.totalorder %s335, %s337
      %p344 = scmp.eq.s32.totalorder %s41, 3
      %p345 = por %p343, %p344
      %p346 = scmp.ne.s32.totalorder %s337, %s338
      %p347 = scmp.eq.s32.totalorder %s41, 0
      %p348 = por %p346, %p347
      %p349 = scmp.ne.s32.totalorder %s337, %s338
      %p350 = scmp.eq.s32.totalorder %s42, 3
      %p351 = por %p349, %p350
      %p353 = scmp.ne.s32.totalorder %s338, %s352
      %p354 = scmp.eq.s32.totalorder %s42, 0
      %p355 = por %p353, %p354
      %s357 = sadd.s32 %s356, 1
      %p360 = scmp.eq.s32.totalorder %s36, 3
      %p361 = scmp.ne.s32.totalorder %s356, %s358
      %p362 = scmp.eq.s32.totalorder %s36, 0
      %p363 = por %p361, %p362
      %p364 = scmp.ne.s32.totalorder %s356, %s358
      %p365 = scmp.eq.s32.totalorder %s41, 3
      %p366 = por %p364, %p365
      %p367 = scmp.ne.s32.totalorder %s358, %s359
      %p368 = scmp.eq.s32.totalorder %s41, 0
      %p369 = por %p367, %p368
      %p370 = scmp.ne.s32.totalorder %s358, %s359
      %p371 = scmp.eq.s32.totalorder %s42, 3
      %p372 = por %p370, %p371
      %p374 = scmp.ne.s32.totalorder %s359, %s373
      %p375 = scmp.eq.s32.totalorder %s42, 0
      %p376 = por %p374, %p375
      %s378 = sadd.s32 %s377, 1
      %p381 = scmp.eq.s32.totalorder %s36, 3
      %p382 = scmp.ne.s32.totalorder %s377, %s379
      %p383 = scmp.eq.s32.totalorder %s36, 0
      %p384 = por %p382, %p383
      %p385 = scmp.ne.s32.totalorder %s377, %s379
      %p386 = scmp.eq.s32.totalorder %s41, 3
      %p387 = por %p385, %p386
      %p388 = scmp.ne.s32.totalorder %s379, %s380
      %p389 = scmp.eq.s32.totalorder %s41, 0
      %p390 = por %p388, %p389
      %p391 = scmp.ne.s32.totalorder %s379, %s380
      %p392 = scmp.eq.s32.totalorder %s42, 3
      %p393 = por %p391, %p392
      %p395 = scmp.ne.s32.totalorder %s380, %s394
      %p396 = scmp.eq.s32.totalorder %s42, 0
      %p397 = por %p395, %p396
      %s399 = sadd.s32 %s398, 1
      %p402 = scmp.eq.s32.totalorder %s36, 3
      %p403 = scmp.ne.s32.totalorder %s398, %s400
      %p404 = scmp.eq.s32.totalorder %s36, 0
      %p405 = por %p403, %p404
      %p406 = scmp.ne.s32.totalorder %s398, %s400
      %p407 = scmp.eq.s32.totalorder %s41, 3
      %p408 = por %p406, %p407
      %p409 = scmp.ne.s32.totalorder %s400, %s401
      %p410 = scmp.eq.s32.totalorder %s41, 0
      %p411 = por %p409, %p410
      %p412 = scmp.ne.s32.totalorder %s400, %s401
      %p413 = scmp.eq.s32.totalorder %s42, 3
      %p414 = por %p412, %p413
      %p416 = scmp.ne.s32.totalorder %s401, %s415
      %p417 = scmp.eq.s32.totalorder %s42, 0
      %p418 = por %p416, %p417
      %s420 = sadd.s32 %s419, 1
      %p423 = scmp.eq.s32.totalorder %s36, 3
      %p424 = scmp.ne.s32.totalorder %s419, %s421
      %p425 = scmp.eq.s32.totalorder %s36, 0
      %p426 = por %p424, %p425
      %p427 = scmp.ne.s32.totalorder %s419, %s421
      %p428 = scmp.eq.s32.totalorder %s41, 3
      %p429 = por %p427, %p428
      %p430 = scmp.ne.s32.totalorder %s421, %s422
      %p431 = scmp.eq.s32.totalorder %s41, 0
      %p432 = por %p430, %p431
      %p433 = scmp.ne.s32.totalorder %s421, %s422
      %p434 = scmp.eq.s32.totalorder %s42, 3
      %p435 = por %p433, %p434
      %p437 = scmp.ne.s32.totalorder %s422, %s436
      %p438 = scmp.eq.s32.totalorder %s42, 0
      %p439 = por %p437, %p438
      %s441 = sadd.s32 %s440, 1
      %p444 = scmp.eq.s32.totalorder %s36, 3
      %p445 = scmp.ne.s32.totalorder %s440, %s442
      %p446 = scmp.eq.s32.totalorder %s36, 0
      %p447 = por %p445, %p446
      %p448 = scmp.ne.s32.totalorder %s440, %s442
      %p449 = scmp.eq.s32.totalorder %s41, 3
      %p450 = por %p448, %p449
      %p451 = scmp.ne.s32.totalorder %s442, %s443
      %p452 = scmp.eq.s32.totalorder %s41, 0
      %p453 = por %p451, %p452
      %p454 = scmp.ne.s32.totalorder %s442, %s443
      %p455 = scmp.eq.s32.totalorder %s42, 3
      %p456 = por %p454, %p455
      %p458 = scmp.ne.s32.totalorder %s443, %s457
      %p459 = scmp.eq.s32.totalorder %s42, 0
      %p460 = por %p458, %p459
      %s462 = sadd.s32 %s461, 1
      %p465 = scmp.eq.s32.totalorder %s36, 3
      %p466 = scmp.ne.s32.totalorder %s461, %s463
      %p467 = scmp.eq.s32.totalorder %s36, 0
      %p468 = por %p466, %p467
      %p469 = scmp.ne.s32.totalorder %s461, %s463
      %p470 = scmp.eq.s32.totalorder %s41, 3
      %p471 = por %p469, %p470
      %p472 = scmp.ne.s32.totalorder %s463, %s464
      %p473 = scmp.eq.s32.totalorder %s41, 0
      %p474 = por %p472, %p473
      %p475 = scmp.ne.s32.totalorder %s463, %s464
      %p476 = scmp.eq.s32.totalorder %s42, 3
      %p477 = por %p475, %p476
      %p479 = scmp.ne.s32.totalorder %s464, %s478
      %p480 = scmp.eq.s32.totalorder %s42, 0
      %p481 = por %p479, %p480
      %s482 = ssub.s32 %s43, %s55
      %s483 = ssub.s32 %s44, %s51
      %s484 = sor.u32 %s482, %s483
      %p485 = scmp.eq.s32.totalorder %s484, 0
      %s487 = sadd.s32 %s486, 1
      %s488 = scalar_select %p485, %s486, %s487
      %p491 = pneg %p485
      %p492 = scmp.eq.s32.totalorder %s36, 3
      %p493 = por %p491, %p492
      %p494 = scmp.ne.s32.totalorder %s486, %s489
      %p495 = scmp.eq.s32.totalorder %s36, 0
      %p496 = por %p494, %p495
      %p497 = scmp.ne.s32.totalorder %s486, %s489
      %p498 = scmp.eq.s32.totalorder %s41, 3
      %p499 = por %p497, %p498
      %p500 = scmp.ne.s32.totalorder %s489, %s490
      %p501 = scmp.eq.s32.totalorder %s41, 0
      %p502 = por %p500, %p501
      %p503 = scmp.ne.s32.totalorder %s489, %s490
      %p504 = scmp.eq.s32.totalorder %s42, 3
      %p505 = por %p503, %p504
      %p507 = scmp.ne.s32.totalorder %s490, %s506
      %p508 = scmp.eq.s32.totalorder %s42, 0
      %p509 = por %p507, %p508
      %p510 = scmp.le.s32.totalorder 1, %s36
      %p511 = scmp.lt.s32.totalorder %s36, 5
      %p512 = pnand %p510, %p511
      %p513 = pneg %p512
      // Predicated region
      $region9: #{tpu_custom_call.1} parent=5 // pred_check
        _
      $region10: #{tpu_custom_call.1} parent=5 // pred_check_branch
        %515 = sbr.rel (%p512) target = $region12
      $region11: #{tpu_custom_call.1} parent=5 // pred_region
        %s516 = ssub.s32 %s36, 1
        // Predicated region
        $region13: #{tpu_custom_call.1} parent=11 // pred_check
          %p517 = pneg %p201
        $region14: #{tpu_custom_call.1} parent=11 // pred_check_branch
          %519 = sbr.rel (%p517) target = $region16
        $region15: #{tpu_custom_call.1} parent=11 // pred_region
          %521 = vsyncadd [#allocation6], 0
          %s522 = sshll.u32 %s5, 4
          %s523 = int_to_ptr.hbm [resolvable:$true] %s522
          %s524 = sshll.u32 [#allocation7], 4
          %s525 = int_to_ptr.vmem [resolvable:$true] %s524
          %530 = dma.hbm_to_vmem [thread:$0]  %s523, 256, %s525, [#allocation6], 64, 64, 4
        $region16: #{tpu_custom_call.1} parent=11 // pred_fallthru
          _
        // Predicated region
        $region17: #{tpu_custom_call.1} parent=11 // pred_check
          %p531 = pneg %p222
        $region18: #{tpu_custom_call.1} parent=11 // pred_check_branch
          %533 = sbr.rel (%p531) target = $region20
        $region19: #{tpu_custom_call.1} parent=11 // pred_region
          %535 = vsyncadd [#allocation9], 0
          %s536 = sshll.u32 %s6, 4
          %s537 = int_to_ptr.hbm [resolvable:$true] %s536
          %s538 = sshll.u32 [#allocation8], 4
          %s539 = int_to_ptr.vmem [resolvable:$true] %s538
          %544 = dma.hbm_to_vmem [thread:$0]  %s537, 256, %s539, [#allocation9], 64, 64, 4
        $region20: #{tpu_custom_call.1} parent=11 // pred_fallthru
          _
        // Predicated region
        $region21: #{tpu_custom_call.1} parent=11 // pred_check
          %p545 = pneg %p243
        $region22: #{tpu_custom_call.1} parent=11 // pred_check_branch
          %547 = sbr.rel (%p545) target = $region24
        $region23: #{tpu_custom_call.1} parent=11 // pred_region
          %549 = vsyncadd [#allocation9], 0
          %s550 = sshll.u32 %s7, 4
          %s551 = int_to_ptr.hbm [resolvable:$true] %s550
          %s552 = sshll.u32 [#allocation10], 4
          %s553 = int_to_ptr.vmem [resolvable:$true] %s552
          %558 = dma.hbm_to_vmem [thread:$0]  %s551, 256, %s553, [#allocation9], 64, 64, 4
        $region24: #{tpu_custom_call.1} parent=11 // pred_fallthru
          _
        // Predicated region
        $region25: #{tpu_custom_call.1} parent=11 // pred_check
          %p559 = pneg %p264
        $region26: #{tpu_custom_call.1} parent=11 // pred_check_branch
          %561 = sbr.rel (%p559) target = $region28
        $region27: #{tpu_custom_call.1} parent=11 // pred_region
          %563 = vsyncadd [#allocation12], 0
          %s564 = sshll.u32 %s8, 4
          %s565 = int_to_ptr.hbm [resolvable:$true] %s564
          %s566 = sshll.u32 [#allocation11], 4
          %s567 = int_to_ptr.vmem [resolvable:$true] %s566
          %572 = dma.hbm_to_vmem [thread:$0]  %s565, 256, %s567, [#allocation12], 64, 64, 4
        $region28: #{tpu_custom_call.1} parent=11 // pred_fallthru
          _
        // Predicated region
        $region29: #{tpu_custom_call.1} parent=11 // pred_check
          %p573 = pneg %p285
        $region30: #{tpu_custom_call.1} parent=11 // pred_check_branch
          %575 = sbr.rel (%p573) target = $region32
        $region31: #{tpu_custom_call.1} parent=11 // pred_region
          _
        $region32: #{tpu_custom_call.1} parent=11 // pred_fallthru
          _
        // Predicated region
        $region33: #{tpu_custom_call.1} parent=11 // pred_check
          %p576 = pneg %p306
        $region34: #{tpu_custom_call.1} parent=11 // pred_check_branch
          %578 = sbr.rel (%p576) target = $region36
        $region35: #{tpu_custom_call.1} parent=11 // pred_region
          _
        $region36: #{tpu_custom_call.1} parent=11 // pred_fallthru
          _
        // Predicated region
        $region37: #{tpu_custom_call.1} parent=11 // pred_check
          %p579 = pneg %p327
        $region38: #{tpu_custom_call.1} parent=11 // pred_check_branch
          %581 = sbr.rel (%p579) target = $region40
        $region39: #{tpu_custom_call.1} parent=11 // pred_region
          _
        $region40: #{tpu_custom_call.1} parent=11 // pred_fallthru
          _
        // Predicated region
        $region41: #{tpu_custom_call.1} parent=11 // pred_check
          %p582 = pneg %p348
        $region42: #{tpu_custom_call.1} parent=11 // pred_check_branch
          %584 = sbr.rel (%p582) target = $region44
        $region43: #{tpu_custom_call.1} parent=11 // pred_region
          _
        $region44: #{tpu_custom_call.1} parent=11 // pred_fallthru
          _
        // Predicated region
        $region45: #{tpu_custom_call.1} parent=11 // pred_check
          %p585 = pneg %p369
        $region46: #{tpu_custom_call.1} parent=11 // pred_check_branch
          %587 = sbr.rel (%p585) target = $region48
        $region47: #{tpu_custom_call.1} parent=11 // pred_region
          _
        $region48: #{tpu_custom_call.1} parent=11 // pred_fallthru
          _
        // Predicated region
        $region49: #{tpu_custom_call.1} parent=11 // pred_check
          %p588 = pneg %p390
        $region50: #{tpu_custom_call.1} parent=11 // pred_check_branch
          %590 = sbr.rel (%p588) target = $region52
        $region51: #{tpu_custom_call.1} parent=11 // pred_region
          _
        $region52: #{tpu_custom_call.1} parent=11 // pred_fallthru
          _
        // Predicated region
        $region53: #{tpu_custom_call.1} parent=11 // pred_check
          %p591 = pneg %p411
        $region54: #{tpu_custom_call.1} parent=11 // pred_check_branch
          %593 = sbr.rel (%p591) target = $region56
        $region55: #{tpu_custom_call.1} parent=11 // pred_region
          _
        $region56: #{tpu_custom_call.1} parent=11 // pred_fallthru
          _
        // Predicated region
        $region57: #{tpu_custom_call.1} parent=11 // pred_check
          %p594 = pneg %p432
        $region58: #{tpu_custom_call.1} parent=11 // pred_check_branch
          %596 = sbr.rel (%p594) target = $region60
        $region59: #{tpu_custom_call.1} parent=11 // pred_region
          _
        $region60: #{tpu_custom_call.1} parent=11 // pred_fallthru
          _
        // Predicated region
        $region61: #{tpu_custom_call.1} parent=11 // pred_check
          %p597 = pneg %p453
        $region62: #{tpu_custom_call.1} parent=11 // pred_check_branch
          %599 = sbr.rel (%p597) target = $region64
        $region63: #{tpu_custom_call.1} parent=11 // pred_region
          _
        $region64: #{tpu_custom_call.1} parent=11 // pred_fallthru
          _
        // Predicated region
        $region65: #{tpu_custom_call.1} parent=11 // pred_check
          %p600 = pneg %p474
        $region66: #{tpu_custom_call.1} parent=11 // pred_check_branch
          %602 = sbr.rel (%p600) target = $region68
        $region67: #{tpu_custom_call.1} parent=11 // pred_region
          _
        $region68: #{tpu_custom_call.1} parent=11 // pred_fallthru
          _
      $region12: #{tpu_custom_call.1} parent=5 // pred_fallthru
        _
      %p603 = scmp.lt.s32.totalorder %s36, 4
      // Predicated region
      $region69: #{tpu_custom_call.1} parent=5 // pred_check
        %p604 = pneg %p603
      $region70: #{tpu_custom_call.1} parent=5 // pred_check_branch
        %606 = sbr.rel (%p604) target = $region72
      $region71: #{tpu_custom_call.1} parent=5 // pred_region
        // Predicated region
        $region73: #{tpu_custom_call.1} parent=71 // pred_check
          %p607 = pneg %p70
        $region74: #{tpu_custom_call.1} parent=71 // pred_check_branch
          %609 = sbr.rel (%p607) target = $region76
        $region75: #{tpu_custom_call.1} parent=71 // pred_region
          %p610 = scmp.lt.s32.totalorder %s43, 1
          %s611 = scalar_select %p610, %s43, 1
          %p612 = scmp.lt.s32.totalorder %s44, 1
          %s613 = scalar_select %p612, %s44, 1
          %s614 = smul.addr %s611, 2
          %s615 = sadd.s32 %s613, %s614
          %s616 = smul.addr %s615, 8
          %s617 = scalar_lea.vmem %s0, %s616
        $region76: #{tpu_custom_call.1} parent=71 // pred_fallthru
          _
        // Predicated region
        $region77: #{tpu_custom_call.1} parent=71 // pred_check
          %p618 = pneg %p96
        $region78: #{tpu_custom_call.1} parent=71 // pred_check_branch
          %620 = sbr.rel (%p618) target = $region80
        $region79: #{tpu_custom_call.1} parent=71 // pred_region
          %s621 = sand.u32 %s86, 1
          %s622 = scalar_lea.sflag [#allocation3], %s621
          %s623 = sand.u32 %s86, 1
          %s624 = smul.addr %s623, 16
          %s625 = scalar_lea.vmem [#allocation2], %s624
          %627 = vsyncadd %s622, 0
          %s628 = smul.addr %s43, 2
          %s629 = smul.addr %s628, 8
          %s630 = scalar_lea.hbm %s1, %s629
          %s631 = sshll.u32 %s630, 4
          %s632 = int_to_ptr.hbm [resolvable:$true] %s631
          %s633 = sshll.u32 %s625, 4
          %s634 = int_to_ptr.vmem [resolvable:$true] %s633
          %639 = dma.hbm_to_vmem [thread:$0]  %s632, 256, %s634, %s622, 128, 128, 8
        $region80: #{tpu_custom_call.1} parent=71 // pred_fallthru
          _
        // Predicated region
        $region81: #{tpu_custom_call.1} parent=71 // pred_check
          %p640 = pneg %p122
        $region82: #{tpu_custom_call.1} parent=71 // pred_check_branch
          %642 = sbr.rel (%p640) target = $region84
        $region83: #{tpu_custom_call.1} parent=71 // pred_region
          %p643 = scmp.lt.s32.totalorder %s43, 1
          %s644 = scalar_select %p643, %s43, 1
          %s645 = smul.addr %s644, 8
          %s646 = scalar_lea.vmem %s2, %s645
        $region84: #{tpu_custom_call.1} parent=71 // pred_fallthru
          _
        // Predicated region
        $region85: #{tpu_custom_call.1} parent=71 // pred_check
          %p647 = pneg %p148
        $region86: #{tpu_custom_call.1} parent=71 // pred_check_branch
          %649 = sbr.rel (%p647) target = $region88
        $region87: #{tpu_custom_call.1} parent=71 // pred_region
          %s650 = sand.u32 %s36, 1
          %s651 = scalar_lea.sflag [#allocation6], %s650
          %s652 = sand.u32 %s138, 1
          %s653 = smul.addr %s652, 8
          %s654 = scalar_lea.vmem [#allocation5], %s653
          %656 = vsyncadd %s651, 0
          %s657 = smul.addr %s44, 8
          %s658 = scalar_lea.hbm %s3, %s657
          %s660 = sshll.u32 %s658, 4
          %s661 = int_to_ptr.hbm [resolvable:$true] %s660
          %s662 = sshll.u32 %s654, 4
          %s663 = int_to_ptr.vmem [resolvable:$true] %s662
          %665 = dma.hbm_to_vmem [thread:$0]  %s661, 128, %s663, %s651
        $region88: #{tpu_custom_call.1} parent=71 // pred_fallthru
          _
        // Predicated region
        $region89: #{tpu_custom_call.1} parent=71 // pred_check
          %p666 = pneg %p174
        $region90: #{tpu_custom_call.1} parent=71 // pred_check_branch
          %668 = sbr.rel (%p666) target = $region92
        $region91: #{tpu_custom_call.1} parent=71 // pred_region
          %p669 = scmp.lt.s32.totalorder %s44, 1
          %s670 = scalar_select %p669, %s44, 1
          %s671 = smul.addr %s670, 8
          %s672 = scalar_lea.vmem %s4, %s671
        $region92: #{tpu_custom_call.1} parent=71 // pred_fallthru
          _
      $region72: #{tpu_custom_call.1} parent=5 // pred_fallthru
        _
      %p673 = scmp.le.s32.totalorder 1, %s36
      %p674 = scmp.lt.s32.totalorder %s36, 5
      %p675 = pnand %p673, %p674
      %p676 = pneg %p675
      // Predicated region
      $region93: #{tpu_custom_call.1} parent=5 // pred_check
        _
      $region94: #{tpu_custom_call.1} parent=5 // pred_check_branch
        %678 = sbr.rel (%p675) target = $region96
      $region95: #{tpu_custom_call.1} parent=5 // pred_region
        %s679 = ssub.s32 %s36, 1
        %s680 = sand.u32 %s89, 1
        %s681 = scalar_lea.sflag [#allocation3], %s680
        %s682 = sand.u32 %s89, 1
        %s683 = smul.addr %s682, 16
        %s684 = scalar_lea.vmem [#allocation2], %s683
        // Predicated region
        $region97: #{tpu_custom_call.1} parent=95 // pred_check
          %p685 = pneg %p102
        $region98: #{tpu_custom_call.1} parent=95 // pred_check_branch
          %687 = sbr.rel (%p685) target = $region100
        $region99: #{tpu_custom_call.1} parent=95 // pred_region
          %689 = dma.done %s681, 256
        $region100: #{tpu_custom_call.1} parent=95 // pred_fallthru
          _
        %s690 = sand.u32 %s41, 1
        %s691 = scalar_lea.sflag [#allocation6], %s690
        %s692 = sand.u32 %s141, 1
        %s693 = smul.addr %s692, 8
        %s694 = scalar_lea.vmem [#allocation5], %s693
        // Predicated region
        $region101: #{tpu_custom_call.1} parent=95 // pred_check
          %p695 = pneg %p154
        $region102: #{tpu_custom_call.1} parent=95 // pred_check_branch
          %697 = sbr.rel (%p695) target = $region104
        $region103: #{tpu_custom_call.1} parent=95 // pred_region
          %699 = dma.done %s691, 128
        $region104: #{tpu_custom_call.1} parent=95 // pred_fallthru
          _
        // Predicated region
        $region105: #{tpu_custom_call.1} parent=95 // pred_check
          %p700 = pneg %p201
        $region106: #{tpu_custom_call.1} parent=95 // pred_check_branch
          %702 = sbr.rel (%p700) target = $region108
        $region107: #{tpu_custom_call.1} parent=95 // pred_region
          %704 = dma.done [#allocation6], 256
        $region108: #{tpu_custom_call.1} parent=95 // pred_fallthru
          _
        // Predicated region
        $region109: #{tpu_custom_call.1} parent=95 // pred_check
          %p705 = pneg %p222
        $region110: #{tpu_custom_call.1} parent=95 // pred_check_branch
          %707 = sbr.rel (%p705) target = $region112
        $region111: #{tpu_custom_call.1} parent=95 // pred_region
          %709 = dma.done [#allocation9], 256
        $region112: #{tpu_custom_call.1} parent=95 // pred_fallthru
          _
        // Predicated region
        $region113: #{tpu_custom_call.1} parent=95 // pred_check
          %p710 = pneg %p243
        $region114: #{tpu_custom_call.1} parent=95 // pred_check_branch
          %712 = sbr.rel (%p710) target = $region116
        $region115: #{tpu_custom_call.1} parent=95 // pred_region
          %714 = dma.done [#allocation9], 256
        $region116: #{tpu_custom_call.1} parent=95 // pred_fallthru
          _
        // Predicated region
        $region117: #{tpu_custom_call.1} parent=95 // pred_check
          %p715 = pneg %p264
        $region118: #{tpu_custom_call.1} parent=95 // pred_check_branch
          %717 = sbr.rel (%p715) target = $region120
        $region119: #{tpu_custom_call.1} parent=95 // pred_region
          %719 = dma.done [#allocation12], 256
        $region120: #{tpu_custom_call.1} parent=95 // pred_fallthru
          _
        %p720 = scmp.lt.s32.totalorder %s45, 1
        %s721 = scalar_select %p720, %s45, 1
        %p722 = scmp.lt.s32.totalorder %s46, 1
        %s723 = scalar_select %p722, %s46, 1
        %s724 = smul.addr %s721, 2
        %s725 = sadd.s32 %s723, %s724
        %s726 = smul.addr %s725, 8
        %s727 = scalar_lea.vmem %s0, %s726
        %p728 = pneg %p76
        %p729 = pneg %p73
        %s730 = sand.u32 %s89, 1
        %s731 = scalar_lea.sflag [#allocation3], %s730
        %s732 = sand.u32 %s89, 1
        %s733 = smul.addr %s732, 16
        %s734 = scalar_lea.vmem [#allocation2], %s733
        %p735 = pneg %p102
        %p736 = pneg %p99
        %p737 = scmp.lt.s32.totalorder %s45, 1
        %s738 = scalar_select %p737, %s45, 1
        %s739 = smul.addr %s738, 8
        %s740 = scalar_lea.vmem %s2, %s739
        %p741 = pneg %p128
        %p742 = pneg %p125
        %s743 = sand.u32 %s41, 1
        %s744 = scalar_lea.sflag [#allocation6], %s743
        %s745 = sand.u32 %s141, 1
        %s746 = smul.addr %s745, 8
        %s747 = scalar_lea.vmem [#allocation5], %s746
        %p748 = pneg %p154
        %p749 = pneg %p151
        %p750 = scmp.lt.s32.totalorder %s46, 1
        %s751 = scalar_select %p750, %s46, 1
        %s752 = smul.addr %s751, 8
        %s753 = scalar_lea.vmem %s4, %s752
        %p754 = pneg %p180
        %p755 = pneg %p177
        %p756 = pneg %p201
        %p757 = pneg %p198
        %p758 = pneg %p222
        %p759 = pneg %p219
        %p760 = pneg %p243
        %p761 = pneg %p240
        %p762 = pneg %p264
        %p763 = pneg %p261
        %p764 = pneg %p285
        %p765 = pneg %p282
        %p766 = pneg %p306
        %p767 = pneg %p303
        %p768 = pneg %p327
        %p769 = pneg %p324
        %p770 = pneg %p348
        %p771 = pneg %p345
        %p772 = pneg %p369
        %p773 = pneg %p366
        %p774 = pneg %p390
        %p775 = pneg %p387
        %p776 = pneg %p411
        %p777 = pneg %p408
        %p778 = pneg %p432
        %p779 = pneg %p429
        %p780 = pneg %p453
        %p781 = pneg %p450
        %p782 = pneg %p474
        %p783 = pneg %p471
        %p784 = pneg %p502
        %p785 = pneg %p499
        %s786 = sand.u32 %s489, 1
        %s787 = scalar_lea.sflag [#allocation4], %s786
        %s788 = sand.u32 %s489, 1
        %s789 = smul.addr %s788, 8
        %s790 = scalar_lea.vmem [#allocation13], %s789
        %p791 = scmp.lt.s32.totalorder %s45, 1
        %s792 = scalar_select %p791, %s45, 1
        %p793 = scmp.lt.s32.totalorder %s46, 1
        %s794 = scalar_select %p793, %s46, 1
        %s795 = smul.addr %s792, 2
        %s796 = sadd.s32 %s794, %s795
        %s797 = smul.addr %s796, 8
        %s798 = scalar_lea.vmem %s0, %s797
        %p799 = scmp.lt.s32.totalorder %s45, 1
        %s800 = scalar_select %p799, %s45, 1
        %s801 = smul.addr %s800, 8
        %s802 = scalar_lea.vmem %s2, %s801
        %p803 = scmp.lt.s32.totalorder %s46, 1
        %s804 = scalar_select %p803, %s46, 1
        %s805 = smul.addr %s804, 8
        %s806 = scalar_lea.vmem %s4, %s805
        %v808 = vld [vmem:[%s798] sm:$0xff]
        %v809 = vld [vmem:[%s684] sm:$0xff]
        %v810 = vld [vmem:[%s684 + $0x8] sm:$0xff]
        %v811 = vld [vmem:[%s802] sm:$0xff]
        %v812 = vld [vmem:[%s694] sm:$0xff]
        %vm813 = vcmp.eq.f32.partialorder %v812, 0.0
        %v814 = vld [vmem:[%s806] sm:$0xff]
        %vm815 = vcmp.eq.f32.partialorder %v814, 0.0
        %vm816 = vcmask 261120
        %v817 = vsel %vm816, %v809, 0.0
        %818 = vadd.xlane.f32.xlu0 %v817
        %v819 = vpop.xlane.xlu0 %818
        %v820 = vsel %vm816, %v810, 0.0
        %821 = vadd.xlane.f32.xlu0 %v820
        %v822 = vpop.xlane.xlu0 %821
        %v823 = vrcp.pop 32.0
        %v824 = vmul.f32 32.0, %v823
        %v825 = vsub.f32 1.0, %v824
        %v826 = vmul.f32 %v823, %v825
        %v827 = vadd.f32 %v823, %v826
        %vm828 = vweird.f32 %v823
        %v829 = vsel %vm828, %v823, %v827
        %v830 = vmul.f32 %v819, %v829
        %v831 = vmul.f32 %v822, %v829
        %v832 = vsub.f32 %v809, %v830
        %v833 = vsub.f32 %v810, %v831
        %v834 = vmul.f32 %v832, %v832
        %v835 = vmul.f32 %v833, %v833
        %v836 = vsel %vm816, %v834, 0.0
        %837 = vadd.xlane.f32.xlu0 %v836
        %v838 = vpop.xlane.xlu0 %837
        %v839 = vsel %vm816, %v835, 0.0
        %840 = vadd.xlane.f32.xlu0 %v839
        %v841 = vpop.xlane.xlu0 %840
        %v842 = vmul.f32 %v838, 0.032258064
        %v843 = vmul.f32 %v841, 0.032258064
        %v844 = vrsqrt.pop %v842
        %v845 = vmul.f32 %v844, %v842
        %v846 = vmul.f32 %v845, %v844
        %v847 = vmul.f32 0.5, %v846
        %v848 = vsub.f32 1.5, %v847
        %v849 = vmul.f32 %v844, %v848
        %v850 = vmul.f32 %v842, %v849
        %vm851 = vcmp.eq.f32.partialorder %v842, inf
        %v852 = vsel %vm851, %v842, %v850
        %vm853 = vcmp.eq.f32.partialorder %v842, 0.0
        %v854 = vand.u32 %v842, 2147483648
        %v855 = vsel %vm853, %v854, %v852
        %v856 = vrsqrt.pop %v843
        %v857 = vmul.f32 %v856, %v843
        %v858 = vmul.f32 %v857, %v856
        %v859 = vmul.f32 0.5, %v858
        %v860 = vsub.f32 1.5, %v859
        %v861 = vmul.f32 %v856, %v860
        %v862 = vmul.f32 %v843, %v861
        %vm863 = vcmp.eq.f32.partialorder %v843, inf
        %v864 = vsel %vm863, %v843, %v862
        %vm865 = vcmp.eq.f32.partialorder %v843, 0.0
        %v866 = vand.u32 %v843, 2147483648
        %v867 = vsel %vm865, %v866, %v864
        %v868 = vadd.f32 %v855, 1e-06
        %v869 = vadd.f32 %v867, 1e-06
        %v870 = vrcp.pop %v868
        %v871 = vmul.f32 %v868, %v870
        %v872 = vsub.f32 1.0, %v871
        %v873 = vmul.f32 %v870, %v872
        %v874 = vadd.f32 %v870, %v873
        %vm875 = vweird.f32 %v868
        %vm876 = vweird.f32 %v870
        %vm877 = vmor %vm875, %vm876
        %v878 = vsel %vm877, %v870, %v874
        %v879 = vand.u32 2147483647, %v868
        %vm880 = vcmp.eq.f32.partialorder %v879, 8.507059e+37
        %v881 = vand.u32 %v868, 2147483648
        %v882 = vor.u32 1.1754944e-38, %v881
        %v883 = vsel %vm880, %v882, %v878
        %v884 = vrcp.pop %v869
        %v885 = vmul.f32 %v869, %v884
        %v886 = vsub.f32 1.0, %v885
        %v887 = vmul.f32 %v884, %v886
        %v888 = vadd.f32 %v884, %v887
        %vm889 = vweird.f32 %v869
        %vm890 = vweird.f32 %v884
        %vm891 = vmor %vm889, %vm890
        %v892 = vsel %vm891, %v884, %v888
        %v893 = vand.u32 2147483647, %v869
        %vm894 = vcmp.eq.f32.partialorder %v893, 8.507059e+37
        %v895 = vand.u32 %v869, 2147483648
        %v896 = vor.u32 1.1754944e-38, %v895
        %v897 = vsel %vm894, %v896, %v892
        %v898 = vld [vmem:[%s13] sm:$0x1]
        %v900 = vperm.slane %v898, 0
        %v902 = vmul.f32 %v900, %v832
        %v903 = vmul.f32 %v900, %v833
        %v904 = vmul.f32 %v902, %v883
        %v905 = vmul.f32 %v903, %v897
        %v906 = vld [vmem:[%s14] sm:$0x1]
        %v908 = vperm.slane %v906, 0
        %v910 = vadd.f32 %v904, %v908
        %v911 = vadd.f32 %v905, %v908
        %v912 = vld [vmem:[#allocation7] sm:$0xf]
        %v913 = vld [vmem:[#allocation7 + $0x4] sm:$0xf]
        %v914 = vld [vmem:[#allocation7 + $0x8] sm:$0xf]
        %v915 = vld [vmem:[#allocation7 + $0xc] sm:$0xf]
        %v916 = vpack.c.bf16 %v911, %v910
        %v921 = vunpack.c.l.b16 %v912
        %v922 = vunpack.c.l.b16 %v913
        %v923 = vunpack.c.l.b16 %v914
        %v924 = vunpack.c.l.b16 %v915
        %v925 = vpack.c.b16 %v922, %v921
        %v926 = vpack.c.b16 %v924, %v923
        %v930 = vsel %vm816, %v916, 0
        %932 = vmatpush.bf16.msra.mxu0 0
        %933 = vmatpush.bf16.msra.mxu0 0
        %934 = vmatpush.bf16.msra.mxu0 0
        %935 = vmatpush.bf16.msra.mxu0 0
        %936 = vmatpush.bf16.msra.mxu0 0
        %937 = vmatpush.bf16.msra.mxu0 0
        %938 = vmatpush.bf16.msra.mxu0 %v926
        %939 = vmatpush.bf16.msra.mxu0 %v925
        %940 = vmatmul.bf16.gmra.mxu0 %v930
        %v941 = vpop.f32.mrf.mxu0
        %v942 = vadd.f32 0.0, %v941
        %v943 = vpop.f32.mrf.mxu0
        %v944 = vadd.f32 0.0, %v943
        %945 = vdwg.mxu0
        %v946 = vsel %vm816, %v808, 0.0
        %947 = vadd.xlane.f32.xlu0 %v946
        %v948 = vpop.xlane.xlu0 %947
        %v949 = vmul.f32 %v948, %v829
        %v950 = vsub.f32 %v808, %v949
        %v951 = vmul.f32 %v950, %v950
        %v952 = vsel %vm816, %v951, 0.0
        %953 = vadd.xlane.f32.xlu0 %v952
        %v954 = vpop.xlane.xlu0 %953
        %v955 = vmul.f32 %v954, 0.032258064
        %v956 = vrsqrt.pop %v955
        %v957 = vmul.f32 %v956, %v955
        %v958 = vmul.f32 %v957, %v956
        %v959 = vmul.f32 0.5, %v958
        %v960 = vsub.f32 1.5, %v959
        %v961 = vmul.f32 %v956, %v960
        %v962 = vmul.f32 %v955, %v961
        %vm963 = vcmp.eq.f32.partialorder %v955, inf
        %v964 = vsel %vm963, %v955, %v962
        %vm965 = vcmp.eq.f32.partialorder %v955, 0.0
        %v966 = vand.u32 %v955, 2147483648
        %v967 = vsel %vm965, %v966, %v964
        %v968 = vadd.f32 %v967, 1e-06
        %v969 = vrcp.pop %v968
        %v970 = vmul.f32 %v968, %v969
        %v971 = vsub.f32 1.0, %v970
        %v972 = vmul.f32 %v969, %v971
        %v973 = vadd.f32 %v969, %v972
        %vm974 = vweird.f32 %v968
        %vm975 = vweird.f32 %v969
        %vm976 = vmor %vm974, %vm975
        %v977 = vsel %vm976, %v969, %v973
        %v978 = vand.u32 2147483647, %v968
        %vm979 = vcmp.eq.f32.partialorder %v978, 8.507059e+37
        %v980 = vand.u32 %v968, 2147483648
        %v981 = vor.u32 1.1754944e-38, %v980
        %v982 = vsel %vm979, %v981, %v977
        %v983 = vmul.f32 %v900, %v950
        %v984 = vmul.f32 %v983, %v982
        %v985 = vadd.f32 %v984, %v908
        %v986 = vpack.c.bf16 %v985, %v985
        %v988 = vsel %vm816, %v986, 0
        %990 = vmatpush.bf16.msra.mxu0 0
        %991 = vmatpush.bf16.msra.mxu0 0
        %992 = vmatpush.bf16.msra.mxu0 0
        %993 = vmatpush.bf16.msra.mxu0 0
        %994 = vmatpush.bf16.msra.mxu0 0
        %995 = vmatpush.bf16.msra.mxu0 0
        %996 = vmatpush.bf16.msra.mxu0 %v926
        %997 = vmatpush.bf16.msra.mxu0 %v925
        %998 = vmatmul.bf16.gmra.mxu0 %v988
        %v999 = vpop.f32.mrf.mxu0
        %v1000 = vadd.f32 0.0, %v999
        %v1001 = vpop.f32.mrf.mxu0
        %1002 = vdwg.mxu0
        %v1003 = vpack.c.bf16 %v1000, %v1000
        %v1004 = vpack.c.bf16 %v942, %v942
        %v1005 = vpack.c.bf16 %v944, %v944
        %v1008 = vunpack.c.l.b16 %v1004
        %v1009 = vunpack.c.l.b16 %v1005
        %v1010 = vpack.c.b16 %v1009, %v1008
        %vm1011 = vcmask 64512
        %v1013 = vsel %vm1011, %v1003, 0
        %v1016 = vsel %vm1011, %v1010, 0
        %1018 = vmatpush.bf16.xpose.msra.mxu0 0
        %1019 = vmatpush.bf16.xpose.msra.mxu0 0
        %1020 = vmatpush.bf16.xpose.msra.mxu0 0
        %1021 = vmatpush.bf16.xpose.msra.mxu0 0
        %1022 = vmatpush.bf16.xpose.msra.mxu0 0
        %1023 = vmatpush.bf16.xpose.msra.mxu0 0
        %1024 = vmatpush.bf16.xpose.msra.mxu0 0
        %1025 = vmatpush.bf16.xpose.msra.mxu0 %v1016
        %1026 = vmatmul.bf16.gmra.mxu0 %v1013
        %v1027 = vpop.f32.mrf.mxu0
        %v1028 = vadd.f32 0.0, %v1027
        %v1029 = vpop.f32.mrf.mxu0
        %1030 = vdwg.mxu0
        %v1031 = vmul.f32 %v1028, 0.35355338
        %v1032 = vsel %vm813, 1e-09, %v1031
        %vm1033 = vcmask 130048
        %v1034 = vsel %vm1033, %v1032, -inf
        %1035 = vmax.xlane.f32.xlu0 %v1034
        %v1036 = vpop.xlane.xlu0 %1035
        %v1037 = vsub.f32 %v1032, %v1036
        %v1038 = vmul.f32 %v1037, 1.442695
        %v1039 = vpow.pop %v1038
        %v1040 = vsel %vm1033, %v1039, 0.0
        %1041 = vadd.xlane.f32.xlu0 %v1040
        %v1042 = vpop.xlane.xlu0 %1041
        %v1043 = vrcp.pop %v1042
        %v1044 = vmul.f32 %v1039, %v1043
        %v1045 = vpack.c.bf16 %v1044, %v1044
        %v1048 = vsel %vm1033, %v1045, 0
        %1050 = vmatpush.bf16.msra.mxu0 0
        %1051 = vmatpush.bf16.msra.mxu0 0
        %1052 = vmatpush.bf16.msra.mxu0 0
        %1053 = vmatpush.bf16.msra.mxu0 0
        %1054 = vmatpush.bf16.msra.mxu0 0
        %1055 = vmatpush.bf16.msra.mxu0 0
        %1056 = vmatpush.bf16.msra.mxu0 0
        %1057 = vmatpush.bf16.msra.mxu0 %v1010
        %1058 = vmatmul.bf16.gmra.mxu0 %v1048
        %v1059 = vpop.f32.mrf.mxu0
        %v1060 = vadd.f32 0.0, %v1059
        %v1061 = vpop.f32.mrf.mxu0
        %1062 = vdwg.mxu0
        %v1064 = vunpack.c.l.b16 %v1003
        %v1065 = vpack.c.b16 %v1064, %v1064
        %1066 = vrot.lane.b32.xlu0 %v1065, 120
        %v1067 = vpop.permute.xlu0 %1066
        %1068 = vrot.lane.b32.xlu0 %v1010, 120
        %v1069 = vpop.permute.xlu0 %1068
        %v1071 = vsel %vm1011, %v1067, 0
        %v1074 = vsel %vm1011, %v1069, 0
        %1076 = vmatpush.bf16.xpose.msra.mxu0 0
        %1077 = vmatpush.bf16.xpose.msra.mxu0 0
        %1078 = vmatpush.bf16.xpose.msra.mxu0 0
        %1079 = vmatpush.bf16.xpose.msra.mxu0 0
        %1080 = vmatpush.bf16.xpose.msra.mxu0 0
        %1081 = vmatpush.bf16.xpose.msra.mxu0 0
        %1082 = vmatpush.bf16.xpose.msra.mxu0 0
        %1083 = vmatpush.bf16.xpose.msra.mxu0 %v1074
        %1084 = vmatmul.bf16.gmra.mxu0 %v1071
        %v1085 = vpop.f32.mrf.mxu0
        %v1086 = vadd.f32 0.0, %v1085
        %v1087 = vpop.f32.mrf.mxu0
        %1088 = vdwg.mxu0
        %v1089 = vmul.f32 %v1086, 0.35355338
        %v1090 = vsel %vm813, 1e-09, %v1089
        %v1091 = vsel %vm1033, %v1090, -inf
        %1092 = vmax.xlane.f32.xlu0 %v1091
        %v1093 = vpop.xlane.xlu0 %1092
        %v1094 = vsub.f32 %v1090, %v1093
        %v1095 = vmul.f32 %v1094, 1.442695
        %v1096 = vpow.pop %v1095
        %v1097 = vsel %vm1033, %v1096, 0.0
        %1098 = vadd.xlane.f32.xlu0 %v1097
        %v1099 = vpop.xlane.xlu0 %1098
        %v1100 = vrcp.pop %v1099
        %v1101 = vmul.f32 %v1096, %v1100
        %v1102 = vpack.c.bf16 %v1101, %v1101
        %v1105 = vsel %vm1033, %v1102, 0
        %1107 = vmatpush.bf16.msra.mxu0 0
        %1108 = vmatpush.bf16.msra.mxu0 0
        %1109 = vmatpush.bf16.msra.mxu0 0
        %1110 = vmatpush.bf16.msra.mxu0 0
        %1111 = vmatpush.bf16.msra.mxu0 0
        %1112 = vmatpush.bf16.msra.mxu0 0
        %1113 = vmatpush.bf16.msra.mxu0 0
        %1114 = vmatpush.bf16.msra.mxu0 %v1069
        %1115 = vmatmul.bf16.gmra.mxu0 %v1105
        %v1116 = vpop.f32.mrf.mxu0
        %v1117 = vadd.f32 0.0, %v1116
        %v1118 = vpop.f32.mrf.mxu0
        %1119 = vdwg.mxu0
        %1120 = vrot.lane.b32.xlu0 %v1065, 112
        %v1121 = vpop.permute.xlu0 %1120
        %1122 = vrot.lane.b32.xlu0 %v1010, 112
        %v1123 = vpop.permute.xlu0 %1122
        %v1125 = vsel %vm1011, %v1121, 0
        %v1128 = vsel %vm1011, %v1123, 0
        %1130 = vmatpush.bf16.xpose.msra.mxu0 0
        %1131 = vmatpush.bf16.xpose.msra.mxu0 0
        %1132 = vmatpush.bf16.xpose.msra.mxu0 0
        %1133 = vmatpush.bf16.xpose.msra.mxu0 0
        %1134 = vmatpush.bf16.xpose.msra.mxu0 0
        %1135 = vmatpush.bf16.xpose.msra.mxu0 0
        %1136 = vmatpush.bf16.xpose.msra.mxu0 0
        %1137 = vmatpush.bf16.xpose.msra.mxu0 %v1128
        %1138 = vmatmul.bf16.gmra.mxu0 %v1125
        %v1139 = vpop.f32.mrf.mxu0
        %v1140 = vadd.f32 0.0, %v1139
        %v1141 = vpop.f32.mrf.mxu0
        %1142 = vdwg.mxu0
        %v1143 = vmul.f32 %v1140, 0.35355338
        %v1144 = vsel %vm813, 1e-09, %v1143
        %v1145 = vsel %vm1033, %v1144, -inf
        %1146 = vmax.xlane.f32.xlu0 %v1145
        %v1147 = vpop.xlane.xlu0 %1146
        %v1148 = vsub.f32 %v1144, %v1147
        %v1149 = vmul.f32 %v1148, 1.442695
        %v1150 = vpow.pop %v1149
        %v1151 = vsel %vm1033, %v1150, 0.0
        %1152 = vadd.xlane.f32.xlu0 %v1151
        %v1153 = vpop.xlane.xlu0 %1152
        %v1154 = vrcp.pop %v1153
        %v1155 = vmul.f32 %v1150, %v1154
        %v1156 = vpack.c.bf16 %v1155, %v1155
        %v1159 = vsel %vm1033, %v1156, 0
        %1161 = vmatpush.bf16.msra.mxu0 0
        %1162 = vmatpush.bf16.msra.mxu0 0
        %1163 = vmatpush.bf16.msra.mxu0 0
        %1164 = vmatpush.bf16.msra.mxu0 0
        %1165 = vmatpush.bf16.msra.mxu0 0
        %1166 = vmatpush.bf16.msra.mxu0 0
        %1167 = vmatpush.bf16.msra.mxu0 0
        %1168 = vmatpush.bf16.msra.mxu0 %v1123
        %1169 = vmatmul.bf16.gmra.mxu0 %v1159
        %v1170 = vpop.f32.mrf.mxu0
        %v1171 = vadd.f32 0.0, %v1170
        %v1172 = vpop.f32.mrf.mxu0
        %1173 = vdwg.mxu0
        %1174 = vrot.lane.b32.xlu0 %v1065, 104
        %v1175 = vpop.permute.xlu0 %1174
        %1176 = vrot.lane.b32.xlu0 %v1010, 104
        %v1177 = vpop.permute.xlu0 %1176
        %v1179 = vsel %vm1011, %v1175, 0
        %v1182 = vsel %vm1011, %v1177, 0
        %1184 = vmatpush.bf16.xpose.msra.mxu0 0
        %1185 = vmatpush.bf16.xpose.msra.mxu0 0
        %1186 = vmatpush.bf16.xpose.msra.mxu0 0
        %1187 = vmatpush.bf16.xpose.msra.mxu0 0
        %1188 = vmatpush.bf16.xpose.msra.mxu0 0
        %1189 = vmatpush.bf16.xpose.msra.mxu0 0
        %1190 = vmatpush.bf16.xpose.msra.mxu0 0
        %1191 = vmatpush.bf16.xpose.msra.mxu0 %v1182
        %1192 = vmatmul.bf16.gmra.mxu0 %v1179
        %v1193 = vpop.f32.mrf.mxu0
        %v1194 = vadd.f32 0.0, %v1193
        %v1195 = vpop.f32.mrf.mxu0
        %1196 = vdwg.mxu0
        %v1197 = vmul.f32 %v1194, 0.35355338
        %v1198 = vsel %vm813, 1e-09, %v1197
        %v1199 = vsel %vm1033, %v1198, -inf
        %1200 = vmax.xlane.f32.xlu0 %v1199
        %v1201 = vpop.xlane.xlu0 %1200
        %v1202 = vsub.f32 %v1198, %v1201
        %v1203 = vmul.f32 %v1202, 1.442695
        %v1204 = vpow.pop %v1203
        %v1205 = vsel %vm1033, %v1204, 0.0
        %1206 = vadd.xlane.f32.xlu0 %v1205
        %v1207 = vpop.xlane.xlu0 %1206
        %v1208 = vrcp.pop %v1207
        %v1209 = vmul.f32 %v1204, %v1208
        %v1210 = vpack.c.bf16 %v1209, %v1209
        %v1213 = vsel %vm1033, %v1210, 0
        %1215 = vmatpush.bf16.msra.mxu0 0
        %1216 = vmatpush.bf16.msra.mxu0 0
        %1217 = vmatpush.bf16.msra.mxu0 0
        %1218 = vmatpush.bf16.msra.mxu0 0
        %1219 = vmatpush.bf16.msra.mxu0 0
        %1220 = vmatpush.bf16.msra.mxu0 0
        %1221 = vmatpush.bf16.msra.mxu0 0
        %1222 = vmatpush.bf16.msra.mxu0 %v1177
        %1223 = vmatmul.bf16.gmra.mxu0 %v1213
        %v1224 = vpop.f32.mrf.mxu0
        %v1225 = vadd.f32 0.0, %v1224
        %v1226 = vpop.f32.mrf.mxu0
        %1227 = vdwg.mxu0
        %1229 = vrot.lane.b32.xlu0 %v1117, 8
        %v1230 = vpop.permute.xlu0 %1229
        %1233 = vrot.lane.b32.xlu0 %v1171, 16
        %v1234 = vpop.permute.xlu0 %1233
        %1237 = vrot.lane.b32.xlu0 %v1225, 24
        %v1238 = vpop.permute.xlu0 %1237
        %v1240 = vsel %vm1011, %v1060, %v1230
        %v1241 = vsel %vm1033, %v1240, %v1234
        %vm1242 = vcmask 195584
        %v1243 = vsel %vm1242, %v1241, %v1238
        %v1244 = vld [vmem:[#allocation8] sm:$0xf]
        %v1245 = vld [vmem:[#allocation8 + $0x4] sm:$0xf]
        %v1246 = vld [vmem:[#allocation8 + $0x8] sm:$0xf]
        %v1247 = vld [vmem:[#allocation8 + $0xc] sm:$0xf]
        %v1248 = vpack.c.bf16 %v1243, %v1243
        %v1253 = vunpack.c.l.b16 %v1244
        %v1254 = vunpack.c.l.b16 %v1245
        %v1255 = vunpack.c.l.b16 %v1246
        %v1256 = vunpack.c.l.b16 %v1247
        %v1257 = vpack.c.b16 %v1254, %v1253
        %v1258 = vpack.c.b16 %v1256, %v1255
        %v1262 = vsel %vm816, %v1248, 0
        %1264 = vmatpush.bf16.msra.mxu0 0
        %1265 = vmatpush.bf16.msra.mxu0 0
        %1266 = vmatpush.bf16.msra.mxu0 0
        %1267 = vmatpush.bf16.msra.mxu0 0
        %1268 = vmatpush.bf16.msra.mxu0 0
        %1269 = vmatpush.bf16.msra.mxu0 0
        %1270 = vmatpush.bf16.msra.mxu0 %v1258
        %1271 = vmatpush.bf16.msra.mxu0 %v1257
        %1272 = vmatmul.bf16.gmra.mxu0 %v1262
        %v1273 = vpop.f32.mrf.mxu0
        %v1274 = vadd.f32 0.0, %v1273
        %v1275 = vpop.f32.mrf.mxu0
        %1276 = vdwg.mxu0
        %v1277 = vadd.f32 %v808, %v1274
        %v1278 = vsel %vm816, %v1277, 0.0
        %1279 = vadd.xlane.f32.xlu0 %v1278
        %v1280 = vpop.xlane.xlu0 %1279
        %v1281 = vmul.f32 %v1280, %v829
        %v1282 = vsub.f32 %v1277, %v1281
        %v1283 = vmul.f32 %v1282, %v1282
        %v1284 = vsel %vm816, %v1283, 0.0
        %1285 = vadd.xlane.f32.xlu0 %v1284
        %v1286 = vpop.xlane.xlu0 %1285
        %v1287 = vmul.f32 %v1286, 0.032258064
        %v1288 = vrsqrt.pop %v1287
        %v1289 = vmul.f32 %v1288, %v1287
        %v1290 = vmul.f32 %v1289, %v1288
        %v1291 = vmul.f32 0.5, %v1290
        %v1292 = vsub.f32 1.5, %v1291
        %v1293 = vmul.f32 %v1288, %v1292
        %v1294 = vmul.f32 %v1287, %v1293
        %vm1295 = vcmp.eq.f32.partialorder %v1287, inf
        %v1296 = vsel %vm1295, %v1287, %v1294
        %vm1297 = vcmp.eq.f32.partialorder %v1287, 0.0
        %v1298 = vand.u32 %v1287, 2147483648
        %v1299 = vsel %vm1297, %v1298, %v1296
        %v1300 = vadd.f32 %v1299, 1e-06
        %v1301 = vrcp.pop %v1300
        %v1302 = vmul.f32 %v1300, %v1301
        %v1303 = vsub.f32 1.0, %v1302
        %v1304 = vmul.f32 %v1301, %v1303
        %v1305 = vadd.f32 %v1301, %v1304
        %vm1306 = vweird.f32 %v1300
        %vm1307 = vweird.f32 %v1301
        %vm1308 = vmor %vm1306, %vm1307
        %v1309 = vsel %vm1308, %v1301, %v1305
        %v1310 = vand.u32 2147483647, %v1300
        %vm1311 = vcmp.eq.f32.partialorder %v1310, 8.507059e+37
        %v1312 = vand.u32 %v1300, 2147483648
        %v1313 = vor.u32 1.1754944e-38, %v1312
        %v1314 = vsel %vm1311, %v1313, %v1309
        %v1315 = vld [vmem:[%s15] sm:$0x1]
        %v1317 = vperm.slane %v1315, 0
        %v1319 = vmul.f32 %v1317, %v1282
        %v1320 = vmul.f32 %v1319, %v1314
        %v1321 = vld [vmem:[%s16] sm:$0x1]
        %v1323 = vperm.slane %v1321, 0
        %v1325 = vadd.f32 %v1320, %v1323
        %v1326 = vld [vmem:[#allocation10] sm:$0xf]
        %v1327 = vld [vmem:[#allocation10 + $0x4] sm:$0xf]
        %v1328 = vld [vmem:[#allocation10 + $0x8] sm:$0xf]
        %v1329 = vld [vmem:[#allocation10 + $0xc] sm:$0xf]
        %v1330 = vpack.c.bf16 %v1325, %v1325
        %v1335 = vunpack.c.l.b16 %v1326
        %v1336 = vunpack.c.l.b16 %v1327
        %v1337 = vunpack.c.l.b16 %v1328
        %v1338 = vunpack.c.l.b16 %v1329
        %v1339 = vpack.c.b16 %v1336, %v1335
        %v1340 = vpack.c.b16 %v1338, %v1337
        %v1344 = vsel %vm816, %v1330, 0
        %1346 = vmatpush.bf16.msra.mxu0 0
        %1347 = vmatpush.bf16.msra.mxu0 0
        %1348 = vmatpush.bf16.msra.mxu0 0
        %1349 = vmatpush.bf16.msra.mxu0 0
        %1350 = vmatpush.bf16.msra.mxu0 0
        %1351 = vmatpush.bf16.msra.mxu0 0
        %1352 = vmatpush.bf16.msra.mxu0 %v1340
        %1353 = vmatpush.bf16.msra.mxu0 %v1339
        %1354 = vmatmul.bf16.gmra.mxu0 %v1344
        %v1355 = vpop.f32.mrf.mxu0
        %v1356 = vadd.f32 0.0, %v1355
        %v1357 = vpop.f32.mrf.mxu0
        %1358 = vdwg.mxu0
        %v1359 = vpack.c.bf16 %v811, %v811
        %v1361 = vsel %vm816, %v1359, 0
        %1363 = vmatpush.bf16.msra.mxu0 0
        %1364 = vmatpush.bf16.msra.mxu0 0
        %1365 = vmatpush.bf16.msra.mxu0 0
        %1366 = vmatpush.bf16.msra.mxu0 0
        %1367 = vmatpush.bf16.msra.mxu0 0
        %1368 = vmatpush.bf16.msra.mxu0 0
        %1369 = vmatpush.bf16.msra.mxu0 %v1340
        %1370 = vmatpush.bf16.msra.mxu0 %v1339
        %1371 = vmatmul.bf16.gmra.mxu0 %v1361
        %v1372 = vpop.f32.mrf.mxu0
        %v1373 = vadd.f32 0.0, %v1372
        %v1374 = vpop.f32.mrf.mxu0
        %1375 = vdwg.mxu0
        %v1376 = vpack.c.bf16 %v1356, %v1356
        %v1377 = vpack.c.bf16 %v1373, %v1373
        %v1379 = vsel %vm1011, %v1376, 0
        %v1382 = vsel %vm1011, %v1377, 0
        %1384 = vmatpush.bf16.xpose.msra.mxu0 0
        %1385 = vmatpush.bf16.xpose.msra.mxu0 0
        %1386 = vmatpush.bf16.xpose.msra.mxu0 0
        %1387 = vmatpush.bf16.xpose.msra.mxu0 0
        %1388 = vmatpush.bf16.xpose.msra.mxu0 0
        %1389 = vmatpush.bf16.xpose.msra.mxu0 0
        %1390 = vmatpush.bf16.xpose.msra.mxu0 0
        %1391 = vmatpush.bf16.xpose.msra.mxu0 %v1382
        %1392 = vmatmul.bf16.gmra.mxu0 %v1379
        %v1393 = vpop.f32.mrf.mxu0
        %v1394 = vadd.f32 0.0, %v1393
        %v1395 = vpop.f32.mrf.mxu0
        %1396 = vdwg.mxu0
        %v1397 = vmul.f32 %v1394, 0.35355338
        %v1398 = vsel %vm815, 1e-09, %v1397
        %v1399 = vsel %vm1011, %v1398, -inf
        %1400 = vmax.xlane.f32.xlu0 %v1399
        %v1401 = vpop.xlane.xlu0 %1400
        %v1402 = vsub.f32 %v1398, %v1401
        %v1403 = vmul.f32 %v1402, 1.442695
        %v1404 = vpow.pop %v1403
        %v1405 = vsel %vm1011, %v1404, 0.0
        %1406 = vadd.xlane.f32.xlu0 %v1405
        %v1407 = vpop.xlane.xlu0 %1406
        %v1408 = vrcp.pop %v1407
        %v1409 = vmul.f32 %v1404, %v1408
        %v1410 = vpack.c.bf16 %v1409, %v1409
        %v1412 = vsel %vm1011, %v1410, 0
        %vm1414 = vcmask 1043456
        %v1415 = vsel %vm1414, %v1377, 0
        %1417 = vmatpush.bf16.msra.mxu0 0
        %1418 = vmatpush.bf16.msra.mxu0 0
        %1419 = vmatpush.bf16.msra.mxu0 0
        %1420 = vmatpush.bf16.msra.mxu0 0
        %1421 = vmatpush.bf16.msra.mxu0 0
        %1422 = vmatpush.bf16.msra.mxu0 0
        %1423 = vmatpush.bf16.msra.mxu0 0
        %1424 = vmatpush.bf16.msra.mxu0 %v1415
        %1425 = vmatmul.bf16.gmra.mxu0 %v1412
        %v1426 = vpop.f32.mrf.mxu0
        %v1427 = vadd.f32 0.0, %v1426
        %v1428 = vpop.f32.mrf.mxu0
        %1429 = vdwg.mxu0
        %v1431 = vunpack.c.l.b16 %v1376
        %v1432 = vpack.c.b16 %v1431, %v1431
        %1433 = vrot.lane.b32.xlu0 %v1432, 120
        %v1434 = vpop.permute.xlu0 %1433
        %v1436 = vunpack.c.l.b16 %v1377
        %v1437 = vpack.c.b16 %v1436, %v1436
        %1438 = vrot.lane.b32.xlu0 %v1437, 120
        %v1439 = vpop.permute.xlu0 %1438
        %v1441 = vsel %vm1011, %v1434, 0
        %v1444 = vsel %vm1011, %v1439, 0
        %1446 = vmatpush.bf16.xpose.msra.mxu0 0
        %1447 = vmatpush.bf16.xpose.msra.mxu0 0
        %1448 = vmatpush.bf16.xpose.msra.mxu0 0
        %1449 = vmatpush.bf16.xpose.msra.mxu0 0
        %1450 = vmatpush.bf16.xpose.msra.mxu0 0
        %1451 = vmatpush.bf16.xpose.msra.mxu0 0
        %1452 = vmatpush.bf16.xpose.msra.mxu0 0
        %1453 = vmatpush.bf16.xpose.msra.mxu0 %v1444
        %1454 = vmatmul.bf16.gmra.mxu0 %v1441
        %v1455 = vpop.f32.mrf.mxu0
        %v1456 = vadd.f32 0.0, %v1455
        %v1457 = vpop.f32.mrf.mxu0
        %1458 = vdwg.mxu0
        %v1459 = vmul.f32 %v1456, 0.35355338
        %v1460 = vsel %vm815, 1e-09, %v1459
        %v1461 = vsel %vm1011, %v1460, -inf
        %1462 = vmax.xlane.f32.xlu0 %v1461
        %v1463 = vpop.xlane.xlu0 %1462
        %v1464 = vsub.f32 %v1460, %v1463
        %v1465 = vmul.f32 %v1464, 1.442695
        %v1466 = vpow.pop %v1465
        %v1467 = vsel %vm1011, %v1466, 0.0
        %1468 = vadd.xlane.f32.xlu0 %v1467
        %v1469 = vpop.xlane.xlu0 %1468
        %v1470 = vrcp.pop %v1469
        %v1471 = vmul.f32 %v1466, %v1470
        %v1472 = vpack.c.bf16 %v1471, %v1471
        %v1474 = vsel %vm1011, %v1472, 0
        %v1476 = vsel %vm1414, %v1439, 0
        %1478 = vmatpush.bf16.msra.mxu0 0
        %1479 = vmatpush.bf16.msra.mxu0 0
        %1480 = vmatpush.bf16.msra.mxu0 0
        %1481 = vmatpush.bf16.msra.mxu0 0
        %1482 = vmatpush.bf16.msra.mxu0 0
        %1483 = vmatpush.bf16.msra.mxu0 0
        %1484 = vmatpush.bf16.msra.mxu0 0
        %1485 = vmatpush.bf16.msra.mxu0 %v1476
        %1486 = vmatmul.bf16.gmra.mxu0 %v1474
        %v1487 = vpop.f32.mrf.mxu0
        %v1488 = vadd.f32 0.0, %v1487
        %v1489 = vpop.f32.mrf.mxu0
        %1490 = vdwg.mxu0
        %1491 = vrot.lane.b32.xlu0 %v1432, 112
        %v1492 = vpop.permute.xlu0 %1491
        %1493 = vrot.lane.b32.xlu0 %v1437, 112
        %v1494 = vpop.permute.xlu0 %1493
        %v1496 = vsel %vm1011, %v1492, 0
        %v1499 = vsel %vm1011, %v1494, 0
        %1501 = vmatpush.bf16.xpose.msra.mxu0 0
        %1502 = vmatpush.bf16.xpose.msra.mxu0 0
        %1503 = vmatpush.bf16.xpose.msra.mxu0 0
        %1504 = vmatpush.bf16.xpose.msra.mxu0 0
        %1505 = vmatpush.bf16.xpose.msra.mxu0 0
        %1506 = vmatpush.bf16.xpose.msra.mxu0 0
        %1507 = vmatpush.bf16.xpose.msra.mxu0 0
        %1508 = vmatpush.bf16.xpose.msra.mxu0 %v1499
        %1509 = vmatmul.bf16.gmra.mxu0 %v1496
        %v1510 = vpop.f32.mrf.mxu0
        %v1511 = vadd.f32 0.0, %v1510
        %v1512 = vpop.f32.mrf.mxu0
        %1513 = vdwg.mxu0
        %v1514 = vmul.f32 %v1511, 0.35355338
        %v1515 = vsel %vm815, 1e-09, %v1514
        %v1516 = vsel %vm1011, %v1515, -inf
        %1517 = vmax.xlane.f32.xlu0 %v1516
        %v1518 = vpop.xlane.xlu0 %1517
        %v1519 = vsub.f32 %v1515, %v1518
        %v1520 = vmul.f32 %v1519, 1.442695
        %v1521 = vpow.pop %v1520
        %v1522 = vsel %vm1011, %v1521, 0.0
        %1523 = vadd.xlane.f32.xlu0 %v1522
        %v1524 = vpop.xlane.xlu0 %1523
        %v1525 = vrcp.pop %v1524
        %v1526 = vmul.f32 %v1521, %v1525
        %v1527 = vpack.c.bf16 %v1526, %v1526
        %v1529 = vsel %vm1011, %v1527, 0
        %v1531 = vsel %vm1414, %v1494, 0
        %1533 = vmatpush.bf16.msra.mxu0 0
        %1534 = vmatpush.bf16.msra.mxu0 0
        %1535 = vmatpush.bf16.msra.mxu0 0
        %1536 = vmatpush.bf16.msra.mxu0 0
        %1537 = vmatpush.bf16.msra.mxu0 0
        %1538 = vmatpush.bf16.msra.mxu0 0
        %1539 = vmatpush.bf16.msra.mxu0 0
        %1540 = vmatpush.bf16.msra.mxu0 %v1531
        %1541 = vmatmul.bf16.gmra.mxu0 %v1529
        %v1542 = vpop.f32.mrf.mxu0
        %v1543 = vadd.f32 0.0, %v1542
        %v1544 = vpop.f32.mrf.mxu0
        %1545 = vdwg.mxu0
        %1546 = vrot.lane.b32.xlu0 %v1432, 104
        %v1547 = vpop.permute.xlu0 %1546
        %1548 = vrot.lane.b32.xlu0 %v1437, 104
        %v1549 = vpop.permute.xlu0 %1548
        %v1551 = vsel %vm1011, %v1547, 0
        %v1554 = vsel %vm1011, %v1549, 0
        %1556 = vmatpush.bf16.xpose.msra.mxu0 0
        %1557 = vmatpush.bf16.xpose.msra.mxu0 0
        %1558 = vmatpush.bf16.xpose.msra.mxu0 0
        %1559 = vmatpush.bf16.xpose.msra.mxu0 0
        %1560 = vmatpush.bf16.xpose.msra.mxu0 0
        %1561 = vmatpush.bf16.xpose.msra.mxu0 0
        %1562 = vmatpush.bf16.xpose.msra.mxu0 0
        %1563 = vmatpush.bf16.xpose.msra.mxu0 %v1554
        %1564 = vmatmul.bf16.gmra.mxu0 %v1551
        %v1565 = vpop.f32.mrf.mxu0
        %v1566 = vadd.f32 0.0, %v1565
        %v1567 = vpop.f32.mrf.mxu0
        %1568 = vdwg.mxu0
        %v1569 = vmul.f32 %v1566, 0.35355338
        %v1570 = vsel %vm815, 1e-09, %v1569
        %v1571 = vsel %vm1011, %v1570, -inf
        %1572 = vmax.xlane.f32.xlu0 %v1571
        %v1573 = vpop.xlane.xlu0 %1572
        %v1574 = vsub.f32 %v1570, %v1573
        %v1575 = vmul.f32 %v1574, 1.442695
        %v1576 = vpow.pop %v1575
        %v1577 = vsel %vm1011, %v1576, 0.0
        %1578 = vadd.xlane.f32.xlu0 %v1577
        %v1579 = vpop.xlane.xlu0 %1578
        %v1580 = vrcp.pop %v1579
        %v1581 = vmul.f32 %v1576, %v1580
        %v1582 = vpack.c.bf16 %v1581, %v1581
        %v1584 = vsel %vm1011, %v1582, 0
        %v1586 = vsel %vm1414, %v1549, 0
        %1588 = vmatpush.bf16.msra.mxu0 0
        %1589 = vmatpush.bf16.msra.mxu0 0
        %1590 = vmatpush.bf16.msra.mxu0 0
        %1591 = vmatpush.bf16.msra.mxu0 0
        %1592 = vmatpush.bf16.msra.mxu0 0
        %1593 = vmatpush.bf16.msra.mxu0 0
        %1594 = vmatpush.bf16.msra.mxu0 0
        %1595 = vmatpush.bf16.msra.mxu0 %v1586
        %1596 = vmatmul.bf16.gmra.mxu0 %v1584
        %v1597 = vpop.f32.mrf.mxu0
        %v1598 = vadd.f32 0.0, %v1597
        %v1599 = vpop.f32.mrf.mxu0
        %1600 = vdwg.mxu0
        %1602 = vrot.lane.b32.xlu0 %v1488, 8
        %v1603 = vpop.permute.xlu0 %1602
        %1606 = vrot.lane.b32.xlu0 %v1543, 16
        %v1607 = vpop.permute.xlu0 %1606
        %1610 = vrot.lane.b32.xlu0 %v1598, 24
        %v1611 = vpop.permute.xlu0 %1610
        %v1613 = vsel %vm1011, %v1427, %v1603
        %v1614 = vsel %vm1033, %v1613, %v1607
        %v1615 = vsel %vm1242, %v1614, %v1611
        %v1616 = vld [vmem:[#allocation11] sm:$0xf]
        %v1617 = vld [vmem:[#allocation11 + $0x4] sm:$0xf]
        %v1618 = vld [vmem:[#allocation11 + $0x8] sm:$0xf]
        %v1619 = vld [vmem:[#allocation11 + $0xc] sm:$0xf]
        %v1620 = vpack.c.bf16 %v1615, %v1615
        %v1625 = vunpack.c.l.b16 %v1616
        %v1626 = vunpack.c.l.b16 %v1617
        %v1627 = vunpack.c.l.b16 %v1618
        %v1628 = vunpack.c.l.b16 %v1619
        %v1629 = vpack.c.b16 %v1626, %v1625
        %v1630 = vpack.c.b16 %v1628, %v1627
        %v1634 = vsel %vm816, %v1620, 0
        %1636 = vmatpush.bf16.msra.mxu0 0
        %1637 = vmatpush.bf16.msra.mxu0 0
        %1638 = vmatpush.bf16.msra.mxu0 0
        %1639 = vmatpush.bf16.msra.mxu0 0
        %1640 = vmatpush.bf16.msra.mxu0 0
        %1641 = vmatpush.bf16.msra.mxu0 0
        %1642 = vmatpush.bf16.msra.mxu0 %v1630
        %1643 = vmatpush.bf16.msra.mxu0 %v1629
        %1644 = vmatmul.bf16.gmra.mxu0 %v1634
        %v1645 = vpop.f32.mrf.mxu0
        %v1646 = vadd.f32 0.0, %v1645
        %v1647 = vpop.f32.mrf.mxu0
        %1648 = vdwg.mxu0
        %v1649 = vadd.f32 %v1277, %v1646
        %v1650 = vsel %vm816, %v1649, 0.0
        %1651 = vadd.xlane.f32.xlu0 %v1650
        %v1652 = vpop.xlane.xlu0 %1651
        %v1653 = vmul.f32 %v1652, %v829
        %v1654 = vsub.f32 %v1649, %v1653
        %v1655 = vmul.f32 %v1654, %v1654
        %v1656 = vsel %vm816, %v1655, 0.0
        %1657 = vadd.xlane.f32.xlu0 %v1656
        %v1658 = vpop.xlane.xlu0 %1657
        %v1659 = vmul.f32 %v1658, 0.032258064
        %v1660 = vrsqrt.pop %v1659
        %v1661 = vmul.f32 %v1660, %v1659
        %v1662 = vmul.f32 %v1661, %v1660
        %v1663 = vmul.f32 0.5, %v1662
        %v1664 = vsub.f32 1.5, %v1663
        %v1665 = vmul.f32 %v1660, %v1664
        %v1666 = vmul.f32 %v1659, %v1665
        %vm1667 = vcmp.eq.f32.partialorder %v1659, inf
        %v1668 = vsel %vm1667, %v1659, %v1666
        %vm1669 = vcmp.eq.f32.partialorder %v1659, 0.0
        %v1670 = vand.u32 %v1659, 2147483648
        %v1671 = vsel %vm1669, %v1670, %v1668
        %v1672 = vadd.f32 %v1671, 1e-06
        %v1673 = vrcp.pop %v1672
        %v1674 = vmul.f32 %v1672, %v1673
        %v1675 = vsub.f32 1.0, %v1674
        %v1676 = vmul.f32 %v1673, %v1675
        %v1677 = vadd.f32 %v1673, %v1676
        %vm1678 = vweird.f32 %v1672
        %vm1679 = vweird.f32 %v1673
        %vm1680 = vmor %vm1678, %vm1679
        %v1681 = vsel %vm1680, %v1673, %v1677
        %v1682 = vand.u32 2147483647, %v1672
        %vm1683 = vcmp.eq.f32.partialorder %v1682, 8.507059e+37
        %v1684 = vand.u32 %v1672, 2147483648
        %v1685 = vor.u32 1.1754944e-38, %v1684
        %v1686 = vsel %vm1683, %v1685, %v1681
        %v1687 = vld [vmem:[%s17] sm:$0x1]
        %v1689 = vperm.slane %v1687, 0
        %v1691 = vmul.f32 %v1689, %v1654
        %v1692 = vmul.f32 %v1691, %v1686
        %v1693 = vld [vmem:[%s18] sm:$0x1]
        %v1695 = vperm.slane %v1693, 0
        %v1697 = vadd.f32 %v1692, %v1695
        %v1698 = vld [vmem:[%s9] sm:$0xf]
        %v1699 = vld [vmem:[%s9 + $0x4] sm:$0xf]
        %v1700 = vld [vmem:[%s9 + $0x8] sm:$0xf]
        %v1701 = vld [vmem:[%s9 + $0xc] sm:$0xf]
        %v1702 = vpack.c.bf16 %v1697, %v1697
        %v1703 = vld [vmem:[%s10] sm:$0x1]
        %v1705 = vperm.slane %v1703, 0
        %v1711 = vunpack.c.l.b16 %v1698
        %v1712 = vunpack.c.l.b16 %v1699
        %v1713 = vunpack.c.l.b16 %v1700
        %v1714 = vunpack.c.l.b16 %v1701
        %v1715 = vpack.c.b16 %v1712, %v1711
        %v1716 = vpack.c.b16 %v1714, %v1713
        %v1720 = vsel %vm816, %v1702, 0
        %1722 = vmatpush.bf16.msra.mxu0 0
        %1723 = vmatpush.bf16.msra.mxu0 0
        %1724 = vmatpush.bf16.msra.mxu0 0
        %1725 = vmatpush.bf16.msra.mxu0 0
        %1726 = vmatpush.bf16.msra.mxu0 0
        %1727 = vmatpush.bf16.msra.mxu0 0
        %1728 = vmatpush.bf16.msra.mxu0 %v1716
        %1729 = vmatpush.bf16.msra.mxu0 %v1715
        %1730 = vmatmul.bf16.gmra.mxu0 %v1720
        %v1731 = vpop.f32.mrf.mxu0
        %v1732 = vadd.f32 %v1705, %v1731
        %v1733 = vpop.f32.mrf.mxu0
        %1734 = vdwg.mxu0
        %v1735 = vmax.f32 %v1732, 0.0
        %v1736 = vld [vmem:[%s11] sm:$0xf]
        %v1737 = vld [vmem:[%s11 + $0x4] sm:$0xf]
        %v1738 = vld [vmem:[%s11 + $0x8] sm:$0xf]
        %v1739 = vld [vmem:[%s11 + $0xc] sm:$0xf]
        %v1740 = vld [vmem:[%s11 + $0x10] sm:$0xf]
        %v1741 = vld [vmem:[%s11 + $0x14] sm:$0xf]
        %v1742 = vld [vmem:[%s11 + $0x18] sm:$0xf]
        %v1743 = vld [vmem:[%s11 + $0x1c] sm:$0xf]
        %v1744 = vpack.c.bf16 %v1735, %v1735
        %v1753 = vunpack.c.l.b16 %v1736
        %v1754 = vunpack.c.l.b16 %v1737
        %v1755 = vunpack.c.l.b16 %v1738
        %v1756 = vunpack.c.l.b16 %v1739
        %v1757 = vunpack.c.l.b16 %v1740
        %v1758 = vunpack.c.l.b16 %v1741
        %v1759 = vunpack.c.l.b16 %v1742
        %v1760 = vunpack.c.l.b16 %v1743
        %v1761 = vpack.c.b16 %v1754, %v1753
        %v1762 = vpack.c.b16 %v1756, %v1755
        %v1763 = vpack.c.b16 %v1758, %v1757
        %v1764 = vpack.c.b16 %v1760, %v1759
        %vm1769 = vcmask 523264
        %v1771 = vsel %vm1769, %v1744, 0
        %1773 = vmatpush.bf16.msra.mxu0 0
        %1774 = vmatpush.bf16.msra.mxu0 0
        %1775 = vmatpush.bf16.msra.mxu0 0
        %1776 = vmatpush.bf16.msra.mxu0 0
        %1777 = vmatpush.bf16.msra.mxu0 %v1764
        %1778 = vmatpush.bf16.msra.mxu0 %v1763
        %1779 = vmatpush.bf16.msra.mxu0 %v1762
        %1780 = vmatpush.bf16.msra.mxu0 %v1761
        %1781 = vmatmul.bf16.gmra.mxu0 %v1771
        %v1782 = vpop.f32.mrf.mxu0
        %v1783 = vadd.f32 0.0, %v1782
        %v1784 = vpop.f32.mrf.mxu0
        %1785 = vdwg.mxu0
        %v1786 = vadd.f32 %v1649, %v1783
        %v1787 = vld [vmem:[%s12] sm:$0x1]
        %v1789 = vperm.slane %v1787, 0
        %v1791 = vadd.f32 %v1786, %v1789
        %1792 = vst.msk [vmem:[%s790] sm:$0xff] %vm816, %v1791
        %s1793 = sand.u32 %s489, 1
        %s1794 = scalar_lea.sflag [#allocation4], %s1793
        %s1795 = sand.u32 %s489, 1
        %s1796 = smul.addr %s1795, 8
        %s1797 = scalar_lea.vmem [#allocation13], %s1796
        // Predicated region
        $region121: #{tpu_custom_call.1} parent=95 // pred_check
          %p1798 = pneg %p499
        $region122: #{tpu_custom_call.1} parent=95 // pred_check_branch
          %1800 = sbr.rel (%p1798) target = $region124
        $region123: #{tpu_custom_call.1} parent=95 // pred_region
          %1802 = vsyncadd %s1794, 0
          %s1803 = smul.addr %s45, 2
          %s1804 = sadd.s32 %s46, %s1803
          %s1805 = smul.addr %s1804, 8
          %s1806 = scalar_lea.hbm %s19, %s1805
          %s1808 = sshll.u32 %s1797, 4
          %s1809 = int_to_ptr.vmem [resolvable:$true] %s1808
          %s1810 = sshll.u32 %s1806, 4
          %s1811 = int_to_ptr.hbm [resolvable:$true] %s1810
          %1813 = dma.vmem_to_hbm [thread:$0]  %s1809, 128, %s1811, %s1794
        $region124: #{tpu_custom_call.1} parent=95 // pred_fallthru
          _
      $region96: #{tpu_custom_call.1} parent=5 // pred_fallthru
        _
      %p1814 = scmp.le.s32.totalorder 2, %s36
      // Predicated region
      $region125: #{tpu_custom_call.1} parent=5 // pred_check
        %p1815 = pneg %p1814
      $region126: #{tpu_custom_call.1} parent=5 // pred_check_branch
        %1817 = sbr.rel (%p1815) target = $region128
      $region127: #{tpu_custom_call.1} parent=5 // pred_region
        %s1818 = ssub.s32 %s36, 2
        // Predicated region
        $region129: #{tpu_custom_call.1} parent=127 // pred_check
          %p1819 = pneg %p505
        $region130: #{tpu_custom_call.1} parent=127 // pred_check_branch
          %1821 = sbr.rel (%p1819) target = $region132
        $region131: #{tpu_custom_call.1} parent=127 // pred_region
          %s1822 = sand.u32 %s490, 1
          %s1823 = scalar_lea.sflag [#allocation4], %s1822
          %s1824 = sand.u32 %s490, 1
          %s1825 = smul.addr %s1824, 8
          %s1826 = scalar_lea.vmem [#allocation13], %s1825
          %1828 = dma.done %s1823, 128
        $region132: #{tpu_custom_call.1} parent=127 // pred_fallthru
          _
      $region128: #{tpu_custom_call.1} parent=5 // pred_fallthru
        _
    $region6: #{tpu_custom_call.1} parent=1 // loop_footer
      %s40 = sadd.s32 1, %s36
    $region7: #{tpu_custom_call.1} parent=1 // loop_footer_branch
      %35 = sbr.rel target = $region3
    $region8: #{tpu_custom_call.1} parent=1 // loop_exit
      _
    %1829 = vsyncpa [#allocation3], 1
    %s1830 = scalar_lea.sflag [#allocation3], 1
    %1831 = vsyncpa %s1830, 1
    %1832 = vsyncpa [#allocation6], 1
    %s1833 = scalar_lea.sflag [#allocation6], 1
    %1834 = vsyncpa %s1833, 1
    %1835 = vsyncpa [#allocation9], 1
    %1836 = vsyncpa [#allocation12], 1
    %1837 = vsyncpa [#allocation4], 1
    %s1838 = scalar_lea.sflag [#allocation4], 1
    %1839 = vsyncpa %s1838, 1

// kernel: tpu_custom_call.1
$region0: #{tpu_custom_call.1}
  #allocation0 [shape = 'u32[]', space=smem, size = 0x4, offset = 0x4, fixed_abs, tag = 'smem constant byte address 0x4 - core index']
  #allocation1 [shape = 'u32[72,128]{1,0:T(1,128)}', space=vmem, size = 0x9000, scoped, tag = 'internal scratch']
  %s0 = inlined_call_operand.vmem [shape: f32[2,16,32], index: 0, kind: input, shape index: {}]
  %s1 = inlined_call_operand.hbm [shape: f32[2,16,32], index: 1, kind: input, shape index: {}]
  %s2 = inlined_call_operand.vmem [shape: f32[2,8,32], index: 2, kind: input, shape index: {}]
  %s3 = inlined_call_operand.hbm [shape: f32[16,16], index: 3, kind: input, shape index: {}]
  %s4 = inlined_call_operand.vmem [shape: f32[16,8], index: 4, kind: input, shape index: {}]
  %s5 = inlined_call_operand.hbm [shape: bf16[32,32], index: 5, kind: input, shape index: {}]
  %s6 = inlined_call_operand.hbm [shape: bf16[32,32], index: 6, kind: input, shape index: {}]
  %s7 = inlined_call_operand.hbm [shape: bf16[32,32], index: 7, kind: input, shape index: {}]
  %s8 = inlined_call_operand.hbm [shape: bf16[32,32], index: 8, kind: input, shape index: {}]
  %s9 = inlined_call_operand.vmem [shape: bf16[32,64], index: 9, kind: input, shape index: {}]
  %s10 = inlined_call_operand.vmem [shape: f32[1,64], index: 10, kind: input, shape index: {}]
  %s11 = inlined_call_operand.vmem [shape: bf16[64,32], index: 11, kind: input, shape index: {}]
  %s12 = inlined_call_operand.vmem [shape: f32[1,32], index: 12, kind: input, shape index: {}]
  %s13 = inlined_call_operand.vmem [shape: f32[1,32], index: 13, kind: input, shape index: {}]
  %s14 = inlined_call_operand.vmem [shape: f32[1,32], index: 14, kind: input, shape index: {}]
  %s15 = inlined_call_operand.vmem [shape: f32[1,32], index: 15, kind: input, shape index: {}]
  %s16 = inlined_call_operand.vmem [shape: f32[1,32], index: 16, kind: input, shape index: {}]
  %s17 = inlined_call_operand.vmem [shape: f32[1,32], index: 17, kind: input, shape index: {}]
  %s18 = inlined_call_operand.vmem [shape: f32[1,32], index: 18, kind: input, shape index: {}]
  %s19 = inlined_call_operand.hbm [shape: f32[2,16,32], index: 19, kind: output, shape index: {}]
  %s20 = sld [smem:[#allocation0]]
  $region133: #{tpu_custom_call.1} parent=0
    _
  %s22 = ssub.s32 1, %s20
  %s23 = scalar_select 0, %s22, %s20
  $region1: #{tpu_custom_call.1} parent=0
    #allocation2 [shape = 'u8[16384]{0}', space=vmem, size = 0x4000, scoped, tag = 'input window, operand 1']
    #allocation3 [shape = 's32[2]{0}', space=sflag, size = 0x8, scoped, tag = 'scoped memory for tpu_custom_call.1']
    #allocation4 [shape = 's32[2]{0}', space=sflag, size = 0x8, scoped, tag = 'scoped memory for tpu_custom_call.1']
    #allocation5 [shape = 'u8[8192]{0}', space=vmem, size = 0x2000, scoped, tag = 'input window, operand 3']
    #allocation6 [shape = 's32[2]{0}', space=sflag, size = 0x8, scoped, tag = 'scoped memory for tpu_custom_call.1']
    #allocation7 [shape = 'u8[8192]{0}', space=vmem, size = 0x2000, scoped, tag = 'input window, operand 5, single buffered']
    #allocation8 [shape = 'u8[8192]{0}', space=vmem, size = 0x2000, scoped, tag = 'input window, operand 6, single buffered']
    #allocation9 [shape = 's32[1]{0}', space=sflag, size = 0x4, scoped, tag = 'scoped memory for tpu_custom_call.1']
    #allocation10 [shape = 'u8[8192]{0}', space=vmem, size = 0x2000, scoped, tag = 'input window, operand 7, single buffered']
    #allocation11 [shape = 'u8[8192]{0}', space=vmem, size = 0x2000, scoped, tag = 'input window, operand 8, single buffered']
    #allocation12 [shape = 's32[1]{0}', space=sflag, size = 0x4, scoped, tag = 'scoped memory for tpu_custom_call.1']
    #allocation13 [shape = 'u8[8192]{0}', space=vmem, size = 0x2000, scoped, tag = 'output window, operand 0']
    %24 = vsyncpa [#allocation3], 0
    %s25 = scalar_lea.sflag [#allocation3], 1
    %26 = vsyncpa %s25, 0
    %27 = vsyncpa [#allocation6], 0
    %s28 = scalar_lea.sflag [#allocation6], 1
    %29 = vsyncpa %s28, 0
    %30 = vsyncpa [#allocation9], 0
    %31 = vsyncpa [#allocation12], 0
    %32 = vsyncpa [#allocation4], 0
    %s33 = scalar_lea.sflag [#allocation4], 1
    %34 = vsyncpa %s33, 0
    loop: start=0, step=1, limit=6
    $region2: #{tpu_custom_call.1} parent=1 // loop_pre_header
      _
    $region3: #{tpu_custom_call.1} parent=1 // loop_header
      %s36 = sphi 0, %s40
      %p37 = scmp.ge.s32.totalorder %s36, 6
      %s43 = sphi 0, %s55
      %s44 = sphi 0, %s51
      %s45 = sphi 0, %s43
      %s46 = sphi 0, %s44
      %s47 = sphi 0, %s45
      %s48 = sphi 0, %s46
      %s60 = sphi 0, %s62
      %s63 = sphi 0, %s60
      %s64 = sphi 0, %s63
      %s80 = sphi 0, %s64
      %s86 = sphi 0, %s88
      %s89 = sphi 0, %s86
      %s90 = sphi 0, %s89
      %s106 = sphi 0, %s90
      %s112 = sphi 0, %s114
      %s115 = sphi 0, %s112
      %s116 = sphi 0, %s115
      %s132 = sphi 0, %s116
      %s138 = sphi 0, %s140
      %s141 = sphi 0, %s138
      %s142 = sphi 0, %s141
      %s158 = sphi 0, %s142
      %s164 = sphi 0, %s166
      %s167 = sphi 0, %s164
      %s168 = sphi 0, %s167
      %s184 = sphi 0, %s168
      %s188 = sphi 0, %s188
      %s190 = sphi 0, %s188
      %s191 = sphi 0, %s190
      %s205 = sphi 0, %s191
      %s209 = sphi 0, %s209
      %s211 = sphi 0, %s209
      %s212 = sphi 0, %s211
      %s226 = sphi 0, %s212
      %s230 = sphi 0, %s230
      %s232 = sphi 0, %s230
      %s233 = sphi 0, %s232
      %s247 = sphi 0, %s233
      %s251 = sphi 0, %s251
      %s253 = sphi 0, %s251
      %s254 = sphi 0, %s253
      %s268 = sphi 0, %s254
      %s272 = sphi 0, %s272
      %s274 = sphi 0, %s272
      %s275 = sphi 0, %s274
      %s289 = sphi 0, %s275
      %s293 = sphi 0, %s293
      %s295 = sphi 0, %s293
      %s296 = sphi 0, %s295
      %s310 = sphi 0, %s296
      %s314 = sphi 0, %s314
      %s316 = sphi 0, %s314
      %s317 = sphi 0, %s316
      %s331 = sphi 0, %s317
      %s335 = sphi 0, %s335
      %s337 = sphi 0, %s335
      %s338 = sphi 0, %s337
      %s352 = sphi 0, %s338
      %s356 = sphi 0, %s356
      %s358 = sphi 0, %s356
      %s359 = sphi 0, %s358
      %s373 = sphi 0, %s359
      %s377 = sphi 0, %s377
      %s379 = sphi 0, %s377
      %s380 = sphi 0, %s379
      %s394 = sphi 0, %s380
      %s398 = sphi 0, %s398
      %s400 = sphi 0, %s398
      %s401 = sphi 0, %s400
      %s415 = sphi 0, %s401
      %s419 = sphi 0, %s419
      %s421 = sphi 0, %s419
      %s422 = sphi 0, %s421
      %s436 = sphi 0, %s422
      %s440 = sphi 0, %s440
      %s442 = sphi 0, %s440
      %s443 = sphi 0, %s442
      %s457 = sphi 0, %s443
      %s461 = sphi 0, %s461
      %s463 = sphi 0, %s461
      %s464 = sphi 0, %s463
      %s478 = sphi 0, %s464
      %s486 = sphi 0, %s488
      %s489 = sphi 0, %s486
      %s490 = sphi 0, %s489
      %s506 = sphi 0, %s490
    $region4: #{tpu_custom_call.1} parent=1 // loop_header_branch
      %39 = sbr.rel (%p37) target = $region8
    $region5: #{tpu_custom_call.1} parent=1 // loop_body
      %s41 = ssub.s32 %s36, 1
      %s42 = ssub.s32 %s36, 2
      %s49 = sadd.s32 1, %s44
      %p50 = scmp.ge.s32.totalorder %s49, 2
      %s51 = scalar_select %p50, 0, %s49
      %s52 = sadd.s32 1, %s43
      %s53 = scalar_select %p50, %s52, %s43
      %p54 = scmp.ge.s32.totalorder %s53, 2
      %s55 = scalar_select %p54, 0, %s53
      %s56 = ssub.s32 %s43, %s55
      %s57 = ssub.s32 %s44, %s51
      %s58 = sor.u32 %s56, %s57
      %p59 = scmp.eq.s32.totalorder %s58, 0
      %s61 = sadd.s32 %s60, 1
      %s62 = scalar_select %p59, %s60, %s61
      %p65 = pneg %p59
      %p66 = scmp.eq.s32.totalorder %s36, 3
      %p67 = por %p65, %p66
      %p68 = scmp.ne.s32.totalorder %s60, %s63
      %p69 = scmp.eq.s32.totalorder %s36, 0
      %p70 = por %p68, %p69
      %p71 = scmp.ne.s32.totalorder %s60, %s63
      %p72 = scmp.eq.s32.totalorder %s41, 3
      %p73 = por %p71, %p72
      %p74 = scmp.ne.s32.totalorder %s63, %s64
      %p75 = scmp.eq.s32.totalorder %s41, 0
      %p76 = por %p74, %p75
      %p77 = scmp.ne.s32.totalorder %s63, %s64
      %p78 = scmp.eq.s32.totalorder %s42, 3
      %p79 = por %p77, %p78
      %p81 = scmp.ne.s32.totalorder %s64, %s80
      %p82 = scmp.eq.s32.totalorder %s42, 0
      %p83 = por %p81, %p82
      %s84 = ssub.s32 %s43, %s55
      %p85 = scmp.eq.s32.totalorder %s84, 0
      %s87 = sadd.s32 %s86, 1
      %s88 = scalar_select %p85, %s86, %s87
      %p91 = pneg %p85
      %p92 = scmp.eq.s32.totalorder %s36, 3
      %p93 = por %p91, %p92
      %p94 = scmp.ne.s32.totalorder %s86, %s89
      %p95 = scmp.eq.s32.totalorder %s36, 0
      %p96 = por %p94, %p95
      %p97 = scmp.ne.s32.totalorder %s86, %s89
      %p98 = scmp.eq.s32.totalorder %s41, 3
      %p99 = por %p97, %p98
      %p100 = scmp.ne.s32.totalorder %s89, %s90
      %p101 = scmp.eq.s32.totalorder %s41, 0
      %p102 = por %p100, %p101
      %p103 = scmp.ne.s32.totalorder %s89, %s90
      %p104 = scmp.eq.s32.totalorder %s42, 3
      %p105 = por %p103, %p104
      %p107 = scmp.ne.s32.totalorder %s90, %s106
      %p108 = scmp.eq.s32.totalorder %s42, 0
      %p109 = por %p107, %p108
      %s110 = ssub.s32 %s43, %s55
      %p111 = scmp.eq.s32.totalorder %s110, 0
      %s113 = sadd.s32 %s112, 1
      %s114 = scalar_select %p111, %s112, %s113
      %p117 = pneg %p111
      %p118 = scmp.eq.s32.totalorder %s36, 3
      %p119 = por %p117, %p118
      %p120 = scmp.ne.s32.totalorder %s112, %s115
      %p121 = scmp.eq.s32.totalorder %s36, 0
      %p122 = por %p120, %p121
      %p123 = scmp.ne.s32.totalorder %s112, %s115
      %p124 = scmp.eq.s32.totalorder %s41, 3
      %p125 = por %p123, %p124
      %p126 = scmp.ne.s32.totalorder %s115, %s116
      %p127 = scmp.eq.s32.totalorder %s41, 0
      %p128 = por %p126, %p127
      %p129 = scmp.ne.s32.totalorder %s115, %s116
      %p130 = scmp.eq.s32.totalorder %s42, 3
      %p131 = por %p129, %p130
      %p133 = scmp.ne.s32.totalorder %s116, %s132
      %p134 = scmp.eq.s32.totalorder %s42, 0
      %p135 = por %p133, %p134
      %s136 = ssub.s32 %s44, %s51
      %p137 = scmp.eq.s32.totalorder %s136, 0
      %s139 = sadd.s32 %s138, 1
      %s140 = scalar_select %p137, %s138, %s139
      %p143 = pneg %p137
      %p144 = scmp.eq.s32.totalorder %s36, 3
      %p145 = por %p143, %p144
      %p146 = scmp.ne.s32.totalorder %s138, %s141
      %p147 = scmp.eq.s32.totalorder %s36, 0
      %p148 = por %p146, %p147
      %p149 = scmp.ne.s32.totalorder %s138, %s141
      %p150 = scmp.eq.s32.totalorder %s41, 3
      %p151 = por %p149, %p150
      %p152 = scmp.ne.s32.totalorder %s141, %s142
      %p153 = scmp.eq.s32.totalorder %s41, 0
      %p154 = por %p152, %p153
      %p155 = scmp.ne.s32.totalorder %s141, %s142
      %p156 = scmp.eq.s32.totalorder %s42, 3
      %p157 = por %p155, %p156
      %p159 = scmp.ne.s32.totalorder %s142, %s158
      %p160 = scmp.eq.s32.totalorder %s42, 0
      %p161 = por %p159, %p160
      %s162 = ssub.s32 %s44, %s51
      %p163 = scmp.eq.s32.totalorder %s162, 0
      %s165 = sadd.s32 %s164, 1
      %s166 = scalar_select %p163, %s164, %s165
      %p169 = pneg %p163
      %p170 = scmp.eq.s32.totalorder %s36, 3
      %p171 = por %p169, %p170
      %p172 = scmp.ne.s32.totalorder %s164, %s167
      %p173 = scmp.eq.s32.totalorder %s36, 0
      %p174 = por %p172, %p173
      %p175 = scmp.ne.s32.totalorder %s164, %s167
      %p176 = scmp.eq.s32.totalorder %s41, 3
      %p177 = por %p175, %p176
      %p178 = scmp.ne.s32.totalorder %s167, %s168
      %p179 = scmp.eq.s32.totalorder %s41, 0
      %p180 = por %p178, %p179
      %p181 = scmp.ne.s32.totalorder %s167, %s168
      %p182 = scmp.eq.s32.totalorder %s42, 3
      %p183 = por %p181, %p182
      %p185 = scmp.ne.s32.totalorder %s168, %s184
      %p186 = scmp.eq.s32.totalorder %s42, 0
      %p187 = por %p185, %p186
      %s189 = sadd.s32 %s188, 1
      %p192 = scmp.eq.s32.totalorder %s36, 3
      %p193 = scmp.ne.s32.totalorder %s188, %s190
      %p194 = scmp.eq.s32.totalorder %s36, 0
      %p195 = por %p193, %p194
      %p196 = scmp.ne.s32.totalorder %s188, %s190
      %p197 = scmp.eq.s32.totalorder %s41, 3
      %p198 = por %p196, %p197
      %p199 = scmp.ne.s32.totalorder %s190, %s191
      %p200 = scmp.eq.s32.totalorder %s41, 0
      %p201 = por %p199, %p200
      %p202 = scmp.ne.s32.totalorder %s190, %s191
      %p203 = scmp.eq.s32.totalorder %s42, 3
      %p204 = por %p202, %p203
      %p206 = scmp.ne.s32.totalorder %s191, %s205
      %p207 = scmp.eq.s32.totalorder %s42, 0
      %p208 = por %p206, %p207
      %s210 = sadd.s32 %s209, 1
      %p213 = scmp.eq.s32.totalorder %s36, 3
      %p214 = scmp.ne.s32.totalorder %s209, %s211
      %p215 = scmp.eq.s32.totalorder %s36, 0
      %p216 = por %p214, %p215
      %p217 = scmp.ne.s32.totalorder %s209, %s211
      %p218 = scmp.eq.s32.totalorder %s41, 3
      %p219 = por %p217, %p218
      %p220 = scmp.ne.s32.totalorder %s211, %s212
      %p221 = scmp.eq.s32.totalorder %s41, 0
      %p222 = por %p220, %p221
      %p223 = scmp.ne.s32.totalorder %s211, %s212
      %p224 = scmp.eq.s32.totalorder %s42, 3
      %p225 = por %p223, %p224
      %p227 = scmp.ne.s32.totalorder %s212, %s226
      %p228 = scmp.eq.s32.totalorder %s42, 0
      %p229 = por %p227, %p228
      %s231 = sadd.s32 %s230, 1
      %p234 = scmp.eq.s32.totalorder %s36, 3
      %p235 = scmp.ne.s32.totalorder %s230, %s232
      %p236 = scmp.eq.s32.totalorder %s36, 0
      %p237 = por %p235, %p236
      %p238 = scmp.ne.s32.totalorder %s230, %s232
      %p239 = scmp.eq.s32.totalorder %s41, 3
      %p240 = por %p238, %p239
      %p241 = scmp.ne.s32.totalorder %s232, %s233
      %p242 = scmp.eq.s32.totalorder %s41, 0
      %p243 = por %p241, %p242
      %p244 = scmp.ne.s32.totalorder %s232, %s233
      %p245 = scmp.eq.s32.totalorder %s42, 3
      %p246 = por %p244, %p245
      %p248 = scmp.ne.s32.totalorder %s233, %s247
      %p249 = scmp.eq.s32.totalorder %s42, 0
      %p250 = por %p248, %p249
      %s252 = sadd.s32 %s251, 1
      %p255 = scmp.eq.s32.totalorder %s36, 3
      %p256 = scmp.ne.s32.totalorder %s251, %s253
      %p257 = scmp.eq.s32.totalorder %s36, 0
      %p258 = por %p256, %p257
      %p259 = scmp.ne.s32.totalorder %s251, %s253
      %p260 = scmp.eq.s32.totalorder %s41, 3
      %p261 = por %p259, %p260
      %p262 = scmp.ne.s32.totalorder %s253, %s254
      %p263 = scmp.eq.s32.totalorder %s41, 0
      %p264 = por %p262, %p263
      %p265 = scmp.ne.s32.totalorder %s253, %s254
      %p266 = scmp.eq.s32.totalorder %s42, 3
      %p267 = por %p265, %p266
      %p269 = scmp.ne.s32.totalorder %s254, %s268
      %p270 = scmp.eq.s32.totalorder %s42, 0
      %p271 = por %p269, %p270
      %s273 = sadd.s32 %s272, 1
      %p276 = scmp.eq.s32.totalorder %s36, 3
      %p277 = scmp.ne.s32.totalorder %s272, %s274
      %p278 = scmp.eq.s32.totalorder %s36, 0
      %p279 = por %p277, %p278
      %p280 = scmp.ne.s32.totalorder %s272, %s274
      %p281 = scmp.eq.s32.totalorder %s41, 3
      %p282 = por %p280, %p281
      %p283 = scmp.ne.s32.totalorder %s274, %s275
      %p284 = scmp.eq.s32.totalorder %s41, 0
      %p285 = por %p283, %p284
      %p286 = scmp.ne.s32.totalorder %s274, %s275
      %p287 = scmp.eq.s32.totalorder %s42, 3
      %p288 = por %p286, %p287
      %p290 = scmp.ne.s32.totalorder %s275, %s289
      %p291 = scmp.eq.s32.totalorder %s42, 0
      %p292 = por %p290, %p291
      %s294 = sadd.s32 %s293, 1
      %p297 = scmp.eq.s32.totalorder %s36, 3
      %p298 = scmp.ne.s32.totalorder %s293, %s295
      %p299 = scmp.eq.s32.totalorder %s36, 0
      %p300 = por %p298, %p299
      %p301 = scmp.ne.s32.totalorder %s293, %s295
      %p302 = scmp.eq.s32.totalorder %s41, 3
      %p303 = por %p301, %p302
      %p304 = scmp.ne.s32.totalorder %s295, %s296
      %p305 = scmp.eq.s32.totalorder %s41, 0
      %p306 = por %p304, %p305
      %p307 = scmp.ne.s32.totalorder %s295, %s296
      %p308 = scmp.eq.s32.totalorder %s42, 3
      %p309 = por %p307, %p308
      %p311 = scmp.ne.s32.totalorder %s296, %s310
      %p312 = scmp.eq.s32.totalorder %s42, 0
      %p313 = por %p311, %p312
      %s315 = sadd.s32 %s314, 1
      %p318 = scmp.eq.s32.totalorder %s36, 3
      %p319 = scmp.ne.s32.totalorder %s314, %s316
      %p320 = scmp.eq.s32.totalorder %s36, 0
      %p321 = por %p319, %p320
      %p322 = scmp.ne.s32.totalorder %s314, %s316
      %p323 = scmp.eq.s32.totalorder %s41, 3
      %p324 = por %p322, %p323
      %p325 = scmp.ne.s32.totalorder %s316, %s317
      %p326 = scmp.eq.s32.totalorder %s41, 0
      %p327 = por %p325, %p326
      %p328 = scmp.ne.s32.totalorder %s316, %s317
      %p329 = scmp.eq.s32.totalorder %s42, 3
      %p330 = por %p328, %p329
      %p332 = scmp.ne.s32.totalorder %s317, %s331
      %p333 = scmp.eq.s32.totalorder %s42, 0
      %p334 = por %p332, %p333
      %s336 = sadd.s32 %s335, 1
      %p339 = scmp.eq.s32.totalorder %s36, 3
      %p340 = scmp.ne.s32.totalorder %s335, %s337
      %p341 = scmp.eq.s32.totalorder %s36, 0
      %p342 = por %p340, %p341
      %p343 = scmp.ne.s32.totalorder %s335, %s337
      %p344 = scmp.eq.s32.totalorder %s41, 3
      %p345 = por %p343, %p344
      %p346 = scmp.ne.s32.totalorder %s337, %s338
      %p347 = scmp.eq.s32.totalorder %s41, 0
      %p348 = por %p346, %p347
      %p349 = scmp.ne.s32.totalorder %s337, %s338
      %p350 = scmp.eq.s32.totalorder %s42, 3
      %p351 = por %p349, %p350
      %p353 = scmp.ne.s32.totalorder %s338, %s352
      %p354 = scmp.eq.s32.totalorder %s42, 0
      %p355 = por %p353, %p354
      %s357 = sadd.s32 %s356, 1
      %p360 = scmp.eq.s32.totalorder %s36, 3
      %p361 = scmp.ne.s32.totalorder %s356, %s358
      %p362 = scmp.eq.s32.totalorder %s36, 0
      %p363 = por %p361, %p362
      %p364 = scmp.ne.s32.totalorder %s356, %s358
      %p365 = scmp.eq.s32.totalorder %s41, 3
      %p366 = por %p364, %p365
      %p367 = scmp.ne.s32.totalorder %s358, %s359
      %p368 = scmp.eq.s32.totalorder %s41, 0
      %p369 = por %p367, %p368
      %p370 = scmp.ne.s32.totalorder %s358, %s359
      %p371 = scmp.eq.s32.totalorder %s42, 3
      %p372 = por %p370, %p371
      %p374 = scmp.ne.s32.totalorder %s359, %s373
      %p375 = scmp.eq.s32.totalorder %s42, 0
      %p376 = por %p374, %p375
      %s378 = sadd.s32 %s377, 1
      %p381 = scmp.eq.s32.totalorder %s36, 3
      %p382 = scmp.ne.s32.totalorder %s377, %s379
      %p383 = scmp.eq.s32.totalorder %s36, 0
      %p384 = por %p382, %p383
      %p385 = scmp.ne.s32.totalorder %s377, %s379
      %p386 = scmp.eq.s32.totalorder %s41, 3
      %p387 = por %p385, %p386
      %p388 = scmp.ne.s32.totalorder %s379, %s380
      %p389 = scmp.eq.s32.totalorder %s41, 0
      %p390 = por %p388, %p389
      %p391 = scmp.ne.s32.totalorder %s379, %s380
      %p392 = scmp.eq.s32.totalorder %s42, 3
      %p393 = por %p391, %p392
      %p395 = scmp.ne.s32.totalorder %s380, %s394
      %p396 = scmp.eq.s32.totalorder %s42, 0
      %p397 = por %p395, %p396
      %s399 = sadd.s32 %s398, 1
      %p402 = scmp.eq.s32.totalorder %s36, 3
      %p403 = scmp.ne.s32.totalorder %s398, %s400
      %p404 = scmp.eq.s32.totalorder %s36, 0
      %p405 = por %p403, %p404
      %p406 = scmp.ne.s32.totalorder %s398, %s400
      %p407 = scmp.eq.s32.totalorder %s41, 3
      %p408 = por %p406, %p407
      %p409 = scmp.ne.s32.totalorder %s400, %s401
      %p410 = scmp.eq.s32.totalorder %s41, 0
      %p411 = por %p409, %p410
      %p412 = scmp.ne.s32.totalorder %s400, %s401
      %p413 = scmp.eq.s32.totalorder %s42, 3
      %p414 = por %p412, %p413
      %p416 = scmp.ne.s32.totalorder %s401, %s415
      %p417 = scmp.eq.s32.totalorder %s42, 0
      %p418 = por %p416, %p417
      %s420 = sadd.s32 %s419, 1
      %p423 = scmp.eq.s32.totalorder %s36, 3
      %p424 = scmp.ne.s32.totalorder %s419, %s421
      %p425 = scmp.eq.s32.totalorder %s36, 0
      %p426 = por %p424, %p425
      %p427 = scmp.ne.s32.totalorder %s419, %s421
      %p428 = scmp.eq.s32.totalorder %s41, 3
      %p429 = por %p427, %p428
      %p430 = scmp.ne.s32.totalorder %s421, %s422
      %p431 = scmp.eq.s32.totalorder %s41, 0
      %p432 = por %p430, %p431
      %p433 = scmp.ne.s32.totalorder %s421, %s422
      %p434 = scmp.eq.s32.totalorder %s42, 3
      %p435 = por %p433, %p434
      %p437 = scmp.ne.s32.totalorder %s422, %s436
      %p438 = scmp.eq.s32.totalorder %s42, 0
      %p439 = por %p437, %p438
      %s441 = sadd.s32 %s440, 1
      %p444 = scmp.eq.s32.totalorder %s36, 3
      %p445 = scmp.ne.s32.totalorder %s440, %s442
      %p446 = scmp.eq.s32.totalorder %s36, 0
      %p447 = por %p445, %p446
      %p448 = scmp.ne.s32.totalorder %s440, %s442
      %p449 = scmp.eq.s32.totalorder %s41, 3
      %p450 = por %p448, %p449
      %p451 = scmp.ne.s32.totalorder %s442, %s443
      %p452 = scmp.eq.s32.totalorder %s41, 0
      %p453 = por %p451, %p452
      %p454 = scmp.ne.s32.totalorder %s442, %s443
      %p455 = scmp.eq.s32.totalorder %s42, 3
      %p456 = por %p454, %p455
      %p458 = scmp.ne.s32.totalorder %s443, %s457
      %p459 = scmp.eq.s32.totalorder %s42, 0
      %p460 = por %p458, %p459
      %s462 = sadd.s32 %s461, 1
      %p465 = scmp.eq.s32.totalorder %s36, 3
      %p466 = scmp.ne.s32.totalorder %s461, %s463
      %p467 = scmp.eq.s32.totalorder %s36, 0
      %p468 = por %p466, %p467
      %p469 = scmp.ne.s32.totalorder %s461, %s463
      %p470 = scmp.eq.s32.totalorder %s41, 3
      %p471 = por %p469, %p470
      %p472 = scmp.ne.s32.totalorder %s463, %s464
      %p473 = scmp.eq.s32.totalorder %s41, 0
      %p474 = por %p472, %p473
      %p475 = scmp.ne.s32.totalorder %s463, %s464
      %p476 = scmp.eq.s32.totalorder %s42, 3
      %p477 = por %p475, %p476
      %p479 = scmp.ne.s32.totalorder %s464, %s478
      %p480 = scmp.eq.s32.totalorder %s42, 0
      %p481 = por %p479, %p480
      %s482 = ssub.s32 %s43, %s55
      %s483 = ssub.s32 %s44, %s51
      %s484 = sor.u32 %s482, %s483
      %p485 = scmp.eq.s32.totalorder %s484, 0
      %s487 = sadd.s32 %s486, 1
      %s488 = scalar_select %p485, %s486, %s487
      %p491 = pneg %p485
      %p492 = scmp.eq.s32.totalorder %s36, 3
      %p493 = por %p491, %p492
      %p494 = scmp.ne.s32.totalorder %s486, %s489
      %p495 = scmp.eq.s32.totalorder %s36, 0
      %p496 = por %p494, %p495
      %p497 = scmp.ne.s32.totalorder %s486, %s489
      %p498 = scmp.eq.s32.totalorder %s41, 3
      %p499 = por %p497, %p498
      %p500 = scmp.ne.s32.totalorder %s489, %s490
      %p501 = scmp.eq.s32.totalorder %s41, 0
      %p502 = por %p500, %p501
      %p503 = scmp.ne.s32.totalorder %s489, %s490
      %p504 = scmp.eq.s32.totalorder %s42, 3
      %p505 = por %p503, %p504
      %p507 = scmp.ne.s32.totalorder %s490, %s506
      %p508 = scmp.eq.s32.totalorder %s42, 0
      %p509 = por %p507, %p508
      %p510 = scmp.le.s32.totalorder 1, %s36
      %p511 = scmp.lt.s32.totalorder %s36, 5
      %p512 = pnand %p510, %p511
      %p513 = pneg %p512
      // Predicated region
      $region9: #{tpu_custom_call.1} parent=5 // pred_check
        _
      $region10: #{tpu_custom_call.1} parent=5 // pred_check_branch
        %515 = sbr.rel (%p512) target = $region12
      $region11: #{tpu_custom_call.1} parent=5 // pred_region
        %s516 = ssub.s32 %s36, 1
        // Predicated region
        $region13: #{tpu_custom_call.1} parent=11 // pred_check
          %p517 = pneg %p201
        $region14: #{tpu_custom_call.1} parent=11 // pred_check_branch
          %519 = sbr.rel (%p517) target = $region16
        $region15: #{tpu_custom_call.1} parent=11 // pred_region
          %521 = vsyncadd [#allocation6], 0
          %s522 = sshll.u32 %s5, 4
          %s523 = int_to_ptr.hbm [resolvable:$true] %s522
          %s524 = sshll.u32 [#allocation7], 4
          %s525 = int_to_ptr.vmem [resolvable:$true] %s524
          %530 = dma.hbm_to_vmem [thread:$0]  %s523, 256, %s525, [#allocation6], 64, 64, 4
        $region16: #{tpu_custom_call.1} parent=11 // pred_fallthru
          _
        // Predicated region
        $region17: #{tpu_custom_call.1} parent=11 // pred_check
          %p531 = pneg %p222
        $region18: #{tpu_custom_call.1} parent=11 // pred_check_branch
          %533 = sbr.rel (%p531) target = $region20
        $region19: #{tpu_custom_call.1} parent=11 // pred_region
          %535 = vsyncadd [#allocation9], 0
          %s536 = sshll.u32 %s6, 4
          %s537 = int_to_ptr.hbm [resolvable:$true] %s536
          %s538 = sshll.u32 [#allocation8], 4
          %s539 = int_to_ptr.vmem [resolvable:$true] %s538
          %544 = dma.hbm_to_vmem [thread:$0]  %s537, 256, %s539, [#allocation9], 64, 64, 4
        $region20: #{tpu_custom_call.1} parent=11 // pred_fallthru
          _
        // Predicated region
        $region21: #{tpu_custom_call.1} parent=11 // pred_check
          %p545 = pneg %p243
        $region22: #{tpu_custom_call.1} parent=11 // pred_check_branch
          %547 = sbr.rel (%p545) target = $region24
        $region23: #{tpu_custom_call.1} parent=11 // pred_region
          %549 = vsyncadd [#allocation9], 0
          %s550 = sshll.u32 %s7, 4
          %s551 = int_to_ptr.hbm [resolvable:$true] %s550
          %s552 = sshll.u32 [#allocation10], 4
          %s553 = int_to_ptr.vmem [resolvable:$true] %s552
          %558 = dma.hbm_to_vmem [thread:$0]  %s551, 256, %s553, [#allocation9], 64, 64, 4
        $region24: #{tpu_custom_call.1} parent=11 // pred_fallthru
          _
        // Predicated region
        $region25: #{tpu_custom_call.1} parent=11 // pred_check
          %p559 = pneg %p264
        $region26: #{tpu_custom_call.1} parent=11 // pred_check_branch
          %561 = sbr.rel (%p559) target = $region28
        $region27: #{tpu_custom_call.1} parent=11 // pred_region
          %563 = vsyncadd [#allocation12], 0
          %s564 = sshll.u32 %s8, 4
          %s565 = int_to_ptr.hbm [resolvable:$true] %s564
          %s566 = sshll.u32 [#allocation11], 4
          %s567 = int_to_ptr.vmem [resolvable:$true] %s566
          %572 = dma.hbm_to_vmem [thread:$0]  %s565, 256, %s567, [#allocation12], 64, 64, 4
        $region28: #{tpu_custom_call.1} parent=11 // pred_fallthru
          _
        // Predicated region
        $region29: #{tpu_custom_call.1} parent=11 // pred_check
          %p573 = pneg %p285
        $region30: #{tpu_custom_call.1} parent=11 // pred_check_branch
          %575 = sbr.rel (%p573) target = $region32
        $region31: #{tpu_custom_call.1} parent=11 // pred_region
          _
        $region32: #{tpu_custom_call.1} parent=11 // pred_fallthru
          _
        // Predicated region
        $region33: #{tpu_custom_call.1} parent=11 // pred_check
          %p576 = pneg %p306
        $region34: #{tpu_custom_call.1} parent=11 // pred_check_branch
          %578 = sbr.rel (%p576) target = $region36
        $region35: #{tpu_custom_call.1} parent=11 // pred_region
          _
        $region36: #{tpu_custom_call.1} parent=11 // pred_fallthru
          _
        // Predicated region
        $region37: #{tpu_custom_call.1} parent=11 // pred_check
          %p579 = pneg %p327
        $region38: #{tpu_custom_call.1} parent=11 // pred_check_branch
          %581 = sbr.rel (%p579) target = $region40
        $region39: #{tpu_custom_call.1} parent=11 // pred_region
          _
        $region40: #{tpu_custom_call.1} parent=11 // pred_fallthru
          _
        // Predicated region
        $region41: #{tpu_custom_call.1} parent=11 // pred_check
          %p582 = pneg %p348
        $region42: #{tpu_custom_call.1} parent=11 // pred_check_branch
          %584 = sbr.rel (%p582) target = $region44
        $region43: #{tpu_custom_call.1} parent=11 // pred_region
          _
        $region44: #{tpu_custom_call.1} parent=11 // pred_fallthru
          _
        // Predicated region
        $region45: #{tpu_custom_call.1} parent=11 // pred_check
          %p585 = pneg %p369
        $region46: #{tpu_custom_call.1} parent=11 // pred_check_branch
          %587 = sbr.rel (%p585) target = $region48
        $region47: #{tpu_custom_call.1} parent=11 // pred_region
          _
        $region48: #{tpu_custom_call.1} parent=11 // pred_fallthru
          _
        // Predicated region
        $region49: #{tpu_custom_call.1} parent=11 // pred_check
          %p588 = pneg %p390
        $region50: #{tpu_custom_call.1} parent=11 // pred_check_branch
          %590 = sbr.rel (%p588) target = $region52
        $region51: #{tpu_custom_call.1} parent=11 // pred_region
          _
        $region52: #{tpu_custom_call.1} parent=11 // pred_fallthru
          _
        // Predicated region
        $region53: #{tpu_custom_call.1} parent=11 // pred_check
          %p591 = pneg %p411
        $region54: #{tpu_custom_call.1} parent=11 // pred_check_branch
          %593 = sbr.rel (%p591) target = $region56
        $region55: #{tpu_custom_call.1} parent=11 // pred_region
          _
        $region56: #{tpu_custom_call.1} parent=11 // pred_fallthru
          _
        // Predicated region
        $region57: #{tpu_custom_call.1} parent=11 // pred_check
          %p594 = pneg %p432
        $region58: #{tpu_custom_call.1} parent=11 // pred_check_branch
          %596 = sbr.rel (%p594) target = $region60
        $region59: #{tpu_custom_call.1} parent=11 // pred_region
          _
        $region60: #{tpu_custom_call.1} parent=11 // pred_fallthru
          _
        // Predicated region
        $region61: #{tpu_custom_call.1} parent=11 // pred_check
          %p597 = pneg %p453
        $region62: #{tpu_custom_call.1} parent=11 // pred_check_branch
          %599 = sbr.rel (%p597) target = $region64
        $region63: #{tpu_custom_call.1} parent=11 // pred_region
          _
        $region64: #{tpu_custom_call.1} parent=11 // pred_fallthru
          _
        // Predicated region
        $region65: #{tpu_custom_call.1} parent=11 // pred_check
          %p600 = pneg %p474
        $region66: #{tpu_custom_call.1} parent=11 // pred_check_branch
          %602 = sbr.rel (%p600) target = $region68
        $region67: #{tpu_custom_call.1} parent=11 // pred_region
          _
        $region68: #{tpu_custom_call.1} parent=11 // pred_fallthru
          _
      $region12: #{tpu_custom_call.1} parent=5 // pred_fallthru
        _
      %p603 = scmp.lt.s32.totalorder %s36, 4
      // Predicated region
      $region69: #{tpu_custom_call.1} parent=5 // pred_check
        %p604 = pneg %p603
      $region70: #{tpu_custom_call.1} parent=5 // pred_check_branch
        %606 = sbr.rel (%p604) target = $region72
      $region71: #{tpu_custom_call.1} parent=5 // pred_region
        // Predicated region
        $region73: #{tpu_custom_call.1} parent=71 // pred_check
          %p607 = pneg %p70
        $region74: #{tpu_custom_call.1} parent=71 // pred_check_branch
          %609 = sbr.rel (%p607) target = $region76
        $region75: #{tpu_custom_call.1} parent=71 // pred_region
          %p610 = scmp.lt.s32.totalorder %s43, 1
          %s611 = scalar_select %p610, %s43, 1
          %p612 = scmp.lt.s32.totalorder %s44, 1
          %s613 = scalar_select %p612, %s44, 1
          %s614 = smul.addr %s611, 2
          %s615 = sadd.s32 %s613, %s614
          %s616 = smul.addr %s615, 8
          %s617 = scalar_lea.vmem %s0, %s616
        $region76: #{tpu_custom_call.1} parent=71 // pred_fallthru
          _
        // Predicated region
        $region77: #{tpu_custom_call.1} parent=71 // pred_check
          %p618 = pneg %p96
        $region78: #{tpu_custom_call.1} parent=71 // pred_check_branch
          %620 = sbr.rel (%p618) target = $region80
        $region79: #{tpu_custom_call.1} parent=71 // pred_region
          %s621 = sand.u32 %s86, 1
          %s622 = scalar_lea.sflag [#allocation3], %s621
          %s623 = sand.u32 %s86, 1
          %s624 = smul.addr %s623, 16
          %s625 = scalar_lea.vmem [#allocation2], %s624
          %627 = vsyncadd %s622, 0
          %s628 = smul.addr %s43, 2
          %s629 = smul.addr %s628, 8
          %s630 = scalar_lea.hbm %s1, %s629
          %s631 = sshll.u32 %s630, 4
          %s632 = int_to_ptr.hbm [resolvable:$true] %s631
          %s633 = sshll.u32 %s625, 4
          %s634 = int_to_ptr.vmem [resolvable:$true] %s633
          %639 = dma.hbm_to_vmem [thread:$0]  %s632, 256, %s634, %s622, 128, 128, 8
        $region80: #{tpu_custom_call.1} parent=71 // pred_fallthru
          _
        // Predicated region
        $region81: #{tpu_custom_call.1} parent=71 // pred_check
          %p640 = pneg %p122
        $region82: #{tpu_custom_call.1} parent=71 // pred_check_branch
          %642 = sbr.rel (%p640) target = $region84
        $region83: #{tpu_custom_call.1} parent=71 // pred_region
          %p643 = scmp.lt.s32.totalorder %s43, 1
          %s644 = scalar_select %p643, %s43, 1
          %s645 = smul.addr %s644, 8
          %s646 = scalar_lea.vmem %s2, %s645
        $region84: #{tpu_custom_call.1} parent=71 // pred_fallthru
          _
        // Predicated region
        $region85: #{tpu_custom_call.1} parent=71 // pred_check
          %p647 = pneg %p148
        $region86: #{tpu_custom_call.1} parent=71 // pred_check_branch
          %649 = sbr.rel (%p647) target = $region88
        $region87: #{tpu_custom_call.1} parent=71 // pred_region
          %s650 = sand.u32 %s36, 1
          %s651 = scalar_lea.sflag [#allocation6], %s650
          %s652 = sand.u32 %s138, 1
          %s653 = smul.addr %s652, 8
          %s654 = scalar_lea.vmem [#allocation5], %s653
          %656 = vsyncadd %s651, 0
          %s657 = smul.addr %s44, 8
          %s658 = scalar_lea.hbm %s3, %s657
          %s660 = sshll.u32 %s658, 4
          %s661 = int_to_ptr.hbm [resolvable:$true] %s660
          %s662 = sshll.u32 %s654, 4
          %s663 = int_to_ptr.vmem [resolvable:$true] %s662
          %665 = dma.hbm_to_vmem [thread:$0]  %s661, 128, %s663, %s651
        $region88: #{tpu_custom_call.1} parent=71 // pred_fallthru
          _
        // Predicated region
        $region89: #{tpu_custom_call.1} parent=71 // pred_check
          %p666 = pneg %p174
        $region90: #{tpu_custom_call.1} parent=71 // pred_check_branch
          %668 = sbr.rel (%p666) target = $region92
        $region91: #{tpu_custom_call.1} parent=71 // pred_region
          %p669 = scmp.lt.s32.totalorder %s44, 1
          %s670 = scalar_select %p669, %s44, 1
          %s671 = smul.addr %s670, 8
          %s672 = scalar_lea.vmem %s4, %s671
        $region92: #{tpu_custom_call.1} parent=71 // pred_fallthru
          _
      $region72: #{tpu_custom_call.1} parent=5 // pred_fallthru
        _
      %p673 = scmp.le.s32.totalorder 1, %s36
      %p674 = scmp.lt.s32.totalorder %s36, 5
      %p675 = pnand %p673, %p674
      %p676 = pneg %p675
      // Predicated region
      $region93: #{tpu_custom_call.1} parent=5 // pred_check
        _
      $region94: #{tpu_custom_call.1} parent=5 // pred_check_branch
        %678 = sbr.rel (%p675) target = $region96
      $region95: #{tpu_custom_call.1} parent=5 // pred_region
        %s679 = ssub.s32 %s36, 1
        %s680 = sand.u32 %s89, 1
        %s681 = scalar_lea.sflag [#allocation3], %s680
        %s682 = sand.u32 %s89, 1
        %s683 = smul.addr %s682, 16
        %s684 = scalar_lea.vmem [#allocation2], %s683
        // Predicated region
        $region97: #{tpu_custom_call.1} parent=95 // pred_check
          %p685 = pneg %p102
        $region98: #{tpu_custom_call.1} parent=95 // pred_check_branch
          %687 = sbr.rel (%p685) target = $region100
        $region99: #{tpu_custom_call.1} parent=95 // pred_region
          %689 = dma.done %s681, 256
        $region100: #{tpu_custom_call.1} parent=95 // pred_fallthru
          _
        %s690 = sand.u32 %s41, 1
        %s691 = scalar_lea.sflag [#allocation6], %s690
        %s692 = sand.u32 %s141, 1
        %s693 = smul.addr %s692, 8
        %s694 = scalar_lea.vmem [#allocation5], %s693
        // Predicated region
        $region101: #{tpu_custom_call.1} parent=95 // pred_check
          %p695 = pneg %p154
        $region102: #{tpu_custom_call.1} parent=95 // pred_check_branch
          %697 = sbr.rel (%p695) target = $region104
        $region103: #{tpu_custom_call.1} parent=95 // pred_region
          %699 = dma.done %s691, 128
        $region104: #{tpu_custom_call.1} parent=95 // pred_fallthru
          _
        // Predicated region
        $region105: #{tpu_custom_call.1} parent=95 // pred_check
          %p700 = pneg %p201
        $region106: #{tpu_custom_call.1} parent=95 // pred_check_branch
          %702 = sbr.rel (%p700) target = $region108
        $region107: #{tpu_custom_call.1} parent=95 // pred_region
          %704 = dma.done [#allocation6], 256
        $region108: #{tpu_custom_call.1} parent=95 // pred_fallthru
          _
        // Predicated region
        $region109: #{tpu_custom_call.1} parent=95 // pred_check
          %p705 = pneg %p222
        $region110: #{tpu_custom_call.1} parent=95 // pred_check_branch
          %707 = sbr.rel (%p705) target = $region112
        $region111: #{tpu_custom_call.1} parent=95 // pred_region
          %709 = dma.done [#allocation9], 256
        $region112: #{tpu_custom_call.1} parent=95 // pred_fallthru
          _
        // Predicated region
        $region113: #{tpu_custom_call.1} parent=95 // pred_check
          %p710 = pneg %p243
        $region114: #{tpu_custom_call.1} parent=95 // pred_check_branch
          %712 = sbr.rel (%p710) target = $region116
        $region115: #{tpu_custom_call.1} parent=95 // pred_region
          %714 = dma.done [#allocation9], 256
        $region116: #{tpu_custom_call.1} parent=95 // pred_fallthru
          _
        // Predicated region
        $region117: #{tpu_custom_call.1} parent=95 // pred_check
          %p715 = pneg %p264
        $region118: #{tpu_custom_call.1} parent=95 // pred_check_branch
          %717 = sbr.rel (%p715) target = $region120
        $region119: #{tpu_custom_call.1} parent=95 // pred_region
          %719 = dma.done [#allocation12], 256
        $region120: #{tpu_custom_call.1} parent=95 // pred_fallthru
          _
        %p720 = scmp.lt.s32.totalorder %s45, 1
        %s721 = scalar_select %p720, %s45, 1
        %p722 = scmp.lt.s32.totalorder %s46, 1
        %s723 = scalar_select %p722, %s46, 1
        %s724 = smul.addr %s721, 2
        %s725 = sadd.s32 %s723, %s724
        %s726 = smul.addr %s725, 8
        %s727 = scalar_lea.vmem %s0, %s726
        %p728 = pneg %p76
        %p729 = pneg %p73
        %s730 = sand.u32 %s89, 1
        %s731 = scalar_lea.sflag [#allocation3], %s730
        %s732 = sand.u32 %s89, 1
        %s733 = smul.addr %s732, 16
        %s734 = scalar_lea.vmem [#allocation2], %s733
        %p735 = pneg %p102
        %p736 = pneg %p99
        %p737 = scmp.lt.s32.totalorder %s45, 1
        %s738 = scalar_select %p737, %s45, 1
        %s739 = smul.addr %s738, 8
        %s740 = scalar_lea.vmem %s2, %s739
        %p741 = pneg %p128
        %p742 = pneg %p125
        %s743 = sand.u32 %s41, 1
        %s744 = scalar_lea.sflag [#allocation6], %s743
        %s745 = sand.u32 %s141, 1
        %s746 = smul.addr %s745, 8
        %s747 = scalar_lea.vmem [#allocation5], %s746
        %p748 = pneg %p154
        %p749 = pneg %p151
        %p750 = scmp.lt.s32.totalorder %s46, 1
        %s751 = scalar_select %p750, %s46, 1
        %s752 = smul.addr %s751, 8
        %s753 = scalar_lea.vmem %s4, %s752
        %p754 = pneg %p180
        %p755 = pneg %p177
        %p756 = pneg %p201
        %p757 = pneg %p198
        %p758 = pneg %p222
        %p759 = pneg %p219
        %p760 = pneg %p243
        %p761 = pneg %p240
        %p762 = pneg %p264
        %p763 = pneg %p261
        %p764 = pneg %p285
        %p765 = pneg %p282
        %p766 = pneg %p306
        %p767 = pneg %p303
        %p768 = pneg %p327
        %p769 = pneg %p324
        %p770 = pneg %p348
        %p771 = pneg %p345
        %p772 = pneg %p369
        %p773 = pneg %p366
        %p774 = pneg %p390
        %p775 = pneg %p387
        %p776 = pneg %p411
        %p777 = pneg %p408
        %p778 = pneg %p432
        %p779 = pneg %p429
        %p780 = pneg %p453
        %p781 = pneg %p450
        %p782 = pneg %p474
        %p783 = pneg %p471
        %p784 = pneg %p502
        %p785 = pneg %p499
        %s786 = sand.u32 %s489, 1
        %s787 = scalar_lea.sflag [#allocation4], %s786
        %s788 = sand.u32 %s489, 1
        %s789 = smul.addr %s788, 8
        %s790 = scalar_lea.vmem [#allocation13], %s789
        %p791 = scmp.lt.s32.totalorder %s45, 1
        %s792 = scalar_select %p791, %s45, 1
        %p793 = scmp.lt.s32.totalorder %s46, 1
        %s794 = scalar_select %p793, %s46, 1
        %s795 = smul.addr %s792, 2
        %s796 = sadd.s32 %s794, %s795
        %s797 = smul.addr %s796, 8
        %s798 = scalar_lea.vmem %s0, %s797
        %p799 = scmp.lt.s32.totalorder %s45, 1
        %s800 = scalar_select %p799, %s45, 1
        %s801 = smul.addr %s800, 8
        %s802 = scalar_lea.vmem %s2, %s801
        %p803 = scmp.lt.s32.totalorder %s46, 1
        %s804 = scalar_select %p803, %s46, 1
        %s805 = smul.addr %s804, 8
        %s806 = scalar_lea.vmem %s4, %s805
        %v808 = vld [vmem:[%s798] sm:$0xff]
        %v809 = vld [vmem:[%s684] sm:$0xff]
        %v810 = vld [vmem:[%s684 + $0x8] sm:$0xff]
        %v811 = vld [vmem:[%s802] sm:$0xff]
        %v812 = vld [vmem:[%s694] sm:$0xff]
        %vm813 = vcmp.eq.f32.partialorder %v812, 0.0
        %v814 = vld [vmem:[%s806] sm:$0xff]
        %vm815 = vcmp.eq.f32.partialorder %v814, 0.0
        %vm816 = vcmask 261120
        %v817 = vsel %vm816, %v809, 0.0
        %818 = vadd.xlane.f32.xlu0 %v817
        %v819 = vpop.xlane.xlu0 %818
        %v820 = vsel %vm816, %v810, 0.0
        %821 = vadd.xlane.f32.xlu0 %v820
        %v822 = vpop.xlane.xlu0 %821
        %v823 = vrcp.pop 32.0
        %v824 = vmul.f32 32.0, %v823
        %v825 = vsub.f32 1.0, %v824
        %v826 = vmul.f32 %v823, %v825
        %v827 = vadd.f32 %v823, %v826
        %vm828 = vweird.f32 %v823
        %v829 = vsel %vm828, %v823, %v827
        %v830 = vmul.f32 %v819, %v829
        %v831 = vmul.f32 %v822, %v829
        %v832 = vsub.f32 %v809, %v830
        %v833 = vsub.f32 %v810, %v831
        %v834 = vmul.f32 %v832, %v832
        %v835 = vmul.f32 %v833, %v833
        %v836 = vsel %vm816, %v834, 0.0
        %837 = vadd.xlane.f32.xlu0 %v836
        %v838 = vpop.xlane.xlu0 %837
        %v839 = vsel %vm816, %v835, 0.0
        %840 = vadd.xlane.f32.xlu0 %v839
        %v841 = vpop.xlane.xlu0 %840
        %v842 = vmul.f32 %v838, 0.032258064
        %v843 = vmul.f32 %v841, 0.032258064
        %v844 = vrsqrt.pop %v842
        %v845 = vmul.f32 %v844, %v842
        %v846 = vmul.f32 %v845, %v844
        %v847 = vmul.f32 0.5, %v846
        %v848 = vsub.f32 1.5, %v847
        %v849 = vmul.f32 %v844, %v848
        %v850 = vmul.f32 %v842, %v849
        %vm851 = vcmp.eq.f32.partialorder %v842, inf
        %v852 = vsel %vm851, %v842, %v850
        %vm853 = vcmp.eq.f32.partialorder %v842, 0.0
        %v854 = vand.u32 %v842, 2147483648
        %v855 = vsel %vm853, %v854, %v852
        %v856 = vrsqrt.pop %v843
        %v857 = vmul.f32 %v856, %v843
        %v858 = vmul.f32 %v857, %v856
        %v859 = vmul.f32 0.5, %v858
        %v860 = vsub.f32 1.5, %v859
        %v861 = vmul.f32 %v856, %v860
        %v862 = vmul.f32 %v843, %v861
        %vm863 = vcmp.eq.f32.partialorder %v843, inf
        %v864 = vsel %vm863, %v843, %v862
        %vm865 = vcmp.eq.f32.partialorder %v843, 0.0
        %v866 = vand.u32 %v843, 2147483648
        %v867 = vsel %vm865, %v866, %v864
        %v868 = vadd.f32 %v855, 1e-06
        %v869 = vadd.f32 %v867, 1e-06
        %v870 = vrcp.pop %v868
        %v871 = vmul.f32 %v868, %v870
        %v872 = vsub.f32 1.0, %v871
        %v873 = vmul.f32 %v870, %v872
        %v874 = vadd.f32 %v870, %v873
        %vm875 = vweird.f32 %v868
        %vm876 = vweird.f32 %v870
        %vm877 = vmor %vm875, %vm876
        %v878 = vsel %vm877, %v870, %v874
        %v879 = vand.u32 2147483647, %v868
        %vm880 = vcmp.eq.f32.partialorder %v879, 8.507059e+37
        %v881 = vand.u32 %v868, 2147483648
        %v882 = vor.u32 1.1754944e-38, %v881
        %v883 = vsel %vm880, %v882, %v878
        %v884 = vrcp.pop %v869
        %v885 = vmul.f32 %v869, %v884
        %v886 = vsub.f32 1.0, %v885
        %v887 = vmul.f32 %v884, %v886
        %v888 = vadd.f32 %v884, %v887
        %vm889 = vweird.f32 %v869
        %vm890 = vweird.f32 %v884
        %vm891 = vmor %vm889, %vm890
        %v892 = vsel %vm891, %v884, %v888
        %v893 = vand.u32 2147483647, %v869
        %vm894 = vcmp.eq.f32.partialorder %v893, 8.507059e+37
        %v895 = vand.u32 %v869, 2147483648
        %v896 = vor.u32 1.1754944e-38, %v895
        %v897 = vsel %vm894, %v896, %v892
        %v898 = vld [vmem:[%s13] sm:$0x1]
        %v900 = vperm.slane %v898, 0
        %v902 = vmul.f32 %v900, %v832
        %v903 = vmul.f32 %v900, %v833
        %v904 = vmul.f32 %v902, %v883
        %v905 = vmul.f32 %v903, %v897
        %v906 = vld [vmem:[%s14] sm:$0x1]
        %v908 = vperm.slane %v906, 0
        %v910 = vadd.f32 %v904, %v908
        %v911 = vadd.f32 %v905, %v908
        %v912 = vld [vmem:[#allocation7] sm:$0xf]
        %v913 = vld [vmem:[#allocation7 + $0x4] sm:$0xf]
        %v914 = vld [vmem:[#allocation7 + $0x8] sm:$0xf]
        %v915 = vld [vmem:[#allocation7 + $0xc] sm:$0xf]
        %v916 = vpack.c.bf16 %v911, %v910
        %v921 = vunpack.c.l.b16 %v912
        %v922 = vunpack.c.l.b16 %v913
        %v923 = vunpack.c.l.b16 %v914
        %v924 = vunpack.c.l.b16 %v915
        %v925 = vpack.c.b16 %v922, %v921
        %v926 = vpack.c.b16 %v924, %v923
        %v930 = vsel %vm816, %v916, 0
        %932 = vmatpush.bf16.msra.mxu0 0
        %933 = vmatpush.bf16.msra.mxu0 0
        %934 = vmatpush.bf16.msra.mxu0 0
        %935 = vmatpush.bf16.msra.mxu0 0
        %936 = vmatpush.bf16.msra.mxu0 0
        %937 = vmatpush.bf16.msra.mxu0 0
        %938 = vmatpush.bf16.msra.mxu0 %v926
        %939 = vmatpush.bf16.msra.mxu0 %v925
        %940 = vmatmul.bf16.gmra.mxu0 %v930
        %v941 = vpop.f32.mrf.mxu0
        %v942 = vadd.f32 0.0, %v941
        %v943 = vpop.f32.mrf.mxu0
        %v944 = vadd.f32 0.0, %v943
        %945 = vdwg.mxu0
        %v946 = vsel %vm816, %v808, 0.0
        %947 = vadd.xlane.f32.xlu0 %v946
        %v948 = vpop.xlane.xlu0 %947
        %v949 = vmul.f32 %v948, %v829
        %v950 = vsub.f32 %v808, %v949
        %v951 = vmul.f32 %v950, %v950
        %v952 = vsel %vm816, %v951, 0.0
        %953 = vadd.xlane.f32.xlu0 %v952
        %v954 = vpop.xlane.xlu0 %953
        %v955 = vmul.f32 %v954, 0.032258064
        %v956 = vrsqrt.pop %v955
        %v957 = vmul.f32 %v956, %v955
        %v958 = vmul.f32 %v957, %v956
        %v959 = vmul.f32 0.5, %v958
        %v960 = vsub.f32 1.5, %v959
        %v961 = vmul.f32 %v956, %v960
        %v962 = vmul.f32 %v955, %v961
        %vm963 = vcmp.eq.f32.partialorder %v955, inf
        %v964 = vsel %vm963, %v955, %v962
        %vm965 = vcmp.eq.f32.partialorder %v955, 0.0
        %v966 = vand.u32 %v955, 2147483648
        %v967 = vsel %vm965, %v966, %v964
        %v968 = vadd.f32 %v967, 1e-06
        %v969 = vrcp.pop %v968
        %v970 = vmul.f32 %v968, %v969
        %v971 = vsub.f32 1.0, %v970
        %v972 = vmul.f32 %v969, %v971
        %v973 = vadd.f32 %v969, %v972
        %vm974 = vweird.f32 %v968
        %vm975 = vweird.f32 %v969
        %vm976 = vmor %vm974, %vm975
        %v977 = vsel %vm976, %v969, %v973
        %v978 = vand.u32 2147483647, %v968
        %vm979 = vcmp.eq.f32.partialorder %v978, 8.507059e+37
        %v980 = vand.u32 %v968, 2147483648
        %v981 = vor.u32 1.1754944e-38, %v980
        %v982 = vsel %vm979, %v981, %v977
        %v983 = vmul.f32 %v900, %v950
        %v984 = vmul.f32 %v983, %v982
        %v985 = vadd.f32 %v984, %v908
        %v986 = vpack.c.bf16 %v985, %v985
        %v988 = vsel %vm816, %v986, 0
        %990 = vmatpush.bf16.msra.mxu0 0
        %991 = vmatpush.bf16.msra.mxu0 0
        %992 = vmatpush.bf16.msra.mxu0 0
        %993 = vmatpush.bf16.msra.mxu0 0
        %994 = vmatpush.bf16.msra.mxu0 0
        %995 = vmatpush.bf16.msra.mxu0 0
        %996 = vmatpush.bf16.msra.mxu0 %v926
        %997 = vmatpush.bf16.msra.mxu0 %v925
        %998 = vmatmul.bf16.gmra.mxu0 %v988
        %v999 = vpop.f32.mrf.mxu0
        %v1000 = vadd.f32 0.0, %v999
        %v1001 = vpop.f32.mrf.mxu0
        %1002 = vdwg.mxu0
        %v1003 = vpack.c.bf16 %v1000, %v1000
        %v1004 = vpack.c.bf16 %v942, %v942
        %v1005 = vpack.c.bf16 %v944, %v944
        %v1008 = vunpack.c.l.b16 %v1004
        %v1009 = vunpack.c.l.b16 %v1005
        %v1010 = vpack.c.b16 %v1009, %v1008
        %vm1011 = vcmask 64512
        %v1013 = vsel %vm1011, %v1003, 0
        %v1016 = vsel %vm1011, %v1010, 0
        %1018 = vmatpush.bf16.xpose.msra.mxu0 0
        %1019 = vmatpush.bf16.xpose.msra.mxu0 0
        %1020 = vmatpush.bf16.xpose.msra.mxu0 0
        %1021 = vmatpush.bf16.xpose.msra.mxu0 0
        %1022 = vmatpush.bf16.xpose.msra.mxu0 0
        %1023 = vmatpush.bf16.xpose.msra.mxu0 0
        %1024 = vmatpush.bf16.xpose.msra.mxu0 0
        %1025 = vmatpush.bf16.xpose.msra.mxu0 %v1016
        %1026 = vmatmul.bf16.gmra.mxu0 %v1013
        %v1027 = vpop.f32.mrf.mxu0
        %v1028 = vadd.f32 0.0, %v1027
        %v1029 = vpop.f32.mrf.mxu0
        %1030 = vdwg.mxu0
        %v1031 = vmul.f32 %v1028, 0.35355338
        %v1032 = vsel %vm813, 1e-09, %v1031
        %vm1033 = vcmask 130048
        %v1034 = vsel %vm1033, %v1032, -inf
        %1035 = vmax.xlane.f32.xlu0 %v1034
        %v1036 = vpop.xlane.xlu0 %1035
        %v1037 = vsub.f32 %v1032, %v1036
        %v1038 = vmul.f32 %v1037, 1.442695
        %v1039 = vpow.pop %v1038
        %v1040 = vsel %vm1033, %v1039, 0.0
        %1041 = vadd.xlane.f32.xlu0 %v1040
        %v1042 = vpop.xlane.xlu0 %1041
        %v1043 = vrcp.pop %v1042
        %v1044 = vmul.f32 %v1039, %v1043
        %v1045 = vpack.c.bf16 %v1044, %v1044
        %v1048 = vsel %vm1033, %v1045, 0
        %1050 = vmatpush.bf16.msra.mxu0 0
        %1051 = vmatpush.bf16.msra.mxu0 0
        %1052 = vmatpush.bf16.msra.mxu0 0
        %1053 = vmatpush.bf16.msra.mxu0 0
        %1054 = vmatpush.bf16.msra.mxu0 0
        %1055 = vmatpush.bf16.msra.mxu0 0
        %1056 = vmatpush.bf16.msra.mxu0 0
        %1057 = vmatpush.bf16.msra.mxu0 %v1010
        %1058 = vmatmul.bf16.gmra.mxu0 %v1048
        %v1059 = vpop.f32.mrf.mxu0
        %v1060 = vadd.f32 0.0, %v1059
        %v1061 = vpop.f32.mrf.mxu0
        %1062 = vdwg.mxu0
        %v1064 = vunpack.c.l.b16 %v1003
        %v1065 = vpack.c.b16 %v1064, %v1064
        %1066 = vrot.lane.b32.xlu0 %v1065, 120
        %v1067 = vpop.permute.xlu0 %1066
        %1068 = vrot.lane.b32.xlu0 %v1010, 120
        %v1069 = vpop.permute.xlu0 %1068
        %v1071 = vsel %vm1011, %v1067, 0
        %v1074 = vsel %vm1011, %v1069, 0
        %1076 = vmatpush.bf16.xpose.msra.mxu0 0
        %1077 = vmatpush.bf16.xpose.msra.mxu0 0
        %1078 = vmatpush.bf16.xpose.msra.mxu0 0
        %1079 = vmatpush.bf16.xpose.msra.mxu0 0
        %1080 = vmatpush.bf16.xpose.msra.mxu0 0
        %1081 = vmatpush.bf16.xpose.msra.mxu0 0
        %1082 = vmatpush.bf16.xpose.msra.mxu0 0
        %1083 = vmatpush.bf16.xpose.msra.mxu0 %v1074
        %1084 = vmatmul.bf16.gmra.mxu0 %v1071
        %v1085 = vpop.f32.mrf.mxu0
        %v1086 = vadd.f32 0.0, %v1085
        %v1087 = vpop.f32.mrf.mxu0
        %1088 = vdwg.mxu0
        %v1089 = vmul.f32 %v1086, 0.35355338
        %v1090 = vsel %vm813, 1e-09, %v1089
        %v1091 = vsel %vm1033, %v1090, -inf
        %1092 = vmax.xlane.f32.xlu0 %v1091
        %v1093 = vpop.xlane.xlu0 %1092
        %v1094 = vsub.f32 %v1090, %v1093
        %v1095 = vmul.f32 %v1094, 1.442695
        %v1096 = vpow.pop %v1095
        %v1097 = vsel %vm1033, %v1096, 0.0
        %1098 = vadd.xlane.f32.xlu0 %v1097
        %v1099 = vpop.xlane.xlu0 %1098
        %v1100 = vrcp.pop %v1099
        %v1101 = vmul.f32 %v1096, %v1100
        %v1102 = vpack.c.bf16 %v1101, %v1101
        %v1105 = vsel %vm1033, %v1102, 0
        %1107 = vmatpush.bf16.msra.mxu0 0
        %1108 = vmatpush.bf16.msra.mxu0 0
        %1109 = vmatpush.bf16.msra.mxu0 0
        %1110 = vmatpush.bf16.msra.mxu0 0
        %1111 = vmatpush.bf16.msra.mxu0 0
        %1112 = vmatpush.bf16.msra.mxu0 0
        %1113 = vmatpush.bf16.msra.mxu0 0
        %1114 = vmatpush.bf16.msra.mxu0 %v1069
        %1115 = vmatmul.bf16.gmra.mxu0 %v1105
        %v1116 = vpop.f32.mrf.mxu0
        %v1117 = vadd.f32 0.0, %v1116
        %v1118 = vpop.f32.mrf.mxu0
        %1119 = vdwg.mxu0
        %1120 = vrot.lane.b32.xlu0 %v1065, 112
        %v1121 = vpop.permute.xlu0 %1120
        %1122 = vrot.lane.b32.xlu0 %v1010, 112
        %v1123 = vpop.permute.xlu0 %1122
        %v1125 = vsel %vm1011, %v1121, 0
        %v1128 = vsel %vm1011, %v1123, 0
        %1130 = vmatpush.bf16.xpose.msra.mxu0 0
        %1131 = vmatpush.bf16.xpose.msra.mxu0 0
        %1132 = vmatpush.bf16.xpose.msra.mxu0 0
        %1133 = vmatpush.bf16.xpose.msra.mxu0 0
        %1134 = vmatpush.bf16.xpose.msra.mxu0 0
        %1135 = vmatpush.bf16.xpose.msra.mxu0 0
        %1136 = vmatpush.bf16.xpose.msra.mxu0 0
        %1137 = vmatpush.bf16.xpose.msra.mxu0 %v1128
        %1138 = vmatmul.bf16.gmra.mxu0 %v1125
        %v1139 = vpop.f32.mrf.mxu0
        %v1140 = vadd.f32 0.0, %v1139
        %v1141 = vpop.f32.mrf.mxu0
        %1142 = vdwg.mxu0
        %v1143 = vmul.f32 %v1140, 0.35355338
        %v1144 = vsel %vm813, 1e-09, %v1143
        %v1145 = vsel %vm1033, %v1144, -inf
        %1146 = vmax.xlane.f32.xlu0 %v1145
        %v1147 = vpop.xlane.xlu0 %1146
        %v1148 = vsub.f32 %v1144, %v1147
        %v1149 = vmul.f32 %v1148, 1.442695
        %v1150 = vpow.pop %v1149
        %v1151 = vsel %vm1033, %v1150, 0.0
        %1152 = vadd.xlane.f32.xlu0 %v1151
        %v1153 = vpop.xlane.xlu0 %1152
        %v1154 = vrcp.pop %v1153
        %v1155 = vmul.f32 %v1150, %v1154
        %v1156 = vpack.c.bf16 %v1155, %v1155
        %v1159 = vsel %vm1033, %v1156, 0
        %1161 = vmatpush.bf16.msra.mxu0 0
        %1162 = vmatpush.bf16.msra.mxu0 0
        %1163 = vmatpush.bf16.msra.mxu0 0
        %1164 = vmatpush.bf16.msra.mxu0 0
        %1165 = vmatpush.bf16.msra.mxu0 0
        %1166 = vmatpush.bf16.msra.mxu0 0
        %1167 = vmatpush.bf16.msra.mxu0 0
        %1168 = vmatpush.bf16.msra.mxu0 %v1123
        %1169 = vmatmul.bf16.gmra.mxu0 %v1159
        %v1170 = vpop.f32.mrf.mxu0
        %v1171 = vadd.f32 0.0, %v1170
        %v1172 = vpop.f32.mrf.mxu0
        %1173 = vdwg.mxu0
        %1174 = vrot.lane.b32.xlu0 %v1065, 104
        %v1175 = vpop.permute.xlu0 %1174
        %1176 = vrot.lane.b32.xlu0 %v1010, 104
        %v1177 = vpop.permute.xlu0 %1176
        %v1179 = vsel %vm1011, %v1175, 0
        %v1182 = vsel %vm1011, %v1177, 0
        %1184 = vmatpush.bf16.xpose.msra.mxu0 0
        %1185 = vmatpush.bf16.xpose.msra.mxu0 0
        %1186 = vmatpush.bf16.xpose.msra.mxu0 0
        %1187 = vmatpush.bf16.xpose.msra.mxu0 0
        %1188 = vmatpush.bf16.xpose.msra.mxu0 0
        %1189 = vmatpush.bf16.xpose.msra.mxu0 0
        %1190 = vmatpush.bf16.xpose.msra.mxu0 0
        %1191 = vmatpush.bf16.xpose.msra.mxu0 %v1182
        %1192 = vmatmul.bf16.gmra.mxu0 %v1179
        %v1193 = vpop.f32.mrf.mxu0
        %v1194 = vadd.f32 0.0, %v1193
        %v1195 = vpop.f32.mrf.mxu0
        %1196 = vdwg.mxu0
        %v1197 = vmul.f32 %v1194, 0.35355338
        %v1198 = vsel %vm813, 1e-09, %v1197
        %v1199 = vsel %vm1033, %v1198, -inf
        %1200 = vmax.xlane.f32.xlu0 %v1199
        %v1201 = vpop.xlane.xlu0 %1200
        %v1202 = vsub.f32 %v1198, %v1201
        %v1203 = vmul.f32 %v1202, 1.442695
        %v1204 = vpow.pop %v1203
        %v1205 = vsel %vm1033, %v1204, 0.0
        %1206 = vadd.xlane.f32.xlu0 %v1205
        %v1207 = vpop.xlane.xlu0 %1206
        %v1208 = vrcp.pop %v1207
        %v1209 = vmul.f32 %v1204, %v1208
        %v1210 = vpack.c.bf16 %v1209, %v1209
        %v1213 = vsel %vm1033, %v1210, 0
        %1215 = vmatpush.bf16.msra.mxu0 0
        %1216 = vmatpush.bf16.msra.mxu0 0
        %1217 = vmatpush.bf16.msra.mxu0 0
        %1218 = vmatpush.bf16.msra.mxu0 0
        %1219 = vmatpush.bf16.msra.mxu0 0
        %1220 = vmatpush.bf16.msra.mxu0 0
        %1221 = vmatpush.bf16.msra.mxu0 0
        %1222 = vmatpush.bf16.msra.mxu0 %v1177
        %1223 = vmatmul.bf16.gmra.mxu0 %v1213
        %v1224 = vpop.f32.mrf.mxu0
        %v1225 = vadd.f32 0.0, %v1224
        %v1226 = vpop.f32.mrf.mxu0
        %1227 = vdwg.mxu0
        %1229 = vrot.lane.b32.xlu0 %v1117, 8
        %v1230 = vpop.permute.xlu0 %1229
        %1233 = vrot.lane.b32.xlu0 %v1171, 16
        %v1234 = vpop.permute.xlu0 %1233
        %1237 = vrot.lane.b32.xlu0 %v1225, 24
        %v1238 = vpop.permute.xlu0 %1237
        %v1240 = vsel %vm1011, %v1060, %v1230
        %v1241 = vsel %vm1033, %v1240, %v1234
        %vm1242 = vcmask 195584
        %v1243 = vsel %vm1242, %v1241, %v1238
        %v1244 = vld [vmem:[#allocation8] sm:$0xf]
        %v1245 = vld [vmem:[#allocation8 + $0x4] sm:$0xf]
        %v1246 = vld [vmem:[#allocation8 + $0x8] sm:$0xf]
        %v1247 = vld [vmem:[#allocation8 + $0xc] sm:$0xf]
        %v1248 = vpack.c.bf16 %v1243, %v1243
        %v1253 = vunpack.c.l.b16 %v1244
        %v1254 = vunpack.c.l.b16 %v1245
        %v1255 = vunpack.c.l.b16 %v1246
        %v1256 = vunpack.c.l.b16 %v1247
        %v1257 = vpack.c.b16 %v1254, %v1253
        %v1258 = vpack.c.b16 %v1256, %v1255
        %v1262 = vsel %vm816, %v1248, 0
        %1264 = vmatpush.bf16.msra.mxu0 0
        %1265 = vmatpush.bf16.msra.mxu0 0
        %1266 = vmatpush.bf16.msra.mxu0 0
        %1267 = vmatpush.bf16.msra.mxu0 0
        %1268 = vmatpush.bf16.msra.mxu0 0
        %1269 = vmatpush.bf16.msra.mxu0 0
        %1270 = vmatpush.bf16.msra.mxu0 %v1258
        %1271 = vmatpush.bf16.msra.mxu0 %v1257
        %1272 = vmatmul.bf16.gmra.mxu0 %v1262
        %v1273 = vpop.f32.mrf.mxu0
        %v1274 = vadd.f32 0.0, %v1273
        %v1275 = vpop.f32.mrf.mxu0
        %1276 = vdwg.mxu0
        %v1277 = vadd.f32 %v808, %v1274
        %v1278 = vsel %vm816, %v1277, 0.0
        %1279 = vadd.xlane.f32.xlu0 %v1278
        %v1280 = vpop.xlane.xlu0 %1279
        %v1281 = vmul.f32 %v1280, %v829
        %v1282 = vsub.f32 %v1277, %v1281
        %v1283 = vmul.f32 %v1282, %v1282
        %v1284 = vsel %vm816, %v1283, 0.0
        %1285 = vadd.xlane.f32.xlu0 %v1284
        %v1286 = vpop.xlane.xlu0 %1285
        %v1287 = vmul.f32 %v1286, 0.032258064
        %v1288 = vrsqrt.pop %v1287
        %v1289 = vmul.f32 %v1288, %v1287
        %v1290 = vmul.f32 %v1289, %v1288
        %v1291 = vmul.f32 0.5, %v1290
        %v1292 = vsub.f32 1.5, %v1291
        %v1293 = vmul.f32 %v1288, %v1292
        %v1294 = vmul.f32 %v1287, %v1293
        %vm1295 = vcmp.eq.f32.partialorder %v1287, inf
        %v1296 = vsel %vm1295, %v1287, %v1294
        %vm1297 = vcmp.eq.f32.partialorder %v1287, 0.0
        %v1298 = vand.u32 %v1287, 2147483648
        %v1299 = vsel %vm1297, %v1298, %v1296
        %v1300 = vadd.f32 %v1299, 1e-06
        %v1301 = vrcp.pop %v1300
        %v1302 = vmul.f32 %v1300, %v1301
        %v1303 = vsub.f32 1.0, %v1302
        %v1304 = vmul.f32 %v1301, %v1303
        %v1305 = vadd.f32 %v1301, %v1304
        %vm1306 = vweird.f32 %v1300
        %vm1307 = vweird.f32 %v1301
        %vm1308 = vmor %vm1306, %vm1307
        %v1309 = vsel %vm1308, %v1301, %v1305
        %v1310 = vand.u32 2147483647, %v1300
        %vm1311 = vcmp.eq.f32.partialorder %v1310, 8.507059e+37
        %v1312 = vand.u32 %v1300, 2147483648
        %v1313 = vor.u32 1.1754944e-38, %v1312
        %v1314 = vsel %vm1311, %v1313, %v1309
        %v1315 = vld [vmem:[%s15] sm:$0x1]
        %v1317 = vperm.slane %v1315, 0
        %v1319 = vmul.f32 %v1317, %v1282
        %v1320 = vmul.f32 %v1319, %v1314
        %v1321 = vld [vmem:[%s16] sm:$0x1]
        %v1323 = vperm.slane %v1321, 0
        %v1325 = vadd.f32 %v1320, %v1323
        %v1326 = vld [vmem:[#allocation10] sm:$0xf]
        %v1327 = vld [vmem:[#allocation10 + $0x4] sm:$0xf]
        %v1328 = vld [vmem:[#allocation10 + $0x8] sm:$0xf]
        %v1329 = vld [vmem:[#allocation10 + $0xc] sm:$0xf]
        %v1330 = vpack.c.bf16 %v1325, %v1325
        %v1335 = vunpack.c.l.b16 %v1326
        %v1336 = vunpack.c.l.b16 %v1327
        %v1337 = vunpack.c.l.b16 %v1328
        %v1338 = vunpack.c.l.b16 %v1329
        %v1339 = vpack.c.b16 %v1336, %v1335
        %v1340 = vpack.c.b16 %v1338, %v1337
        %v1344 = vsel %vm816, %v1330, 0
        %1346 = vmatpush.bf16.msra.mxu0 0
        %1347 = vmatpush.bf16.msra.mxu0 0
        %1348 = vmatpush.bf16.msra.mxu0 0
        %1349 = vmatpush.bf16.msra.mxu0 0
        %1350 = vmatpush.bf16.msra.mxu0 0
        %1351 = vmatpush.bf16.msra.mxu0 0
        %1352 = vmatpush.bf16.msra.mxu0 %v1340
        %1353 = vmatpush.bf16.msra.mxu0 %v1339
        %1354 = vmatmul.bf16.gmra.mxu0 %v1344
        %v1355 = vpop.f32.mrf.mxu0
        %v1356 = vadd.f32 0.0, %v1355
        %v1357 = vpop.f32.mrf.mxu0
        %1358 = vdwg.mxu0
        %v1359 = vpack.c.bf16 %v811, %v811
        %v1361 = vsel %vm816, %v1359, 0
        %1363 = vmatpush.bf16.msra.mxu0 0
        %1364 = vmatpush.bf16.msra.mxu0 0
        %1365 = vmatpush.bf16.msra.mxu0 0
        %1366 = vmatpush.bf16.msra.mxu0 0
        %1367 = vmatpush.bf16.msra.mxu0 0
        %1368 = vmatpush.bf16.msra.mxu0 0
        %1369 = vmatpush.bf16.msra.mxu0 %v1340
        %1370 = vmatpush.bf16.msra.mxu0 %v1339
        %1371 = vmatmul.bf16.gmra.mxu0 %v1361
        %v1372 = vpop.f32.mrf.mxu0
        %v1373 = vadd.f32 0.0, %v1372
        %v1374 = vpop.f32.mrf.mxu0
        %1375 = vdwg.mxu0
        %v1376 = vpack.c.bf16 %v1356, %v1356
        %v1377 = vpack.c.bf16 %v1373, %v1373
        %v1379 = vsel %vm1011, %v1376, 0
        %v1382 = vsel %vm1011, %v1377, 0
        %1384 = vmatpush.bf16.xpose.msra.mxu0 0
        %1385 = vmatpush.bf16.xpose.msra.mxu0 0
        %1386 = vmatpush.bf16.xpose.msra.mxu0 0
        %1387 = vmatpush.bf16.xpose.msra.mxu0 0
        %1388 = vmatpush.bf16.xpose.msra.mxu0 0
        %1389 = vmatpush.bf16.xpose.msra.mxu0 0
        %1390 = vmatpush.bf16.xpose.msra.mxu0 0
        %1391 = vmatpush.bf16.xpose.msra.mxu0 %v1382
        %1392 = vmatmul.bf16.gmra.mxu0 %v1379
        %v1393 = vpop.f32.mrf.mxu0
        %v1394 = vadd.f32 0.0, %v1393
        %v1395 = vpop.f32.mrf.mxu0
        %1396 = vdwg.mxu0
        %v1397 = vmul.f32 %v1394, 0.35355338
        %v1398 = vsel %vm815, 1e-09, %v1397
        %v1399 = vsel %vm1011, %v1398, -inf
        %1400 = vmax.xlane.f32.xlu0 %v1399
        %v1401 = vpop.xlane.xlu0 %1400
        %v1402 = vsub.f32 %v1398, %v1401
        %v1403 = vmul.f32 %v1402, 1.442695
        %v1404 = vpow.pop %v1403
        %v1405 = vsel %vm1011, %v1404, 0.0
        %1406 = vadd.xlane.f32.xlu0 %v1405
        %v1407 = vpop.xlane.xlu0 %1406
        %v1408 = vrcp.pop %v1407
        %v1409 = vmul.f32 %v1404, %v1408
        %v1410 = vpack.c.bf16 %v1409, %v1409
        %v1412 = vsel %vm1011, %v1410, 0
        %vm1414 = vcmask 1043456
        %v1415 = vsel %vm1414, %v1377, 0
        %1417 = vmatpush.bf16.msra.mxu0 0
        %1418 = vmatpush.bf16.msra.mxu0 0
        %1419 = vmatpush.bf16.msra.mxu0 0
        %1420 = vmatpush.bf16.msra.mxu0 0
        %1421 = vmatpush.bf16.msra.mxu0 0
        %1422 = vmatpush.bf16.msra.mxu0 0
        %1423 = vmatpush.bf16.msra.mxu0 0
        %1424 = vmatpush.bf16.msra.mxu0 %v1415
        %1425 = vmatmul.bf16.gmra.mxu0 %v1412
        %v1426 = vpop.f32.mrf.mxu0
        %v1427 = vadd.f32 0.0, %v1426
        %v1428 = vpop.f32.mrf.mxu0
        %1429 = vdwg.mxu0
        %v1431 = vunpack.c.l.b16 %v1376
        %v1432 = vpack.c.b16 %v1431, %v1431
        %1433 = vrot.lane.b32.xlu0 %v1432, 120
        %v1434 = vpop.permute.xlu0 %1433
        %v1436 = vunpack.c.l.b16 %v1377
        %v1437 = vpack.c.b16 %v1436, %v1436
        %1438 = vrot.lane.b32.xlu0 %v1437, 120
        %v1439 = vpop.permute.xlu0 %1438
        %v1441 = vsel %vm1011, %v1434, 0
        %v1444 = vsel %vm1011, %v1439, 0
        %1446 = vmatpush.bf16.xpose.msra.mxu0 0
        %1447 = vmatpush.bf16.xpose.msra.mxu0 0
        %1448 = vmatpush.bf16.xpose.msra.mxu0 0
        %1449 = vmatpush.bf16.xpose.msra.mxu0 0
        %1450 = vmatpush.bf16.xpose.msra.mxu0 0
        %1451 = vmatpush.bf16.xpose.msra.mxu0 0
        %1452 = vmatpush.bf16.xpose.msra.mxu0 0
        %1453 = vmatpush.bf16.xpose.msra.mxu0 %v1444
        %1454 = vmatmul.bf16.gmra.mxu0 %v1441
        %v1455 = vpop.f32.mrf.mxu0
        %v1456 = vadd.f32 0.0, %v1455
        %v1457 = vpop.f32.mrf.mxu0
        %1458 = vdwg.mxu0
        %v1459 = vmul.f32 %v1456, 0.35355338
        %v1460 = vsel %vm815, 1e-09, %v1459
        %v1461 = vsel %vm1011, %v1460, -inf
        %1462 = vmax.xlane.f32.xlu0 %v1461
        %v1463 = vpop.xlane.xlu0 %1462
        %v1464 = vsub.f32 %v1460, %v1463
        %v1465 = vmul.f32 %v1464, 1.442695
        %v1466 = vpow.pop %v1465
        %v1467 = vsel %vm1011, %v1466, 0.0
        %1468 = vadd.xlane.f32.xlu0 %v1467
        %v1469 = vpop.xlane.xlu0 %1468
        %v1470 = vrcp.pop %v1469
        %v1471 = vmul.f32 %v1466, %v1470
        %v1472 = vpack.c.bf16 %v1471, %v1471
        %v1474 = vsel %vm1011, %v1472, 0
        %v1476 = vsel %vm1414, %v1439, 0
        %1478 = vmatpush.bf16.msra.mxu0 0
        %1479 = vmatpush.bf16.msra.mxu0 0
        %1480 = vmatpush.bf16.msra.mxu0 0
        %1481 = vmatpush.bf16.msra.mxu0 0
        %1482 = vmatpush.bf16.msra.mxu0 0
        %1483 = vmatpush.bf16.msra.mxu0 0
        %1484 = vmatpush.bf16.msra.mxu0 0
        %1485 = vmatpush.bf16.msra.mxu0 %v1476
        %1486 = vmatmul.bf16.gmra.mxu0 %v1474
        %v1487 = vpop.f32.mrf.mxu0
        %v1488 = vadd.f32 0.0, %v1487
        %v1489 = vpop.f32.mrf.mxu0
        %1490 = vdwg.mxu0
        %1491 = vrot.lane.b32.xlu0 %v1432, 112
        %v1492 = vpop.permute.xlu0 %1491
        %1493 = vrot.lane.b32.xlu0 %v1437, 112
        %v1494 = vpop.permute.xlu0 %1493
        %v1496 = vsel %vm1011, %v1492, 0
        %v1499 = vsel %vm1011, %v1494, 0
        %1501 = vmatpush.bf16.xpose.msra.mxu0 0
        %1502 = vmatpush.bf16.xpose.msra.mxu0 0
        %1503 = vmatpush.bf16.xpose.msra.mxu0 0
        %1504 = vmatpush.bf16.xpose.msra.mxu0 0
        %1505 = vmatpush.bf16.xpose.msra.mxu0 0
        %1506 = vmatpush.bf16.xpose.msra.mxu0 0
        %1507 = vmatpush.bf16.xpose.msra.mxu0 0
        %1508 = vmatpush.bf16.xpose.msra.mxu0 %v1499
        %1509 = vmatmul.bf16.gmra.mxu0 %v1496
        %v1510 = vpop.f32.mrf.mxu0
        %v1511 = vadd.f32 0.0, %v1510
        %v1512 = vpop.f32.mrf.mxu0
        %1513 = vdwg.mxu0
        %v1514 = vmul.f32 %v1511, 0.35355338
        %v1515 = vsel %vm815, 1e-09, %v1514
        %v1516 = vsel %vm1011, %v1515, -inf
        %1517 = vmax.xlane.f32.xlu0 %v1516
        %v1518 = vpop.xlane.xlu0 %1517
        %v1519 = vsub.f32 %v1515, %v1518
        %v1520 = vmul.f32 %v1519, 1.442695
        %v1521 = vpow.pop %v1520
        %v1522 = vsel %vm1011, %v1521, 0.0
        %1523 = vadd.xlane.f32.xlu0 %v1522
        %v1524 = vpop.xlane.xlu0 %1523
        %v1525 = vrcp.pop %v1524
        %v1526 = vmul.f32 %v1521, %v1525
        %v1527 = vpack.c.bf16 %v1526, %v1526
        %v1529 = vsel %vm1011, %v1527, 0
        %v1531 = vsel %vm1414, %v1494, 0
        %1533 = vmatpush.bf16.msra.mxu0 0
        %1534 = vmatpush.bf16.msra.mxu0 0
        %1535 = vmatpush.bf16.msra.mxu0 0
        %1536 = vmatpush.bf16.msra.mxu0 0
        %1537 = vmatpush.bf16.msra.mxu0 0
        %1538 = vmatpush.bf16.msra.mxu0 0
        %1539 = vmatpush.bf16.msra.mxu0 0
        %1540 = vmatpush.bf16.msra.mxu0 %v1531
        %1541 = vmatmul.bf16.gmra.mxu0 %v1529
        %v1542 = vpop.f32.mrf.mxu0
        %v1543 = vadd.f32 0.0, %v1542
        %v1544 = vpop.f32.mrf.mxu0
        %1545 = vdwg.mxu0
        %1546 = vrot.lane.b32.xlu0 %v1432, 104
        %v1547 = vpop.permute.xlu0 %1546
        %1548 = vrot.lane.b32.xlu0 %v1437, 104
        %v1549 = vpop.permute.xlu0 %1548
        %v1551 = vsel %vm1011, %v1547, 0
        %v1554 = vsel %vm1011, %v1549, 0
        %1556 = vmatpush.bf16.xpose.msra.mxu0 0
        %1557 = vmatpush.bf16.xpose.msra.mxu0 0
        %1558 = vmatpush.bf16.xpose.msra.mxu0 0
        %1559 = vmatpush.bf16.xpose.msra.mxu0 0
        %1560 = vmatpush.bf16.xpose.msra.mxu0 0
        %1561 = vmatpush.bf16.xpose.msra.mxu0 0
        %1562 = vmatpush.bf16.xpose.msra.mxu0 0
        %1563 = vmatpush.bf16.xpose.msra.mxu0 %v1554
        %1564 = vmatmul.bf16.gmra.mxu0 %v1551
        %v1565 = vpop.f32.mrf.mxu0
        %v1566 = vadd.f32 0.0, %v1565
        %v1567 = vpop.f32.mrf.mxu0
        %1568 = vdwg.mxu0
        %v1569 = vmul.f32 %v1566, 0.35355338
        %v1570 = vsel %vm815, 1e-09, %v1569
        %v1571 = vsel %vm1011, %v1570, -inf
        %1572 = vmax.xlane.f32.xlu0 %v1571
        %v1573 = vpop.xlane.xlu0 %1572
        %v1574 = vsub.f32 %v1570, %v1573
        %v1575 = vmul.f32 %v1574, 1.442695
        %v1576 = vpow.pop %v1575
        %v1577 = vsel %vm1011, %v1576, 0.0
        %1578 = vadd.xlane.f32.xlu0 %v1577
        %v1579 = vpop.xlane.xlu0 %1578
        %v1580 = vrcp.pop %v1579
        %v1581 = vmul.f32 %v1576, %v1580
        %v1582 = vpack.c.bf16 %v1581, %v1581
        %v1584 = vsel %vm1011, %v1582, 0
        %v1586 = vsel %vm1414, %v1549, 0
        %1588 = vmatpush.bf16.msra.mxu0 0
        %1589 = vmatpush.bf16.msra.mxu0 0
        %1590 = vmatpush.bf16.msra.mxu0 0
        %1591 = vmatpush.bf16.msra.mxu0 0
        %1592 = vmatpush.bf16.msra.mxu0 0
        %1593 = vmatpush.bf16.msra.mxu0 0
        %1594 = vmatpush.bf16.msra.mxu0 0
        %1595 = vmatpush.bf16.msra.mxu0 %v1586
        %1596 = vmatmul.bf16.gmra.mxu0 %v1584
        %v1597 = vpop.f32.mrf.mxu0
        %v1598 = vadd.f32 0.0, %v1597
        %v1599 = vpop.f32.mrf.mxu0
        %1600 = vdwg.mxu0
        %1602 = vrot.lane.b32.xlu0 %v1488, 8
        %v1603 = vpop.permute.xlu0 %1602
        %1606 = vrot.lane.b32.xlu0 %v1543, 16
        %v1607 = vpop.permute.xlu0 %1606
        %1610 = vrot.lane.b32.xlu0 %v1598, 24
        %v1611 = vpop.permute.xlu0 %1610
        %v1613 = vsel %vm1011, %v1427, %v1603
        %v1614 = vsel %vm1033, %v1613, %v1607
        %v1615 = vsel %vm1242, %v1614, %v1611
        %v1616 = vld [vmem:[#allocation11] sm:$0xf]
        %v1617 = vld [vmem:[#allocation11 + $0x4] sm:$0xf]
        %v1618 = vld [vmem:[#allocation11 + $0x8] sm:$0xf]
        %v1619 = vld [vmem:[#allocation11 + $0xc] sm:$0xf]
        %v1620 = vpack.c.bf16 %v1615, %v1615
        %v1625 = vunpack.c.l.b16 %v1616
        %v1626 = vunpack.c.l.b16 %v1617
        %v1627 = vunpack.c.l.b16 %v1618
        %v1628 = vunpack.c.l.b16 %v1619
        %v1629 = vpack.c.b16 %v1626, %v1625
        %v1630 = vpack.c.b16 %v1628, %v1627
        %v1634 = vsel %vm816, %v1620, 0
        %1636 = vmatpush.bf16.msra.mxu0 0
        %1637 = vmatpush.bf16.msra.mxu0 0
        %1638 = vmatpush.bf16.msra.mxu0 0
        %1639 = vmatpush.bf16.msra.mxu0 0
        %1640 = vmatpush.bf16.msra.mxu0 0
        %1641 = vmatpush.bf16.msra.mxu0 0
        %1642 = vmatpush.bf16.msra.mxu0 %v1630
        %1643 = vmatpush.bf16.msra.mxu0 %v1629
        %1644 = vmatmul.bf16.gmra.mxu0 %v1634
        %v1645 = vpop.f32.mrf.mxu0
        %v1646 = vadd.f32 0.0, %v1645
        %v1647 = vpop.f32.mrf.mxu0
        %1648 = vdwg.mxu0
        %v1649 = vadd.f32 %v1277, %v1646
        %v1650 = vsel %vm816, %v1649, 0.0
        %1651 = vadd.xlane.f32.xlu0 %v1650
        %v1652 = vpop.xlane.xlu0 %1651
        %v1653 = vmul.f32 %v1652, %v829
        %v1654 = vsub.f32 %v1649, %v1653
        %v1655 = vmul.f32 %v1654, %v1654
        %v1656 = vsel %vm816, %v1655, 0.0
        %1657 = vadd.xlane.f32.xlu0 %v1656
        %v1658 = vpop.xlane.xlu0 %1657
        %v1659 = vmul.f32 %v1658, 0.032258064
        %v1660 = vrsqrt.pop %v1659
        %v1661 = vmul.f32 %v1660, %v1659
        %v1662 = vmul.f32 %v1661, %v1660
        %v1663 = vmul.f32 0.5, %v1662
        %v1664 = vsub.f32 1.5, %v1663
        %v1665 = vmul.f32 %v1660, %v1664
        %v1666 = vmul.f32 %v1659, %v1665
        %vm1667 = vcmp.eq.f32.partialorder %v1659, inf
        %v1668 = vsel %vm1667, %v1659, %v1666
        %vm1669 = vcmp.eq.f32.partialorder %v1659, 0.0
        %v1670 = vand.u32 %v1659, 2147483648
        %v1671 = vsel %vm1669, %v1670, %v1668
        %v1672 = vadd.f32 %v1671, 1e-06
        %v1673 = vrcp.pop %v1672
        %v1674 = vmul.f32 %v1672, %v1673
        %v1675 = vsub.f32 1.0, %v1674
        %v1676 = vmul.f32 %v1673, %v1675
        %v1677 = vadd.f32 %v1673, %v1676
        %vm1678 = vweird.f32 %v1672
        %vm1679 = vweird.f32 %v1673
        %vm1680 = vmor %vm1678, %vm1679
        %v1681 = vsel %vm1680, %v1673, %v1677
        %v1682 = vand.u32 2147483647, %v1672
        %vm1683 = vcmp.eq.f32.partialorder %v1682, 8.507059e+37
        %v1684 = vand.u32 %v1672, 2147483648
        %v1685 = vor.u32 1.1754944e-38, %v1684
        %v1686 = vsel %vm1683, %v1685, %v1681
        %v1687 = vld [vmem:[%s17] sm:$0x1]
        %v1689 = vperm.slane %v1687, 0
        %v1691 = vmul.f32 %v1689, %v1654
        %v1692 = vmul.f32 %v1691, %v1686
        %v1693 = vld [vmem:[%s18] sm:$0x1]
        %v1695 = vperm.slane %v1693, 0
        %v1697 = vadd.f32 %v1692, %v1695
        %v1698 = vld [vmem:[%s9] sm:$0xf]
        %v1699 = vld [vmem:[%s9 + $0x4] sm:$0xf]
        %v1700 = vld [vmem:[%s9 + $0x8] sm:$0xf]
        %v1701 = vld [vmem:[%s9 + $0xc] sm:$0xf]
        %v1702 = vpack.c.bf16 %v1697, %v1697
        %v1703 = vld [vmem:[%s10] sm:$0x1]
        %v1705 = vperm.slane %v1703, 0
        %v1711 = vunpack.c.l.b16 %v1698
        %v1712 = vunpack.c.l.b16 %v1699
        %v1713 = vunpack.c.l.b16 %v1700
        %v1714 = vunpack.c.l.b16 %v1701
        %v1715 = vpack.c.b16 %v1712, %v1711
        %v1716 = vpack.c.b16 %v1714, %v1713
        %v1720 = vsel %vm816, %v1702, 0
        %1722 = vmatpush.bf16.msra.mxu0 0
        %1723 = vmatpush.bf16.msra.mxu0 0
        %1724 = vmatpush.bf16.msra.mxu0 0
        %1725 = vmatpush.bf16.msra.mxu0 0
        %1726 = vmatpush.bf16.msra.mxu0 0
        %1727 = vmatpush.bf16.msra.mxu0 0
        %1728 = vmatpush.bf16.msra.mxu0 %v1716
        %1729 = vmatpush.bf16.msra.mxu0 %v1715
        %1730 = vmatmul.bf16.gmra.mxu0 %v1720
        %v1731 = vpop.f32.mrf.mxu0
        %v1732 = vadd.f32 %v1705, %v1731
        %v1733 = vpop.f32.mrf.mxu0
        %1734 = vdwg.mxu0
        %v1735 = vmax.f32 %v1732, 0.0
        %v1736 = vld [vmem:[%s11] sm:$0xf]
        %v1737 = vld [vmem:[%s11 + $0x4] sm:$0xf]
        %v1738 = vld [vmem:[%s11 + $0x8] sm:$0xf]
        %v1739 = vld [vmem:[%s11 + $0xc] sm:$0xf]
        %v1740 = vld [vmem:[%s11 + $0x10] sm:$0xf]
        %v1741 = vld [vmem:[%s11 + $0x14] sm:$0xf]
        %v1742 = vld [vmem:[%s11 + $0x18] sm:$0xf]
        %v1743 = vld [vmem:[%s11 + $0x1c] sm:$0xf]
        %v1744 = vpack.c.bf16 %v1735, %v1735
        %v1753 = vunpack.c.l.b16 %v1736
        %v1754 = vunpack.c.l.b16 %v1737
        %v1755 = vunpack.c.l.b16 %v1738
        %v1756 = vunpack.c.l.b16 %v1739
        %v1757 = vunpack.c.l.b16 %v1740
        %v1758 = vunpack.c.l.b16 %v1741
        %v1759 = vunpack.c.l.b16 %v1742
        %v1760 = vunpack.c.l.b16 %v1743
        %v1761 = vpack.c.b16 %v1754, %v1753
        %v1762 = vpack.c.b16 %v1756, %v1755
        %v1763 = vpack.c.b16 %v1758, %v1757
        %v1764 = vpack.c.b16 %v1760, %v1759
        %vm1769 = vcmask 523264
        %v1771 = vsel %vm1769, %v1744, 0
        %1773 = vmatpush.bf16.msra.mxu0 0
        %1774 = vmatpush.bf16.msra.mxu0 0
        %1775 = vmatpush.bf16.msra.mxu0 0
        %1776 = vmatpush.bf16.msra.mxu0 0
        %1777 = vmatpush.bf16.msra.mxu0 %v1764
        %1778 = vmatpush.bf16.msra.mxu0 %v1763
        %1779 = vmatpush.bf16.msra.mxu0 %v1762
        %1780 = vmatpush.bf16.msra.mxu0 %v1761
        %1781 = vmatmul.bf16.gmra.mxu0 %v1771
        %v1782 = vpop.f32.mrf.mxu0
        %v1783 = vadd.f32 0.0, %v1782
        %v1784 = vpop.f32.mrf.mxu0
        %1785 = vdwg.mxu0
        %v1786 = vadd.f32 %v1649, %v1783
        %v1787 = vld [vmem:[%s12] sm:$0x1]
        %v1789 = vperm.slane %v1787, 0
        %v1791 = vadd.f32 %v1786, %v1789
        %1792 = vst.msk [vmem:[%s790] sm:$0xff] %vm816, %v1791
        %s1793 = sand.u32 %s489, 1
        %s1794 = scalar_lea.sflag [#allocation4], %s1793
        %s1795 = sand.u32 %s489, 1
        %s1796 = smul.addr %s1795, 8
        %s1797 = scalar_lea.vmem [#allocation13], %s1796
        // Predicated region
        $region121: #{tpu_custom_call.1} parent=95 // pred_check
          %p1798 = pneg %p499
        $region122: #{tpu_custom_call.1} parent=95 // pred_check_branch
          %1800 = sbr.rel (%p1798) target = $region124
        $region123: #{tpu_custom_call.1} parent=95 // pred_region
          %1802 = vsyncadd %s1794, 0
          %s1803 = smul.addr %s45, 2
          %s1804 = sadd.s32 %s46, %s1803
          %s1805 = smul.addr %s1804, 8
          %s1806 = scalar_lea.hbm %s19, %s1805
          %s1808 = sshll.u32 %s1797, 4
          %s1809 = int_to_ptr.vmem [resolvable:$true] %s1808
          %s1810 = sshll.u32 %s1806, 4
          %s1811 = int_to_ptr.hbm [resolvable:$true] %s1810
          %1813 = dma.vmem_to_hbm [thread:$0]  %s1809, 128, %s1811, %s1794
        $region124: #{tpu_custom_call.1} parent=95 // pred_fallthru
          _
      $region96: #{tpu_custom_call.1} parent=5 // pred_fallthru
        _
      %p1814 = scmp.le.s32.totalorder 2, %s36
      // Predicated region
      $region125: #{tpu_custom_call.1} parent=5 // pred_check
        %p1815 = pneg %p1814
      $region126: #{tpu_custom_call.1} parent=5 // pred_check_branch
        %1817 = sbr.rel (%p1815) target = $region128
      $region127: #{tpu_custom_call.1} parent=5 // pred_region
        %s1818 = ssub.s32 %s36, 2
        // Predicated region
        $region129: #{tpu_custom_call.1} parent=127 // pred_check
          %p1819 = pneg %p505
        $region130: #{tpu_custom_call.1} parent=127 // pred_check_branch
          %1821 = sbr.rel (%p1819) target = $region132
        $region131: #{tpu_custom_call.1} parent=127 // pred_region
          %s1822 = sand.u32 %s490, 1
          %s1823 = scalar_lea.sflag [#allocation4], %s1822
          %s1824 = sand.u32 %s490, 1
          %s1825 = smul.addr %s1824, 8
          %s1826 = scalar_lea.vmem [#allocation13], %s1825
          %1828 = dma.done %s1823, 128
        $region132: #{tpu_custom_call.1} parent=127 // pred_fallthru
          _
      $region128: #{tpu_custom_call.1} parent=5 // pred_fallthru
        _
    $region6: #{tpu_custom_call.1} parent=1 // loop_footer
      %s40 = sadd.s32 1, %s36
    $region7: #{tpu_custom_call.1} parent=1 // loop_footer_branch
      %35 = sbr.rel target = $region3
    $region8: #{tpu_custom_call.1} parent=1 // loop_exit
      _
    %1829 = vsyncpa [#allocation3], 1
    %s1830 = scalar_lea.sflag [#allocation3], 1
    %1831 = vsyncpa %s1830, 1
    %1832 = vsyncpa [#allocation6], 1
    %s1833 = scalar_lea.sflag [#allocation6], 1
    %1834 = vsyncpa %s1833, 1
    %1835 = vsyncpa [#allocation9], 1
    %1836 = vsyncpa [#allocation12], 1
    %1837 = vsyncpa [#allocation4], 1
    %s1838 = scalar_lea.sflag [#allocation4], 1
    %1839 = vsyncpa %s1838, 1

</llo_original>
